<compile_context>
chip_gen: v7x
topology: tpu7x:2x2x1
jax: 0.10.0
libtpu: 0.0.40
codegen_flags: <defaults>
</compile_context>

<pallas_src>
import functools

import jax
import jax.numpy as jnp
from jax import lax
from jax.experimental import pallas as pl
from jax.experimental.pallas import tpu as pltpu

LANE = 128


def _round_up(x, m):
    return (x + m - 1) // m * m


def _pick_row_tile(out_rows, out_cols, coutp, budget_bytes=1 << 20):
    """Largest divisor of out_rows whose f32 (rows*cols, coutp) block fits the
    budget and keeps the second-minor block dim a multiple of 16 (bf16-safe)."""
    if out_rows * out_cols * coutp * 4 <= budget_bytes:
        return out_rows
    for tr in range(out_rows - 1, 0, -1):
        if out_rows % tr:
            continue
        blk = tr * out_cols
        if blk % 16:
            continue
        if blk * coutp * 4 <= budget_bytes:
            return tr
    return out_rows


# ---------------------------------------------------------------------------
# Pallas kernel: fused conv (row-packed taps) + folded-BN bias (+res) (+ReLU)
# ---------------------------------------------------------------------------
def _make_conv_kernel(*, kh, kw, phase_j, stride, rows_per_blk, out_cols,
                      cin, coutp, apply_relu, has_residual):
    mbk = rows_per_blk * out_cols
    kpack = kw * cin

    def kernel(x_ref, w_ref, b_ref, *rest):
        if has_residual:
            r_ref, o_ref = rest
        else:
            (o_ref,) = rest

        rb = pl.program_id(1)
        row0 = rb * rows_per_blk

        # Accumulator pre-loaded with the folded-BN shift (one less VPU pass).
        acc = jnp.broadcast_to(b_ref[...], (mbk, coutp))

        # One MXU dot per kernel row: the kw tap windows of that row are packed
        # along the reduction dim (K = kw*cin).  Windows are sliced directly
        # from the resident bf16 phase planes (im2col in VMEM, no f32 copies).
        for i in range(kh):
            oi = i // stride
            parts = []
            for j in range(kw):
                p = (i % stride) * phase_j + (j % stride)
                oj = j // stride
                win = x_ref[p, pl.ds(row0 + oi, rows_per_blk),
                            oj:oj + out_cols, :]
                parts.append(win.reshape(mbk, cin))
            a = parts[0] if kw == 1 else jnp.concatenate(parts, axis=-1)
            acc = acc + jnp.dot(a, w_ref[i],
                                preferred_element_type=jnp.float32)

        y = acc
        if has_residual:
            y = y + r_ref[...].astype(jnp.float32)
        if apply_relu:
            y = jnp.maximum(y, 0.0)
        o_ref[...] = y.astype(o_ref.dtype)

    return kernel


# ---------------------------------------------------------------------------
# Wrapper: one fused conv + BN (+residual) (+ReLU) pallas_call
# ---------------------------------------------------------------------------
def conv_bn_act(x, w, scale, bias, *, stride, pad, relu,
                residual=None, out_dtype=jnp.float32):
    """x: (N,H,W,Cx) NHWC (any float dtype; cast to bf16 here); w: (kh,kw,Cw,Cout)
    HWIO with Cw <= Cx (extra input channels get zero weights).  Returns
    (N*Ho*Wo, Coutp) with Coutp = round_up(Cout, 128); padded output channels
    are exactly zero."""
    N, H, W, cx = x.shape
    kh, kw, cw, cout = w.shape
    coutp = _round_up(cout, LANE)

    # Fold BN scale into the weights (f32 math), pad channels for lane-dense
    # MXU/output, and pack the kw taps of each kernel row along K.
    wf = w * scale[None, None, None, :]
    wf = jnp.pad(wf, ((0, 0), (0, 0), (0, cx - cw), (0, coutp - cout)))
    wf = wf.reshape(kh, kw * cx, coutp).astype(jnp.bfloat16)
    bf = jnp.pad(bias, (0, coutp - cout)).reshape(1, coutp).astype(jnp.float32)

    # Output extent and per-phase plane extent.
    Ho = (H + 2 * pad - kh) // stride + 1
    Wo = (W + 2 * pad - kw) // stride + 1
    hreq = (kh - 1) // stride + Ho
    wreq = (kw - 1) // stride + Wo
    ph_i, ph_j = min(stride, kh), min(stride, kw)
    P = ph_i * ph_j

    x = x.astype(jnp.bfloat16)
    if stride == 1:
        # Degenerate 1-phase decomposition: the padded input IS the plane.
        phases = jnp.pad(x, ((0, 0), (pad, pad), (pad, pad), (0, 0)))
    else:
        # Space-to-batch phase split (~1x activation volume): each conv tap
        # becomes a unit-stride window inside the kernel.
        need_h = (ph_i - 1) + stride * (hreq - 1) + 1
        need_w = (ph_j - 1) + stride * (wreq - 1) + 1
        x_pad = jnp.pad(x, ((0, 0),
                            (pad, max(pad, need_h - H - pad)),
                            (pad, max(pad, need_w - W - pad)),
                            (0, 0)))
        planes = [x_pad[:, di:di + stride * hreq:stride,
                        dj:dj + stride * wreq:stride, :]
                  for di in range(ph_i) for dj in range(ph_j)]
        phases = jnp.stack(planes, axis=1).reshape(N * P, hreq, wreq, cx)

    # Spatial row tiling: bounds per-step VMEM and adds pipeline steps.
    TR = _pick_row_tile(Ho, Wo, coutp)
    RT = Ho // TR
    mbk = TR * Wo

    kernel = _make_conv_kernel(
        kh=kh, kw=kw, phase_j=ph_j, stride=stride,
        rows_per_blk=TR, out_cols=Wo, cin=cx, coutp=coutp,
        apply_relu=relu, has_residual=residual is not None)

    in_specs = [
        # Full phase planes per image; index_map constant in rb -> DMA'd once
        # per image, halo rows read from the resident block.
        pl.BlockSpec((P, hreq, wreq, cx), lambda n, rb: (n, 0, 0, 0)),
        pl.BlockSpec((kh, kw * cx, coutp), lambda n, rb: (0, 0, 0)),
        pl.BlockSpec((1, coutp), lambda n, rb: (0, 0)),
    ]
    args = [phases, wf, bf]
    if residual is not None:
        in_specs.append(
            pl.BlockSpec((mbk, coutp), lambda n, rb: (n * RT + rb, 0)))
        args.append(residual.astype(jnp.bfloat16))   # bf16 HBM traffic

    out = pl.pallas_call(
        kernel,
        out_shape=jax.ShapeDtypeStruct((N * Ho * Wo, coutp), out_dtype),
        grid=(N, RT),
        in_specs=in_specs,
        out_specs=pl.BlockSpec((mbk, coutp), lambda n, rb: (n * RT + rb, 0)),
        compiler_params=pltpu.CompilerParams(
            dimension_semantics=("parallel", "parallel"),
            vmem_limit_bytes=48 * 1024 * 1024),
    )(*args)
    return out


# ---------------------------------------------------------------------------
# Parameters (folded inference-mode BatchNorm)
# ---------------------------------------------------------------------------
def fold_bn(gamma, beta, mean, var, eps=1e-5):
    scale = gamma / jnp.sqrt(var + eps)
    bias = beta - mean * scale
    return scale, bias


def init_params(key, cin, cout, ksize):
    ks = jax.random.split(key, 8)
    p = {}
    p["w1"] = 0.1 * jax.random.normal(ks[0], (ksize, ksize, cin, cout), jnp.float32)
    p["w2"] = 0.1 * jax.random.normal(ks[1], (ksize, ksize, cout, cout), jnp.float32)
    p["wd"] = 0.1 * jax.random.normal(ks[2], (1, 1, cin, cout), jnp.float32)
    p["cbd"] = 0.1 * jax.random.normal(ks[6], (cout,), jnp.float32)  # 1x1 conv bias

    def bn(k):
        k1, k2, k3, k4 = jax.random.split(k, 4)
        gamma = 0.5 + jax.random.uniform(k1, (cout,), jnp.float32)
        beta = 0.1 * jax.random.normal(k2, (cout,), jnp.float32)
        mean = 0.1 * jax.random.normal(k3, (cout,), jnp.float32)
        var = 0.5 + jax.random.uniform(k4, (cout,), jnp.float32)
        return fold_bn(gamma, beta, mean, var)

    p["s1"], p["b1"] = bn(ks[3])
    p["s2"], p["b2"] = bn(ks[4])
    p["sd"], p["bd"] = bn(ks[5])
    return p


# ---------------------------------------------------------------------------
# BasicBlock forward (NCHW in / NCHW out, like the PyTorch module)
# ---------------------------------------------------------------------------
@functools.partial(jax.jit, static_argnames=("stride", "downsample", "ksize"))
def basic_block_forward(x_nchw, params, *, stride, downsample, ksize=3):
    # NCHW -> NHWC, cast to bf16 once at the module boundary (MXU operand dtype).
    x = jnp.transpose(x_nchw, (0, 2, 3, 1)).astype(jnp.bfloat16)
    N, H, W, cin = x.shape
    cout = params["w1"].shape[-1]
    coutp = _round_up(cout, LANE)

    Ho = (H + 2 - ksize) // stride + 1
    Wo = (W + 2 - ksize) // stride + 1

    # conv1 -> bn1 -> relu  (emitted in bf16: only consumed by conv2's MXU)
    out1 = conv_bn_act(x, params["w1"], params["s1"], params["b1"],
                       stride=stride, pad=1, relu=True, out_dtype=jnp.bfloat16)
    out1 = out1.reshape(N, Ho, Wo, coutp)

    # identity branch (kept in bf16; the residual add itself happens in f32
    # inside the conv2 epilogue)
    if downsample:
        # fold the 1x1 conv bias into the BN shift: s*(conv+cb)+b = s*conv+(b+s*cb)
        bias_d = params["bd"] + params["sd"] * params["cbd"]
        identity = conv_bn_act(x, params["wd"], params["sd"], bias_d,
                               stride=stride, pad=0, relu=False,
                               out_dtype=jnp.bfloat16)
    else:
        assert stride == 1 and cin == cout, \
            "identity path requires stride=1 and cin==cout (ResNet contract)"
        identity = jnp.pad(x.reshape(N * H * W, cin),
                           ((0, 0), (0, coutp - cin)))

    # conv2 -> bn2 -> (+identity) -> relu   (module output stays f32)
    out = conv_bn_act(out1, params["w2"], params["s2"], params["b2"],
                      stride=1, pad=1, relu=True, residual=identity,
                      out_dtype=jnp.float32)
    out = out.reshape(N, Ho, Wo, coutp)[..., :cout]
    return jnp.transpose(out, (0, 3, 1, 2))                       # back to NCHW


# ---------------------------------------------------------------------------
# Pure-JAX reference (lax conv, full f32) for validation
# ---------------------------------------------------------------------------
def reference_forward(x_nchw, params, *, stride, downsample, ksize=3):
    x = jnp.transpose(x_nchw, (0, 2, 3, 1))
    dn = ("NHWC", "HWIO", "NHWC")

    def conv(v, w, s, pad):
        return lax.conv_general_dilated(
            v, w, (s, s), [(pad, pad), (pad, pad)], dimension_numbers=dn)

    out = conv(x, params["w1"], stride, 1) * params["s1"] + params["b1"]
    out = jnp.maximum(out, 0.0)
    out = conv(out, params["w2"], 1, 1) * params["s2"] + params["b2"]
    if downsample:
        identity = ((conv(x, params["wd"], stride, 0) + params["cbd"])
                    * params["sd"] + params["bd"])
    else:
        identity = x
    out = jnp.maximum(out + identity, 0.0)
    return jnp.transpose(out, (0, 3, 1, 2))


if __name__ == "__main__":
    key = jax.random.PRNGKey(0)
    k_x, k_p = jax.random.split(key)

    N, Cin, H, W = 2, 4, 16, 16
    Cout, ksize, stride, down = 8, 3, 2, True

    x = jax.random.normal(k_x, (N, Cin, H, W), jnp.float32)
    params = init_params(k_p, Cin, Cout, ksize)

    out = basic_block_forward(x, params, stride=stride, downsample=down,
                              ksize=ksize)
    out = jax.block_until_ready(out)

    ref = reference_forward(x, params, stride=stride, downsample=down,
                            ksize=ksize)
    assert out.shape == (N, Cout, H // stride, W // stride), out.shape
    # bf16 MXU operands / bf16 residual with f32 accumulation -> loose tolerance.
    assert jnp.allclose(out, ref, atol=5e-2, rtol=5e-2), \
        float(jnp.max(jnp.abs(out - ref)))

    print("KERNEL_OK")
</pallas_src>

<mosaic_0001>
module attributes {stable_mosaic.version = 11 : i64} {
  func.func @kernel(%arg0: i32, %arg1: i32, %arg2: memref<1x8x8x4xbf16, #tpu.memory_space<vmem>>, %arg3: memref<1x4x128xbf16, #tpu.memory_space<vmem>>, %arg4: memref<1x128xf32, #tpu.memory_space<vmem>>, %arg5: memref<64x128xbf16, #tpu.memory_space<vmem>>) attributes {dimension_semantics = [#tpu.dimension_semantics<parallel>, #tpu.dimension_semantics<parallel>], iteration_bounds = array<i64: 2, 1>, scalar_prefetch = 0 : i64, scratch_operands = 0 : i64, tpu.core_type = #tpu.core_type<tc>, window_params = [{transform_indices = @transform_0, window_bounds = array<i64: 1, 8, 8, 4>}, {pipeline_mode = #tpu.pipeline_mode<synchronous>, transform_indices = @transform_1, window_bounds = array<i64: 1, 4, 128>}, {pipeline_mode = #tpu.pipeline_mode<synchronous>, transform_indices = @transform_2, window_bounds = array<i64: 1, 128>}, {transform_indices = @transform_3, window_bounds = array<i64: 64, 128>}]} {
    %c8_i32 = arith.constant 8 : i32
    %0 = arith.muli %arg1, %c8_i32 : i32
    %c0 = arith.constant 0 : index
    %c0_0 = arith.constant 0 : index
    %1 = vector.load %arg4[%c0, %c0_0] : memref<1x128xf32, #tpu.memory_space<vmem>>, vector<1x128xf32>
    %2 = vector.shape_cast %1 : vector<1x128xf32> to vector<1x128xf32>
    %3 = vector.broadcast %2 : vector<1x128xf32> to vector<64x128xf32>
    %c0_i32 = arith.constant 0 : i32
    %4 = arith.addi %0, %c0_i32 : i32
    %c0_1 = arith.constant 0 : index
    %5 = arith.index_cast %4 : i32 to index
    %c0_2 = arith.constant 0 : index
    %c0_3 = arith.constant 0 : index
    %6 = vector.load %arg2[%c0_1, %5, %c0_2, %c0_3] : memref<1x8x8x4xbf16, #tpu.memory_space<vmem>>, vector<1x8x8x4xbf16>
    %7 = vector.shape_cast %6 : vector<1x8x8x4xbf16> to vector<8x8x4xbf16>
    %8 = vector.shape_cast %7 : vector<8x8x4xbf16> to vector<64x4xbf16>
    %c0_4 = arith.constant 0 : index
    %c0_5 = arith.constant 0 : index
    %c0_6 = arith.constant 0 : index
    %9 = vector.load %arg3[%c0_4, %c0_5, %c0_6] : memref<1x4x128xbf16, #tpu.memory_space<vmem>>, vector<1x4x128xbf16>
    %10 = vector.shape_cast %9 : vector<1x4x128xbf16> to vector<4x128xbf16>
    %cst = arith.constant dense<0.000000e+00> : vector<64x128xf32>
    %11 = tpu.matmul %8, %10, %cst {dimension_numbers = #tpu.dot_dimension_numbers<[1], [0], [0], [1], [0, 0, 1, 1], [], []>} : vector<64x4xbf16>, vector<4x128xbf16>, vector<64x128xf32> -> vector<64x128xf32>
    %12 = arith.addf %3, %11 : vector<64x128xf32>
    %13 = arith.truncf %12 : vector<64x128xf32> to vector<64x128xbf16>
    %c0_7 = arith.constant 0 : index
    %c0_8 = arith.constant 0 : index
    %14 = vector.load %arg5[%c0_7, %c0_8] : memref<64x128xbf16, #tpu.memory_space<vmem>>, vector<64x128xbf16>
    tpu.vector_store %arg5[%c0_7, %c0_8], %13 {strides = array<i32>} : memref<64x128xbf16, #tpu.memory_space<vmem>>, vector<64x128xbf16>,
    return
  }
  func.func @transform_0(%arg0: i32, %arg1: i32) -> (i32, i32, i32, i32) {
    %c0_i32 = arith.constant 0 : i32
    %c0_i32_0 = arith.constant 0 : i32
    %c0_i32_1 = arith.constant 0 : i32
    %c0_i32_2 = arith.constant 0 : i32
    return %arg0, %c0_i32, %c0_i32_0, %c0_i32_1 : i32, i32, i32, i32
  }
  func.func @transform_1(%arg0: i32, %arg1: i32) -> (i32, i32, i32) {
    %c0_i32 = arith.constant 0 : i32
    %c0_i32_0 = arith.constant 0 : i32
    %c0_i32_1 = arith.constant 0 : i32
    %c0_i32_2 = arith.constant 0 : i32
    return %c0_i32, %c0_i32_0, %c0_i32_1 : i32, i32, i32
  }
  func.func @transform_2(%arg0: i32, %arg1: i32) -> (i32, i32) {
    %c0_i32 = arith.constant 0 : i32
    %c0_i32_0 = arith.constant 0 : i32
    %c0_i32_1 = arith.constant 0 : i32
    return %c0_i32, %c0_i32_0 : i32, i32
  }
  func.func @transform_3(%arg0: i32, %arg1: i32) -> (i32, i32) {
    %c1_i32 = arith.constant 1 : i32
    %0 = arith.muli %arg0, %c1_i32 : i32
    %1 = arith.addi %0, %arg1 : i32
    %c0_i32 = arith.constant 0 : i32
    %c0_i32_0 = arith.constant 0 : i32
    return %1, %c0_i32 : i32, i32
  }
}

module attributes {stable_mosaic.version = 11 : i64} {
  func.func @kernel(%arg0: i32, %arg1: i32, %arg2: memref<4x9x9x4xbf16, #tpu.memory_space<vmem>>, %arg3: memref<3x12x128xbf16, #tpu.memory_space<vmem>>, %arg4: memref<1x128xf32, #tpu.memory_space<vmem>>, %arg5: memref<64x128xbf16, #tpu.memory_space<vmem>>) attributes {dimension_semantics = [#tpu.dimension_semantics<parallel>, #tpu.dimension_semantics<parallel>], iteration_bounds = array<i64: 2, 1>, scalar_prefetch = 0 : i64, scratch_operands = 0 : i64, tpu.core_type = #tpu.core_type<tc>, window_params = [{transform_indices = @transform_0, window_bounds = array<i64: 4, 9, 9, 4>}, {pipeline_mode = #tpu.pipeline_mode<synchronous>, transform_indices = @transform_1, window_bounds = array<i64: 3, 12, 128>}, {pipeline_mode = #tpu.pipeline_mode<synchronous>, transform_indices = @transform_2, window_bounds = array<i64: 1, 128>}, {transform_indices = @transform_3, window_bounds = array<i64: 64, 128>}]} {
    %c8_i32 = arith.constant 8 : i32
    %0 = arith.muli %arg1, %c8_i32 : i32
    %c0 = arith.constant 0 : index
    %c0_0 = arith.constant 0 : index
    %1 = vector.load %arg4[%c0, %c0_0] : memref<1x128xf32, #tpu.memory_space<vmem>>, vector<1x128xf32>
    %2 = vector.shape_cast %1 : vector<1x128xf32> to vector<1x128xf32>
    %3 = vector.broadcast %2 : vector<1x128xf32> to vector<64x128xf32>
    %c0_i32 = arith.constant 0 : i32
    %4 = arith.addi %0, %c0_i32 : i32
    %c0_1 = arith.constant 0 : index
    %5 = arith.index_cast %4 : i32 to index
    %c0_2 = arith.constant 0 : index
    %c0_3 = arith.constant 0 : index
    %6 = vector.load %arg2[%c0_1, %5, %c0_2, %c0_3] : memref<4x9x9x4xbf16, #tpu.memory_space<vmem>>, vector<1x8x8x4xbf16>
    %7 = vector.shape_cast %6 : vector<1x8x8x4xbf16> to vector<8x8x4xbf16>
    %8 = vector.shape_cast %7 : vector<8x8x4xbf16> to vector<64x4xbf16>
    %c0_i32_4 = arith.constant 0 : i32
    %9 = arith.addi %0, %c0_i32_4 : i32
    %c1 = arith.constant 1 : index
    %10 = arith.index_cast %9 : i32 to index
    %c0_5 = arith.constant 0 : index
    %c0_6 = arith.constant 0 : index
    %11 = vector.load %arg2[%c1, %10, %c0_5, %c0_6] : memref<4x9x9x4xbf16, #tpu.memory_space<vmem>>, vector<1x8x8x4xbf16>
    %12 = vector.shape_cast %11 : vector<1x8x8x4xbf16> to vector<8x8x4xbf16>
    %13 = vector.shape_cast %12 : vector<8x8x4xbf16> to vector<64x4xbf16>
    %c0_i32_7 = arith.constant 0 : i32
    %14 = arith.addi %0, %c0_i32_7 : i32
    %c0_8 = arith.constant 0 : index
    %15 = arith.index_cast %14 : i32 to index
    %c1_9 = arith.constant 1 : index
    %c0_10 = arith.constant 0 : index
    %16 = vector.load %arg2[%c0_8, %15, %c1_9, %c0_10] : memref<4x9x9x4xbf16, #tpu.memory_space<vmem>>, vector<1x8x8x4xbf16>
    %17 = vector.shape_cast %16 : vector<1x8x8x4xbf16> to vector<8x8x4xbf16>
    %18 = vector.shape_cast %17 : vector<8x8x4xbf16> to vector<64x4xbf16>
    %19 = tpu.concatenate %8, %13, %18 in 1 : vector<64x4xbf16>, vector<64x4xbf16>, vector<64x4xbf16> -> vector<64x12xbf16>
    %c0_11 = arith.constant 0 : index
    %c0_12 = arith.constant 0 : index
    %c0_13 = arith.constant 0 : index
    %20 = vector.load %arg3[%c0_11, %c0_12, %c0_13] : memref<3x12x128xbf16, #tpu.memory_space<vmem>>, vector<1x12x128xbf16>
    %21 = vector.shape_cast %20 : vector<1x12x128xbf16> to vector<12x128xbf16>
    %cst = arith.constant dense<0.000000e+00> : vector<64x128xf32>
    %22 = tpu.matmul %19, %21, %cst {dimension_numbers = #tpu.dot_dimension_numbers<[1], [0], [0], [1], [0, 0, 1, 1], [], []>} : vector<64x12xbf16>, vector<12x128xbf16>, vector<64x128xf32> -> vector<64x128xf32>
    %23 = arith.addf %3, %22 : vector<64x128xf32>
    %c0_i32_14 = arith.constant 0 : i32
    %24 = arith.addi %0, %c0_i32_14 : i32
    %c2 = arith.constant 2 : index
    %25 = arith.index_cast %24 : i32 to index
    %c0_15 = arith.constant 0 : index
    %c0_16 = arith.constant 0 : index
    %26 = vector.load %arg2[%c2, %25, %c0_15, %c0_16] : memref<4x9x9x4xbf16, #tpu.memory_space<vmem>>, vector<1x8x8x4xbf16>
    %27 = vector.shape_cast %26 : vector<1x8x8x4xbf16> to vector<8x8x4xbf16>
    %28 = vector.shape_cast %27 : vector<8x8x4xbf16> to vector<64x4xbf16>
    %c0_i32_17 = arith.constant 0 : i32
    %29 = arith.addi %0, %c0_i32_17 : i32
    %c3 = arith.constant 3 : index
    %30 = arith.index_cast %29 : i32 to index
    %c0_18 = arith.constant 0 : index
    %c0_19 = arith.constant 0 : index
    %31 = vector.load %arg2[%c3, %30, %c0_18, %c0_19] : memref<4x9x9x4xbf16, #tpu.memory_space<vmem>>, vector<1x8x8x4xbf16>
    %32 = vector.shape_cast %31 : vector<1x8x8x4xbf16> to vector<8x8x4xbf16>
    %33 = vector.shape_cast %32 : vector<8x8x4xbf16> to vector<64x4xbf16>
    %c0_i32_20 = arith.constant 0 : i32
    %34 = arith.addi %0, %c0_i32_20 : i32
    %c2_21 = arith.constant 2 : index
    %35 = arith.index_cast %34 : i32 to index
    %c1_22 = arith.constant 1 : index
    %c0_23 = arith.constant 0 : index
    %36 = vector.load %arg2[%c2_21, %35, %c1_22, %c0_23] : memref<4x9x9x4xbf16, #tpu.memory_space<vmem>>, vector<1x8x8x4xbf16>
    %37 = vector.shape_cast %36 : vector<1x8x8x4xbf16> to vector<8x8x4xbf16>
    %38 = vector.shape_cast %37 : vector<8x8x4xbf16> to vector<64x4xbf16>
    %39 = tpu.concatenate %28, %33, %38 in 1 : vector<64x4xbf16>, vector<64x4xbf16>, vector<64x4xbf16> -> vector<64x12xbf16>
    %c1_24 = arith.constant 1 : index
    %c0_25 = arith.constant 0 : index
    %c0_26 = arith.constant 0 : index
    %40 = vector.load %arg3[%c1_24, %c0_25, %c0_26] : memref<3x12x128xbf16, #tpu.memory_space<vmem>>, vector<1x12x128xbf16>
    %41 = vector.shape_cast %40 : vector<1x12x128xbf16> to vector<12x128xbf16>
    %cst_27 = arith.constant dense<0.000000e+00> : vector<64x128xf32>
    %42 = tpu.matmul %39, %41, %cst_27 {dimension_numbers = #tpu.dot_dimension_numbers<[1], [0], [0], [1], [0, 0, 1, 1], [], []>} : vector<64x12xbf16>, vector<12x128xbf16>, vector<64x128xf32> -> vector<64x128xf32>
    %43 = arith.addf %23, %42 : vector<64x128xf32>
    %c1_i32 = arith.constant 1 : i32
    %44 = arith.addi %0, %c1_i32 : i32
    %c0_28 = arith.constant 0 : index
    %45 = arith.index_cast %44 : i32 to index
    %c0_29 = arith.constant 0 : index
    %c0_30 = arith.constant 0 : index
    %46 = vector.load %arg2[%c0_28, %45, %c0_29, %c0_30] : memref<4x9x9x4xbf16, #tpu.memory_space<vmem>>, vector<1x8x8x4xbf16>
    %47 = vector.shape_cast %46 : vector<1x8x8x4xbf16> to vector<8x8x4xbf16>
    %48 = vector.shape_cast %47 : vector<8x8x4xbf16> to vector<64x4xbf16>
    %c1_i32_31 = arith.constant 1 : i32
    %49 = arith.addi %0, %c1_i32_31 : i32
    %c1_32 = arith.constant 1 : index
    %50 = arith.index_cast %49 : i32 to index
    %c0_33 = arith.constant 0 : index
    %c0_34 = arith.constant 0 : index
    %51 = vector.load %arg2[%c1_32, %50, %c0_33, %c0_34] : memref<4x9x9x4xbf16, #tpu.memory_space<vmem>>, vector<1x8x8x4xbf16>
    %52 = vector.shape_cast %51 : vector<1x8x8x4xbf16> to vector<8x8x4xbf16>
    %53 = vector.shape_cast %52 : vector<8x8x4xbf16> to vector<64x4xbf16>
    %c1_i32_35 = arith.constant 1 : i32
    %54 = arith.addi %0, %c1_i32_35 : i32
    %c0_36 = arith.constant 0 : index
    %55 = arith.index_cast %54 : i32 to index
    %c1_37 = arith.constant 1 : index
    %c0_38 = arith.constant 0 : index
    %56 = vector.load %arg2[%c0_36, %55, %c1_37, %c0_38] : memref<4x9x9x4xbf16, #tpu.memory_space<vmem>>, vector<1x8x8x4xbf16>
    %57 = vector.shape_cast %56 : vector<1x8x8x4xbf16> to vector<8x8x4xbf16>
    %58 = vector.shape_cast %57 : vector<8x8x4xbf16> to vector<64x4xbf16>
    %59 = tpu.concatenate %48, %53, %58 in 1 : vector<64x4xbf16>, vector<64x4xbf16>, vector<64x4xbf16> -> vector<64x12xbf16>
    %c2_39 = arith.constant 2 : index
    %c0_40 = arith.constant 0 : index
    %c0_41 = arith.constant 0 : index
    %60 = vector.load %arg3[%c2_39, %c0_40, %c0_41] : memref<3x12x128xbf16, #tpu.memory_space<vmem>>, vector<1x12x128xbf16>
    %61 = vector.shape_cast %60 : vector<1x12x128xbf16> to vector<12x128xbf16>
    %cst_42 = arith.constant dense<0.000000e+00> : vector<64x128xf32>
    %62 = tpu.matmul %59, %61, %cst_42 {dimension_numbers = #tpu.dot_dimension_numbers<[1], [0], [0], [1], [0, 0, 1, 1], [], []>} : vector<64x12xbf16>, vector<12x128xbf16>, vector<64x128xf32> -> vector<64x128xf32>
    %63 = arith.addf %43, %62 : vector<64x128xf32>
    %cst_43 = arith.constant 0.000000e+00 : f32
    %64 = vector.broadcast %cst_43 : f32 to vector<64x128xf32>
    %65 = arith.maximumf %63, %64 : vector<64x128xf32>
    %66 = arith.truncf %65 : vector<64x128xf32> to vector<64x128xbf16>
    %c0_44 = arith.constant 0 : index
    %c0_45 = arith.constant 0 : index
    %67 = vector.load %arg5[%c0_44, %c0_45] : memref<64x128xbf16, #tpu.memory_space<vmem>>, vector<64x128xbf16>
    tpu.vector_store %arg5[%c0_44, %c0_45], %66 {strides = array<i32>} : memref<64x128xbf16, #tpu.memory_space<vmem>>, vector<64x128xbf16>,
    return
  }
  func.func @transform_0(%arg0: i32, %arg1: i32) -> (i32, i32, i32, i32) {
    %c0_i32 = arith.constant 0 : i32
    %c0_i32_0 = arith.constant 0 : i32
    %c0_i32_1 = arith.constant 0 : i32
    %c0_i32_2 = arith.constant 0 : i32
    return %arg0, %c0_i32, %c0_i32_0, %c0_i32_1 : i32, i32, i32, i32
  }
  func.func @transform_1(%arg0: i32, %arg1: i32) -> (i32, i32, i32) {
    %c0_i32 = arith.constant 0 : i32
    %c0_i32_0 = arith.constant 0 : i32
    %c0_i32_1 = arith.constant 0 : i32
    %c0_i32_2 = arith.constant 0 : i32
    return %c0_i32, %c0_i32_0, %c0_i32_1 : i32, i32, i32
  }
  func.func @transform_2(%arg0: i32, %arg1: i32) -> (i32, i32) {
    %c0_i32 = arith.constant 0 : i32
    %c0_i32_0 = arith.constant 0 : i32
    %c0_i32_1 = arith.constant 0 : i32
    return %c0_i32, %c0_i32_0 : i32, i32
  }
  func.func @transform_3(%arg0: i32, %arg1: i32) -> (i32, i32) {
    %c1_i32 = arith.constant 1 : i32
    %0 = arith.muli %arg0, %c1_i32 : i32
    %1 = arith.addi %0, %arg1 : i32
    %c0_i32 = arith.constant 0 : i32
    %c0_i32_0 = arith.constant 0 : i32
    return %1, %c0_i32 : i32, i32
  }
}

module attributes {stable_mosaic.version = 11 : i64} {
  func.func @kernel(%arg0: i32, %arg1: i32, %arg2: memref<1x10x10x128xbf16, #tpu.memory_space<vmem>>, %arg3: memref<3x384x128xbf16, #tpu.memory_space<vmem>>, %arg4: memref<1x128xf32, #tpu.memory_space<vmem>>, %arg5: memref<64x128xbf16, #tpu.memory_space<vmem>>, %arg6: memref<64x128xf32, #tpu.memory_space<vmem>>) attributes {dimension_semantics = [#tpu.dimension_semantics<parallel>, #tpu.dimension_semantics<parallel>], iteration_bounds = array<i64: 2, 1>, scalar_prefetch = 0 : i64, scratch_operands = 0 : i64, tpu.core_type = #tpu.core_type<tc>, window_params = [{transform_indices = @transform_0, window_bounds = array<i64: 1, 10, 10, 128>}, {pipeline_mode = #tpu.pipeline_mode<synchronous>, transform_indices = @transform_1, window_bounds = array<i64: 3, 384, 128>}, {pipeline_mode = #tpu.pipeline_mode<synchronous>, transform_indices = @transform_2, window_bounds = array<i64: 1, 128>}, {transform_indices = @transform_3, window_bounds = array<i64: 64, 128>}, {transform_indices = @transform_4, window_bounds = array<i64: 64, 128>}]} {
    %c8_i32 = arith.constant 8 : i32
    %0 = arith.muli %arg1, %c8_i32 : i32
    %c0 = arith.constant 0 : index
    %c0_0 = arith.constant 0 : index
    %1 = vector.load %arg4[%c0, %c0_0] : memref<1x128xf32, #tpu.memory_space<vmem>>, vector<1x128xf32>
    %2 = vector.shape_cast %1 : vector<1x128xf32> to vector<1x128xf32>
    %3 = vector.broadcast %2 : vector<1x128xf32> to vector<64x128xf32>
    %c0_i32 = arith.constant 0 : i32
    %4 = arith.addi %0, %c0_i32 : i32
    %c0_1 = arith.constant 0 : index
    %5 = arith.index_cast %4 : i32 to index
    %c0_2 = arith.constant 0 : index
    %c0_3 = arith.constant 0 : index
    %6 = vector.load %arg2[%c0_1, %5, %c0_2, %c0_3] : memref<1x10x10x128xbf16, #tpu.memory_space<vmem>>, vector<1x8x8x128xbf16>
    %7 = vector.shape_cast %6 : vector<1x8x8x128xbf16> to vector<8x8x128xbf16>
    %8 = vector.shape_cast %7 : vector<8x8x128xbf16> to vector<64x128xbf16>
    %c0_i32_4 = arith.constant 0 : i32
    %9 = arith.addi %0, %c0_i32_4 : i32
    %c0_5 = arith.constant 0 : index
    %10 = arith.index_cast %9 : i32 to index
    %c1 = arith.constant 1 : index
    %c0_6 = arith.constant 0 : index
    %11 = vector.load %arg2[%c0_5, %10, %c1, %c0_6] : memref<1x10x10x128xbf16, #tpu.memory_space<vmem>>, vector<1x8x8x128xbf16>
    %12 = vector.shape_cast %11 : vector<1x8x8x128xbf16> to vector<8x8x128xbf16>
    %13 = vector.shape_cast %12 : vector<8x8x128xbf16> to vector<64x128xbf16>
    %c0_i32_7 = arith.constant 0 : i32
    %14 = arith.addi %0, %c0_i32_7 : i32
    %c0_8 = arith.constant 0 : index
    %15 = arith.index_cast %14 : i32 to index
    %c2 = arith.constant 2 : index
    %c0_9 = arith.constant 0 : index
    %16 = vector.load %arg2[%c0_8, %15, %c2, %c0_9] : memref<1x10x10x128xbf16, #tpu.memory_space<vmem>>, vector<1x8x8x128xbf16>
    %17 = vector.shape_cast %16 : vector<1x8x8x128xbf16> to vector<8x8x128xbf16>
    %18 = vector.shape_cast %17 : vector<8x8x128xbf16> to vector<64x128xbf16>
    %19 = tpu.concatenate %8, %13, %18 in 1 : vector<64x128xbf16>, vector<64x128xbf16>, vector<64x128xbf16> -> vector<64x384xbf16>
    %c0_10 = arith.constant 0 : index
    %c0_11 = arith.constant 0 : index
    %c0_12 = arith.constant 0 : index
    %20 = vector.load %arg3[%c0_10, %c0_11, %c0_12] : memref<3x384x128xbf16, #tpu.memory_space<vmem>>, vector<1x384x128xbf16>
    %21 = vector.shape_cast %20 : vector<1x384x128xbf16> to vector<384x128xbf16>
    %cst = arith.constant dense<0.000000e+00> : vector<64x128xf32>
    %22 = tpu.matmul %19, %21, %cst {dimension_numbers = #tpu.dot_dimension_numbers<[1], [0], [0], [1], [0, 0, 1, 1], [], []>} : vector<64x384xbf16>, vector<384x128xbf16>, vector<64x128xf32> -> vector<64x128xf32>
    %23 = arith.addf %3, %22 : vector<64x128xf32>
    %c1_i32 = arith.constant 1 : i32
    %24 = arith.addi %0, %c1_i32 : i32
    %c0_13 = arith.constant 0 : index
    %25 = arith.index_cast %24 : i32 to index
    %c0_14 = arith.constant 0 : index
    %c0_15 = arith.constant 0 : index
    %26 = vector.load %arg2[%c0_13, %25, %c0_14, %c0_15] : memref<1x10x10x128xbf16, #tpu.memory_space<vmem>>, vector<1x8x8x128xbf16>
    %27 = vector.shape_cast %26 : vector<1x8x8x128xbf16> to vector<8x8x128xbf16>
    %28 = vector.shape_cast %27 : vector<8x8x128xbf16> to vector<64x128xbf16>
    %c1_i32_16 = arith.constant 1 : i32
    %29 = arith.addi %0, %c1_i32_16 : i32
    %c0_17 = arith.constant 0 : index
    %30 = arith.index_cast %29 : i32 to index
    %c1_18 = arith.constant 1 : index
    %c0_19 = arith.constant 0 : index
    %31 = vector.load %arg2[%c0_17, %30, %c1_18, %c0_19] : memref<1x10x10x128xbf16, #tpu.memory_space<vmem>>, vector<1x8x8x128xbf16>
    %32 = vector.shape_cast %31 : vector<1x8x8x128xbf16> to vector<8x8x128xbf16>
    %33 = vector.shape_cast %32 : vector<8x8x128xbf16> to vector<64x128xbf16>
    %c1_i32_20 = arith.constant 1 : i32
    %34 = arith.addi %0, %c1_i32_20 : i32
    %c0_21 = arith.constant 0 : index
    %35 = arith.index_cast %34 : i32 to index
    %c2_22 = arith.constant 2 : index
    %c0_23 = arith.constant 0 : index
    %36 = vector.load %arg2[%c0_21, %35, %c2_22, %c0_23] : memref<1x10x10x128xbf16, #tpu.memory_space<vmem>>, vector<1x8x8x128xbf16>
    %37 = vector.shape_cast %36 : vector<1x8x8x128xbf16> to vector<8x8x128xbf16>
    %38 = vector.shape_cast %37 : vector<8x8x128xbf16> to vector<64x128xbf16>
    %39 = tpu.concatenate %28, %33, %38 in 1 : vector<64x128xbf16>, vector<64x128xbf16>, vector<64x128xbf16> -> vector<64x384xbf16>
    %c1_24 = arith.constant 1 : index
    %c0_25 = arith.constant 0 : index
    %c0_26 = arith.constant 0 : index
    %40 = vector.load %arg3[%c1_24, %c0_25, %c0_26] : memref<3x384x128xbf16, #tpu.memory_space<vmem>>, vector<1x384x128xbf16>
    %41 = vector.shape_cast %40 : vector<1x384x128xbf16> to vector<384x128xbf16>
    %cst_27 = arith.constant dense<0.000000e+00> : vector<64x128xf32>
    %42 = tpu.matmul %39, %41, %cst_27 {dimension_numbers = #tpu.dot_dimension_numbers<[1], [0], [0], [1], [0, 0, 1, 1], [], []>} : vector<64x384xbf16>, vector<384x128xbf16>, vector<64x128xf32> -> vector<64x128xf32>
    %43 = arith.addf %23, %42 : vector<64x128xf32>
    %c2_i32 = arith.constant 2 : i32
    %44 = arith.addi %0, %c2_i32 : i32
    %c0_28 = arith.constant 0 : index
    %45 = arith.index_cast %44 : i32 to index
    %c0_29 = arith.constant 0 : index
    %c0_30 = arith.constant 0 : index
    %46 = vector.load %arg2[%c0_28, %45, %c0_29, %c0_30] : memref<1x10x10x128xbf16, #tpu.memory_space<vmem>>, vector<1x8x8x128xbf16>
    %47 = vector.shape_cast %46 : vector<1x8x8x128xbf16> to vector<8x8x128xbf16>
    %48 = vector.shape_cast %47 : vector<8x8x128xbf16> to vector<64x128xbf16>
    %c2_i32_31 = arith.constant 2 : i32
    %49 = arith.addi %0, %c2_i32_31 : i32
    %c0_32 = arith.constant 0 : index
    %50 = arith.index_cast %49 : i32 to index
    %c1_33 = arith.constant 1 : index
    %c0_34 = arith.constant 0 : index
    %51 = vector.load %arg2[%c0_32, %50, %c1_33, %c0_34] : memref<1x10x10x128xbf16, #tpu.memory_space<vmem>>, vector<1x8x8x128xbf16>
    %52 = vector.shape_cast %51 : vector<1x8x8x128xbf16> to vector<8x8x128xbf16>
    %53 = vector.shape_cast %52 : vector<8x8x128xbf16> to vector<64x128xbf16>
    %c2_i32_35 = arith.constant 2 : i32
    %54 = arith.addi %0, %c2_i32_35 : i32
    %c0_36 = arith.constant 0 : index
    %55 = arith.index_cast %54 : i32 to index
    %c2_37 = arith.constant 2 : index
    %c0_38 = arith.constant 0 : index
    %56 = vector.load %arg2[%c0_36, %55, %c2_37, %c0_38] : memref<1x10x10x128xbf16, #tpu.memory_space<vmem>>, vector<1x8x8x128xbf16>
    %57 = vector.shape_cast %56 : vector<1x8x8x128xbf16> to vector<8x8x128xbf16>
    %58 = vector.shape_cast %57 : vector<8x8x128xbf16> to vector<64x128xbf16>
    %59 = tpu.concatenate %48, %53, %58 in 1 : vector<64x128xbf16>, vector<64x128xbf16>, vector<64x128xbf16> -> vector<64x384xbf16>
    %c2_39 = arith.constant 2 : index
    %c0_40 = arith.constant 0 : index
    %c0_41 = arith.constant 0 : index
    %60 = vector.load %arg3[%c2_39, %c0_40, %c0_41] : memref<3x384x128xbf16, #tpu.memory_space<vmem>>, vector<1x384x128xbf16>
    %61 = vector.shape_cast %60 : vector<1x384x128xbf16> to vector<384x128xbf16>
    %cst_42 = arith.constant dense<0.000000e+00> : vector<64x128xf32>
    %62 = tpu.matmul %59, %61, %cst_42 {dimension_numbers = #tpu.dot_dimension_numbers<[1], [0], [0], [1], [0, 0, 1, 1], [], []>} : vector<64x384xbf16>, vector<384x128xbf16>, vector<64x128xf32> -> vector<64x128xf32>
    %63 = arith.addf %43, %62 : vector<64x128xf32>
    %c0_43 = arith.constant 0 : index
    %c0_44 = arith.constant 0 : index
    %64 = vector.load %arg5[%c0_43, %c0_44] : memref<64x128xbf16, #tpu.memory_space<vmem>>, vector<64x128xbf16>
    %65 = arith.extf %64 : vector<64x128xbf16> to vector<64x128xf32>
    %66 = arith.addf %63, %65 : vector<64x128xf32>
    %cst_45 = arith.constant 0.000000e+00 : f32
    %67 = vector.broadcast %cst_45 : f32 to vector<64x128xf32>
    %68 = arith.maximumf %66, %67 : vector<64x128xf32>
    %c0_46 = arith.constant 0 : index
    %c0_47 = arith.constant 0 : index
    %69 = vector.load %arg6[%c0_46, %c0_47] : memref<64x128xf32, #tpu.memory_space<vmem>>, vector<64x128xf32>
    tpu.vector_store %arg6[%c0_46, %c0_47], %68 {strides = array<i32>} : memref<64x128xf32, #tpu.memory_space<vmem>>, vector<64x128xf32>,
    return
  }
  func.func @transform_0(%arg0: i32, %arg1: i32) -> (i32, i32, i32, i32) {
    %c0_i32 = arith.constant 0 : i32
    %c0_i32_0 = arith.constant 0 : i32
    %c0_i32_1 = arith.constant 0 : i32
    %c0_i32_2 = arith.constant 0 : i32
    return %arg0, %c0_i32, %c0_i32_0, %c0_i32_1 : i32, i32, i32, i32
  }
  func.func @transform_1(%arg0: i32, %arg1: i32) -> (i32, i32, i32) {
    %c0_i32 = arith.constant 0 : i32
    %c0_i32_0 = arith.constant 0 : i32
    %c0_i32_1 = arith.constant 0 : i32
    %c0_i32_2 = arith.constant 0 : i32
    return %c0_i32, %c0_i32_0, %c0_i32_1 : i32, i32, i32
  }
  func.func @transform_2(%arg0: i32, %arg1: i32) -> (i32, i32) {
    %c0_i32 = arith.constant 0 : i32
    %c0_i32_0 = arith.constant 0 : i32
    %c0_i32_1 = arith.constant 0 : i32
    return %c0_i32, %c0_i32_0 : i32, i32
  }
  func.func @transform_3(%arg0: i32, %arg1: i32) -> (i32, i32) {
    %c1_i32 = arith.constant 1 : i32
    %0 = arith.muli %arg0, %c1_i32 : i32
    %1 = arith.addi %0, %arg1 : i32
    %c0_i32 = arith.constant 0 : i32
    %c0_i32_0 = arith.constant 0 : i32
    return %1, %c0_i32 : i32, i32
  }
  func.func @transform_4(%arg0: i32, %arg1: i32) -> (i32, i32) {
    %c1_i32 = arith.constant 1 : i32
    %0 = arith.muli %arg0, %c1_i32 : i32
    %1 = arith.addi %0, %arg1 : i32
    %c0_i32 = arith.constant 0 : i32
    %c0_i32_0 = arith.constant 0 : i32
    return %1, %c0_i32 : i32, i32
  }
}

</mosaic_0001>

<llo_original>
// kernel: basic_block_forward.4
$region0: #{basic_block_forward.4}
  #allocation0 [shape = 'u32[]', space=smem, size = 0x4, offset = 0x4, fixed_abs, tag = 'smem constant byte address 0x4 - core index']
  #allocation1 [shape = 'u32[144,128]{1,0:T(1,128)}', space=vmem, size = 0x12000, scoped, tag = 'internal scratch']
  %s0 = inlined_call_operand.vmem [shape: bf16[2,8,8,4], index: 0, kind: input, shape index: {}]
  %s1 = inlined_call_operand.vmem [shape: bf16[1,4,128], index: 1, kind: input, shape index: {}]
  %s2 = inlined_call_operand.vmem [shape: f32[1,128], index: 2, kind: input, shape index: {}]
  %s3 = inlined_call_operand.vmem [shape: bf16[128,128], index: 3, kind: output, shape index: {}]
  %s4 = sld [smem:[#allocation0]]
  $region45: #{basic_block_forward.4} parent=0
    _
  %s6 = ssub.s32 1, %s4
  %s7 = scalar_select 0, %s6, %s4
  loop: start=0, step=1, limit=4
  $region2: #{basic_block_forward.4} parent=0 // loop_pre_header
    _
  $region3: #{basic_block_forward.4} parent=0 // loop_header
    %s9 = sphi 0, %s13
    %p10 = scmp.ge.s32.totalorder %s9, 4
    %s16 = sphi 0, %s28
    %s17 = sphi 0, %s24
    %s18 = sphi 0, %s16
    %s19 = sphi 0, %s17
    %s20 = sphi 0, %s18
    %s21 = sphi 0, %s19
    %s31 = sphi 0, %s33
    %s34 = sphi 0, %s31
    %s35 = sphi 0, %s34
    %s51 = sphi 0, %s35
    %s55 = sphi 0, %s55
    %s57 = sphi 0, %s55
    %s58 = sphi 0, %s57
    %s72 = sphi 0, %s58
    %s76 = sphi 0, %s76
    %s78 = sphi 0, %s76
    %s79 = sphi 0, %s78
    %s93 = sphi 0, %s79
    %s101 = sphi 0, %s103
    %s104 = sphi 0, %s101
    %s105 = sphi 0, %s104
    %s121 = sphi 0, %s105
  $region4: #{basic_block_forward.4} parent=0 // loop_header_branch
    %12 = sbr.rel (%p10) target = $region8
  $region5: #{basic_block_forward.4} parent=0 // loop_body
    %s14 = ssub.s32 %s9, 1
    %s15 = ssub.s32 %s9, 2
    %s22 = sadd.s32 1, %s17
    %p23 = scmp.ge.s32.totalorder %s22, 1
    %s24 = scalar_select %p23, 0, %s22
    %s25 = sadd.s32 1, %s16
    %s26 = scalar_select %p23, %s25, %s16
    %p27 = scmp.ge.s32.totalorder %s26, 2
    %s28 = scalar_select %p27, 0, %s26
    %s29 = ssub.s32 %s16, %s28
    %p30 = scmp.eq.s32.totalorder %s29, 0
    %s32 = sadd.s32 %s31, 1
    %s33 = scalar_select %p30, %s31, %s32
    %p36 = pneg %p30
    %p37 = scmp.eq.s32.totalorder %s9, 1
    %p38 = por %p36, %p37
    %p39 = scmp.ne.s32.totalorder %s31, %s34
    %p40 = scmp.eq.s32.totalorder %s9, 0
    %p41 = por %p39, %p40
    %p42 = scmp.ne.s32.totalorder %s31, %s34
    %p43 = scmp.eq.s32.totalorder %s14, 1
    %p44 = por %p42, %p43
    %p45 = scmp.ne.s32.totalorder %s34, %s35
    %p46 = scmp.eq.s32.totalorder %s14, 0
    %p47 = por %p45, %p46
    %p48 = scmp.ne.s32.totalorder %s34, %s35
    %p49 = scmp.eq.s32.totalorder %s15, 1
    %p50 = por %p48, %p49
    %p52 = scmp.ne.s32.totalorder %s35, %s51
    %p53 = scmp.eq.s32.totalorder %s15, 0
    %p54 = por %p52, %p53
    %s56 = sadd.s32 %s55, 1
    %p59 = scmp.eq.s32.totalorder %s9, 1
    %p60 = scmp.ne.s32.totalorder %s55, %s57
    %p61 = scmp.eq.s32.totalorder %s9, 0
    %p62 = por %p60, %p61
    %p63 = scmp.ne.s32.totalorder %s55, %s57
    %p64 = scmp.eq.s32.totalorder %s14, 1
    %p65 = por %p63, %p64
    %p66 = scmp.ne.s32.totalorder %s57, %s58
    %p67 = scmp.eq.s32.totalorder %s14, 0
    %p68 = por %p66, %p67
    %p69 = scmp.ne.s32.totalorder %s57, %s58
    %p70 = scmp.eq.s32.totalorder %s15, 1
    %p71 = por %p69, %p70
    %p73 = scmp.ne.s32.totalorder %s58, %s72
    %p74 = scmp.eq.s32.totalorder %s15, 0
    %p75 = por %p73, %p74
    %s77 = sadd.s32 %s76, 1
    %p80 = scmp.eq.s32.totalorder %s9, 1
    %p81 = scmp.ne.s32.totalorder %s76, %s78
    %p82 = scmp.eq.s32.totalorder %s9, 0
    %p83 = por %p81, %p82
    %p84 = scmp.ne.s32.totalorder %s76, %s78
    %p85 = scmp.eq.s32.totalorder %s14, 1
    %p86 = por %p84, %p85
    %p87 = scmp.ne.s32.totalorder %s78, %s79
    %p88 = scmp.eq.s32.totalorder %s14, 0
    %p89 = por %p87, %p88
    %p90 = scmp.ne.s32.totalorder %s78, %s79
    %p91 = scmp.eq.s32.totalorder %s15, 1
    %p92 = por %p90, %p91
    %p94 = scmp.ne.s32.totalorder %s79, %s93
    %p95 = scmp.eq.s32.totalorder %s15, 0
    %p96 = por %p94, %p95
    %s97 = sadd.s32 %s16, %s17
    %s98 = sadd.s32 %s28, %s24
    %s99 = ssub.s32 %s97, %s98
    %p100 = scmp.eq.s32.totalorder %s99, 0
    %s102 = sadd.s32 %s101, 1
    %s103 = scalar_select %p100, %s101, %s102
    %p106 = pneg %p100
    %p107 = scmp.eq.s32.totalorder %s9, 1
    %p108 = por %p106, %p107
    %p109 = scmp.ne.s32.totalorder %s101, %s104
    %p110 = scmp.eq.s32.totalorder %s9, 0
    %p111 = por %p109, %p110
    %p112 = scmp.ne.s32.totalorder %s101, %s104
    %p113 = scmp.eq.s32.totalorder %s14, 1
    %p114 = por %p112, %p113
    %p115 = scmp.ne.s32.totalorder %s104, %s105
    %p116 = scmp.eq.s32.totalorder %s14, 0
    %p117 = por %p115, %p116
    %p118 = scmp.ne.s32.totalorder %s104, %s105
    %p119 = scmp.eq.s32.totalorder %s15, 1
    %p120 = por %p118, %p119
    %p122 = scmp.ne.s32.totalorder %s105, %s121
    %p123 = scmp.eq.s32.totalorder %s15, 0
    %p124 = por %p122, %p123
    %p125 = scmp.le.s32.totalorder 1, %s9
    %p126 = scmp.lt.s32.totalorder %s9, 3
    %p127 = pnand %p125, %p126
    %p128 = pneg %p127
    // Predicated region
    $region9: #{basic_block_forward.4} parent=5 // pred_check
      _
    $region10: #{basic_block_forward.4} parent=5 // pred_check_branch
      %130 = sbr.rel (%p127) target = $region12
    $region11: #{basic_block_forward.4} parent=5 // pred_region
      %s131 = ssub.s32 %s9, 1
      // Predicated region
      $region13: #{basic_block_forward.4} parent=11 // pred_check
        %p132 = pneg %p68
      $region14: #{basic_block_forward.4} parent=11 // pred_check_branch
        %134 = sbr.rel (%p132) target = $region16
      $region15: #{basic_block_forward.4} parent=11 // pred_region
        _
      $region16: #{basic_block_forward.4} parent=11 // pred_fallthru
        _
      // Predicated region
      $region17: #{basic_block_forward.4} parent=11 // pred_check
        %p135 = pneg %p89
      $region18: #{basic_block_forward.4} parent=11 // pred_check_branch
        %137 = sbr.rel (%p135) target = $region20
      $region19: #{basic_block_forward.4} parent=11 // pred_region
        _
      $region20: #{basic_block_forward.4} parent=11 // pred_fallthru
        _
    $region12: #{basic_block_forward.4} parent=5 // pred_fallthru
      _
    %p138 = scmp.lt.s32.totalorder %s9, 2
    // Predicated region
    $region21: #{basic_block_forward.4} parent=5 // pred_check
      %p139 = pneg %p138
    $region22: #{basic_block_forward.4} parent=5 // pred_check_branch
      %141 = sbr.rel (%p139) target = $region24
    $region23: #{basic_block_forward.4} parent=5 // pred_region
      // Predicated region
      $region25: #{basic_block_forward.4} parent=23 // pred_check
        %p142 = pneg %p41
      $region26: #{basic_block_forward.4} parent=23 // pred_check_branch
        %144 = sbr.rel (%p142) target = $region28
      $region27: #{basic_block_forward.4} parent=23 // pred_region
        %p145 = scmp.lt.s32.totalorder %s16, 1
        %s146 = scalar_select %p145, %s16, 1
        %s147 = smul.addr %s146, 8
        %s148 = smul.addr %s147, 4
        %s149 = scalar_lea.vmem %s0, %s148
      $region28: #{basic_block_forward.4} parent=23 // pred_fallthru
        _
    $region24: #{basic_block_forward.4} parent=5 // pred_fallthru
      _
    %p150 = scmp.le.s32.totalorder 1, %s9
    %p151 = scmp.lt.s32.totalorder %s9, 3
    %p152 = pnand %p150, %p151
    %p153 = pneg %p152
    // Predicated region
    $region29: #{basic_block_forward.4} parent=5 // pred_check
      _
    $region30: #{basic_block_forward.4} parent=5 // pred_check_branch
      %155 = sbr.rel (%p152) target = $region32
    $region31: #{basic_block_forward.4} parent=5 // pred_region
      %s156 = ssub.s32 %s9, 1
      %p157 = scmp.lt.s32.totalorder %s18, 1
      %s158 = scalar_select %p157, %s18, 1
      %s159 = smul.addr %s158, 8
      %s160 = smul.addr %s159, 4
      %s161 = scalar_lea.vmem %s0, %s160
      %p162 = pneg %p47
      %p163 = pneg %p44
      %p164 = pneg %p68
      %p165 = pneg %p65
      %p166 = pneg %p89
      %p167 = pneg %p86
      %p168 = pneg %p117
      %p169 = pneg %p114
      %s170 = sadd.s32 %s18, %s19
      %s171 = smul.u32 8, %s170
      %p172 = scmp.lt.s32.totalorder %s171, 15
      %s173 = scalar_select %p172, %s171, 15
      %s174 = smul.addr %s173, 4
      %s175 = scalar_lea.vmem %s3, %s174
      %p176 = scmp.lt.s32.totalorder %s18, 1
      %s177 = scalar_select %p176, %s18, 1
      %s178 = smul.addr %s177, 8
      %s179 = smul.addr %s178, 4
      %s180 = scalar_lea.vmem %s0, %s179
      %s181 = sadd.s32 %s18, %s19
      %s182 = smul.u32 8, %s181
      %p183 = scmp.lt.s32.totalorder %s182, 15
      %s184 = scalar_select %p183, %s182, 15
      %s185 = smul.addr %s184, 4
      %s186 = scalar_lea.vmem %s3, %s185
      %s187 = sadd.s32 %s18, %s19
      %s188 = smul.u32 8, %s187
      %s190 = smul.u32 %s19, 8
      %v191 = vld [vmem:[%s2] sm:$0x1]
      %v193 = vlaneseq
      %v194 = vshrl.u32 %v193, 7
      %v195 = vsub.s32 0, %v194
      %v196 = vrot.slane %v191, %v195
      %s198 = smul.addr %s190, 4
      %s199 = scalar_lea.vmem %s180, %s198
      %v200 = vld [vmem:[%s199] sm:$0xf]
      %v201 = vld [vmem:[%s199 + $0x4] sm:$0xf]
      %v202 = vld [vmem:[%s199 + $0x8] sm:$0xf]
      %v203 = vld [vmem:[%s199 + $0xc] sm:$0xf]
      %v204 = vld [vmem:[%s199 + $0x10] sm:$0xf]
      %v205 = vld [vmem:[%s199 + $0x14] sm:$0xf]
      %v206 = vld [vmem:[%s199 + $0x18] sm:$0xf]
      %v207 = vld [vmem:[%s199 + $0x1c] sm:$0xf]
      %v208 = vld [vmem:[%s1] sm:$0x3]
      %v217 = vunpack.c.l.b16 %v200
      %v218 = vunpack.c.l.b16 %v201
      %v219 = vunpack.c.l.b16 %v202
      %v220 = vunpack.c.l.b16 %v203
      %v221 = vunpack.c.l.b16 %v204
      %v222 = vunpack.c.l.b16 %v205
      %v223 = vunpack.c.l.b16 %v206
      %v224 = vunpack.c.l.b16 %v207
      %v225 = vpack.c.b16 %v218, %v217
      %v226 = vpack.c.b16 %v220, %v219
      %v227 = vpack.c.b16 %v222, %v221
      %v228 = vpack.c.b16 %v224, %v223
      %vm229 = vcmask 31744
      %v231 = vsel %vm229, %v225, 0
      %v234 = vsel %vm229, %v226, 0
      %v237 = vsel %vm229, %v227, 0
      %v240 = vsel %vm229, %v228, 0
      %vm242 = vcmask 1041408
      %v244 = vsel %vm242, %v208, 0
      %246 = vmatprep.subr.bf16.mxu0 0
      %247 = vmatpush1.bf16.msra.mxu0 %v244
      %248 = vmatprep.subr.bf16.mxu0 0
      %249 = vmatpush1.bf16.msra.mxu0 0
      %250 = vmatprep.subr.bf16.mxu0 0
      %251 = vmatpush1.bf16.msra.mxu0 0
      %252 = vmatprep.subr.bf16.mxu0 0
      %253 = vmatpush1.bf16.msra.mxu0 0
      %254 = vmatprep.subr.bf16.mxu0 0
      %255 = vmatpush1.bf16.msra.mxu0 0
      %256 = vmatprep.subr.bf16.mxu0 0
      %257 = vmatpush1.bf16.msra.mxu0 0
      %258 = vmatprep.subr.bf16.mxu0 0
      %259 = vmatpush1.bf16.msra.mxu0 0
      %260 = vmatprep.subr.bf16.mxu0 0
      %261 = vmatpush1.bf16.msra.mxu0 0
      %262 = vmatprep.subr.bf16.mxu0 0
      %263 = vmatpush1.bf16.msra.mxu0 0
      %264 = vmatprep.subr.bf16.mxu0 0
      %265 = vmatpush1.bf16.msra.mxu0 0
      %266 = vmatprep.subr.bf16.mxu0 0
      %267 = vmatpush1.bf16.msra.mxu0 0
      %268 = vmatprep.subr.bf16.mxu0 0
      %269 = vmatpush1.bf16.msra.mxu0 0
      %270 = vmatprep.subr.bf16.mxu0 0
      %271 = vmatpush1.bf16.msra.mxu0 0
      %272 = vmatprep.subr.bf16.mxu0 0
      %273 = vmatpush1.bf16.msra.mxu0 0
      %274 = vmatprep.subr.bf16.mxu0 0
      %275 = vmatpush1.bf16.msra.mxu0 0
      %276 = vmatprep.subr.bf16.mxu0 0
      %277 = vmatpush1.bf16.msra.mxu0 0
      %278 = vmatprep.mubr.bf16.mxu0 0
      %279 = vmatmul.mubr.bf16.gmra.mrb[0].mxu0 %v231
      %v280 = vpop.f32.mrb[0].mxu0
      %v281 = vadd.f32 0.0, %v280
      %v282 = vpop.f32.mrb[0].mxu0
      %v283 = vpop.f32.mrb[0].mxu0
      %v284 = vadd.f32 0.0, %v283
      %v285 = vpop.f32.mrb[0].mxu0
      %286 = vmatprep.mubr.bf16.mxu0 0
      %287 = vmatmul.mubr.bf16.gmra.mrb[0].mxu0 %v234
      %v288 = vpop.f32.mrb[0].mxu0
      %v289 = vadd.f32 0.0, %v288
      %v290 = vpop.f32.mrb[0].mxu0
      %v291 = vpop.f32.mrb[0].mxu0
      %v292 = vadd.f32 0.0, %v291
      %v293 = vpop.f32.mrb[0].mxu0
      %294 = vmatprep.mubr.bf16.mxu0 0
      %295 = vmatmul.mubr.bf16.gmra.mrb[0].mxu0 %v237
      %v296 = vpop.f32.mrb[0].mxu0
      %v297 = vadd.f32 0.0, %v296
      %v298 = vpop.f32.mrb[0].mxu0
      %v299 = vpop.f32.mrb[0].mxu0
      %v300 = vadd.f32 0.0, %v299
      %v301 = vpop.f32.mrb[0].mxu0
      %302 = vmatprep.mubr.bf16.mxu0 0
      %303 = vmatmul.mubr.bf16.gmra.mrb[0].mxu0 %v240
      %v304 = vpop.f32.mrb[0].mxu0
      %v305 = vadd.f32 0.0, %v304
      %v306 = vpop.f32.mrb[0].mxu0
      %v307 = vpop.f32.mrb[0].mxu0
      %v308 = vadd.f32 0.0, %v307
      %v309 = vpop.f32.mrb[0].mxu0
      %310 = vdwg.mxu0
      %v311 = vadd.f32 %v196, %v281
      %v312 = vadd.f32 %v196, %v284
      %v313 = vadd.f32 %v196, %v289
      %v314 = vadd.f32 %v196, %v292
      %v315 = vadd.f32 %v196, %v297
      %v316 = vadd.f32 %v196, %v300
      %v317 = vadd.f32 %v196, %v305
      %v318 = vadd.f32 %v196, %v308
      %v319 = vpack.c.bf16 %v312, %v311
      %v320 = vpack.c.bf16 %v314, %v313
      %v321 = vpack.c.bf16 %v316, %v315
      %v322 = vpack.c.bf16 %v318, %v317
      %v327 = vunpack.c.l.b16 %v319
      %v328 = vunpack.c.h.b16 %v319
      %v329 = vunpack.c.l.b16 %v320
      %v330 = vunpack.c.h.b16 %v320
      %v331 = vunpack.c.l.b16 %v321
      %v332 = vunpack.c.h.b16 %v321
      %v333 = vunpack.c.l.b16 %v322
      %v334 = vunpack.c.h.b16 %v322
      %v335 = vpack.c.b16 %v327, %v327
      %v336 = vpack.c.b16 %v328, %v328
      %v337 = vpack.c.b16 %v329, %v329
      %v338 = vpack.c.b16 %v330, %v330
      %v339 = vpack.c.b16 %v331, %v331
      %v340 = vpack.c.b16 %v332, %v332
      %v341 = vpack.c.b16 %v333, %v333
      %v342 = vpack.c.b16 %v334, %v334
      %351 = vst [vmem:[%s186] sm:$0xf] %v335
      %352 = vst [vmem:[%s186 + $0x4] sm:$0xf] %v336
      %353 = vst [vmem:[%s186 + $0x8] sm:$0xf] %v337
      %354 = vst [vmem:[%s186 + $0xc] sm:$0xf] %v338
      %355 = vst [vmem:[%s186 + $0x10] sm:$0xf] %v339
      %356 = vst [vmem:[%s186 + $0x14] sm:$0xf] %v340
      %357 = vst [vmem:[%s186 + $0x18] sm:$0xf] %v341
      %358 = vst [vmem:[%s186 + $0x1c] sm:$0xf] %v342
      %s359 = sadd.s32 %s18, %s19
      %s360 = smul.u32 8, %s359
      %p361 = scmp.lt.s32.totalorder %s360, 15
      %s362 = scalar_select %p361, %s360, 15
      %s363 = smul.addr %s362, 4
      %s364 = scalar_lea.vmem %s3, %s363
      // Predicated region
      $region33: #{basic_block_forward.4} parent=31 // pred_check
        %p365 = pneg %p114
      $region34: #{basic_block_forward.4} parent=31 // pred_check_branch
        %367 = sbr.rel (%p365) target = $region36
      $region35: #{basic_block_forward.4} parent=31 // pred_region
        %s368 = sadd.s32 %s18, %s19
        %s369 = smul.u32 8, %s368
      $region36: #{basic_block_forward.4} parent=31 // pred_fallthru
        _
    $region32: #{basic_block_forward.4} parent=5 // pred_fallthru
      _
    %p370 = scmp.le.s32.totalorder 2, %s9
    // Predicated region
    $region37: #{basic_block_forward.4} parent=5 // pred_check
      %p371 = pneg %p370
    $region38: #{basic_block_forward.4} parent=5 // pred_check_branch
      %373 = sbr.rel (%p371) target = $region40
    $region39: #{basic_block_forward.4} parent=5 // pred_region
      %s374 = ssub.s32 %s9, 2
      // Predicated region
      $region41: #{basic_block_forward.4} parent=39 // pred_check
        %p375 = pneg %p120
      $region42: #{basic_block_forward.4} parent=39 // pred_check_branch
        %377 = sbr.rel (%p375) target = $region44
      $region43: #{basic_block_forward.4} parent=39 // pred_region
        %s378 = sadd.s32 %s20, %s21
        %s379 = smul.u32 8, %s378
        %p380 = scmp.lt.s32.totalorder %s379, 15
        %s381 = scalar_select %p380, %s379, 15
        %s382 = smul.addr %s381, 4
        %s383 = scalar_lea.vmem %s3, %s382
      $region44: #{basic_block_forward.4} parent=39 // pred_fallthru
        _
    $region40: #{basic_block_forward.4} parent=5 // pred_fallthru
      _
  $region6: #{basic_block_forward.4} parent=0 // loop_footer
    %s13 = sadd.s32 1, %s9
  $region7: #{basic_block_forward.4} parent=0 // loop_footer_branch
    %8 = sbr.rel target = $region3
  $region8: #{basic_block_forward.4} parent=0 // loop_exit
    _

// kernel: basic_block_forward.3
$region0: #{basic_block_forward.3}
  #allocation0 [shape = 'u32[]', space=smem, size = 0x4, offset = 0x4, fixed_abs, tag = 'smem constant byte address 0x4 - core index']
  #allocation1 [shape = 'u32[144,128]{1,0:T(1,128)}', space=vmem, size = 0x12000, scoped, tag = 'internal scratch']
  %s0 = inlined_call_operand.vmem [shape: bf16[8,9,9,4], index: 0, kind: input, shape index: {}]
  %s1 = inlined_call_operand.vmem [shape: bf16[3,12,128], index: 1, kind: input, shape index: {}]
  %s2 = inlined_call_operand.vmem [shape: f32[1,128], index: 2, kind: input, shape index: {}]
  %s3 = inlined_call_operand.vmem [shape: bf16[128,128], index: 3, kind: output, shape index: {}]
  %s4 = sld [smem:[#allocation0]]
  $region45: #{basic_block_forward.3} parent=0
    _
  %s6 = ssub.s32 1, %s4
  %s7 = scalar_select 0, %s6, %s4
  loop: start=0, step=1, limit=4
  $region2: #{basic_block_forward.3} parent=0 // loop_pre_header
    _
  $region3: #{basic_block_forward.3} parent=0 // loop_header
    %s9 = sphi 0, %s13
    %p10 = scmp.ge.s32.totalorder %s9, 4
    %s16 = sphi 0, %s28
    %s17 = sphi 0, %s24
    %s18 = sphi 0, %s16
    %s19 = sphi 0, %s17
    %s20 = sphi 0, %s18
    %s21 = sphi 0, %s19
    %s31 = sphi 0, %s33
    %s34 = sphi 0, %s31
    %s35 = sphi 0, %s34
    %s51 = sphi 0, %s35
    %s55 = sphi 0, %s55
    %s57 = sphi 0, %s55
    %s58 = sphi 0, %s57
    %s72 = sphi 0, %s58
    %s76 = sphi 0, %s76
    %s78 = sphi 0, %s76
    %s79 = sphi 0, %s78
    %s93 = sphi 0, %s79
    %s101 = sphi 0, %s103
    %s104 = sphi 0, %s101
    %s105 = sphi 0, %s104
    %s121 = sphi 0, %s105
  $region4: #{basic_block_forward.3} parent=0 // loop_header_branch
    %12 = sbr.rel (%p10) target = $region8
  $region5: #{basic_block_forward.3} parent=0 // loop_body
    %s14 = ssub.s32 %s9, 1
    %s15 = ssub.s32 %s9, 2
    %s22 = sadd.s32 1, %s17
    %p23 = scmp.ge.s32.totalorder %s22, 1
    %s24 = scalar_select %p23, 0, %s22
    %s25 = sadd.s32 1, %s16
    %s26 = scalar_select %p23, %s25, %s16
    %p27 = scmp.ge.s32.totalorder %s26, 2
    %s28 = scalar_select %p27, 0, %s26
    %s29 = ssub.s32 %s16, %s28
    %p30 = scmp.eq.s32.totalorder %s29, 0
    %s32 = sadd.s32 %s31, 1
    %s33 = scalar_select %p30, %s31, %s32
    %p36 = pneg %p30
    %p37 = scmp.eq.s32.totalorder %s9, 1
    %p38 = por %p36, %p37
    %p39 = scmp.ne.s32.totalorder %s31, %s34
    %p40 = scmp.eq.s32.totalorder %s9, 0
    %p41 = por %p39, %p40
    %p42 = scmp.ne.s32.totalorder %s31, %s34
    %p43 = scmp.eq.s32.totalorder %s14, 1
    %p44 = por %p42, %p43
    %p45 = scmp.ne.s32.totalorder %s34, %s35
    %p46 = scmp.eq.s32.totalorder %s14, 0
    %p47 = por %p45, %p46
    %p48 = scmp.ne.s32.totalorder %s34, %s35
    %p49 = scmp.eq.s32.totalorder %s15, 1
    %p50 = por %p48, %p49
    %p52 = scmp.ne.s32.totalorder %s35, %s51
    %p53 = scmp.eq.s32.totalorder %s15, 0
    %p54 = por %p52, %p53
    %s56 = sadd.s32 %s55, 1
    %p59 = scmp.eq.s32.totalorder %s9, 1
    %p60 = scmp.ne.s32.totalorder %s55, %s57
    %p61 = scmp.eq.s32.totalorder %s9, 0
    %p62 = por %p60, %p61
    %p63 = scmp.ne.s32.totalorder %s55, %s57
    %p64 = scmp.eq.s32.totalorder %s14, 1
    %p65 = por %p63, %p64
    %p66 = scmp.ne.s32.totalorder %s57, %s58
    %p67 = scmp.eq.s32.totalorder %s14, 0
    %p68 = por %p66, %p67
    %p69 = scmp.ne.s32.totalorder %s57, %s58
    %p70 = scmp.eq.s32.totalorder %s15, 1
    %p71 = por %p69, %p70
    %p73 = scmp.ne.s32.totalorder %s58, %s72
    %p74 = scmp.eq.s32.totalorder %s15, 0
    %p75 = por %p73, %p74
    %s77 = sadd.s32 %s76, 1
    %p80 = scmp.eq.s32.totalorder %s9, 1
    %p81 = scmp.ne.s32.totalorder %s76, %s78
    %p82 = scmp.eq.s32.totalorder %s9, 0
    %p83 = por %p81, %p82
    %p84 = scmp.ne.s32.totalorder %s76, %s78
    %p85 = scmp.eq.s32.totalorder %s14, 1
    %p86 = por %p84, %p85
    %p87 = scmp.ne.s32.totalorder %s78, %s79
    %p88 = scmp.eq.s32.totalorder %s14, 0
    %p89 = por %p87, %p88
    %p90 = scmp.ne.s32.totalorder %s78, %s79
    %p91 = scmp.eq.s32.totalorder %s15, 1
    %p92 = por %p90, %p91
    %p94 = scmp.ne.s32.totalorder %s79, %s93
    %p95 = scmp.eq.s32.totalorder %s15, 0
    %p96 = por %p94, %p95
    %s97 = sadd.s32 %s16, %s17
    %s98 = sadd.s32 %s28, %s24
    %s99 = ssub.s32 %s97, %s98
    %p100 = scmp.eq.s32.totalorder %s99, 0
    %s102 = sadd.s32 %s101, 1
    %s103 = scalar_select %p100, %s101, %s102
    %p106 = pneg %p100
    %p107 = scmp.eq.s32.totalorder %s9, 1
    %p108 = por %p106, %p107
    %p109 = scmp.ne.s32.totalorder %s101, %s104
    %p110 = scmp.eq.s32.totalorder %s9, 0
    %p111 = por %p109, %p110
    %p112 = scmp.ne.s32.totalorder %s101, %s104
    %p113 = scmp.eq.s32.totalorder %s14, 1
    %p114 = por %p112, %p113
    %p115 = scmp.ne.s32.totalorder %s104, %s105
    %p116 = scmp.eq.s32.totalorder %s14, 0
    %p117 = por %p115, %p116
    %p118 = scmp.ne.s32.totalorder %s104, %s105
    %p119 = scmp.eq.s32.totalorder %s15, 1
    %p120 = por %p118, %p119
    %p122 = scmp.ne.s32.totalorder %s105, %s121
    %p123 = scmp.eq.s32.totalorder %s15, 0
    %p124 = por %p122, %p123
    %p125 = scmp.le.s32.totalorder 1, %s9
    %p126 = scmp.lt.s32.totalorder %s9, 3
    %p127 = pnand %p125, %p126
    %p128 = pneg %p127
    // Predicated region
    $region9: #{basic_block_forward.3} parent=5 // pred_check
      _
    $region10: #{basic_block_forward.3} parent=5 // pred_check_branch
      %130 = sbr.rel (%p127) target = $region12
    $region11: #{basic_block_forward.3} parent=5 // pred_region
      %s131 = ssub.s32 %s9, 1
      // Predicated region
      $region13: #{basic_block_forward.3} parent=11 // pred_check
        %p132 = pneg %p68
      $region14: #{basic_block_forward.3} parent=11 // pred_check_branch
        %134 = sbr.rel (%p132) target = $region16
      $region15: #{basic_block_forward.3} parent=11 // pred_region
        _
      $region16: #{basic_block_forward.3} parent=11 // pred_fallthru
        _
      // Predicated region
      $region17: #{basic_block_forward.3} parent=11 // pred_check
        %p135 = pneg %p89
      $region18: #{basic_block_forward.3} parent=11 // pred_check_branch
        %137 = sbr.rel (%p135) target = $region20
      $region19: #{basic_block_forward.3} parent=11 // pred_region
        _
      $region20: #{basic_block_forward.3} parent=11 // pred_fallthru
        _
    $region12: #{basic_block_forward.3} parent=5 // pred_fallthru
      _
    %p138 = scmp.lt.s32.totalorder %s9, 2
    // Predicated region
    $region21: #{basic_block_forward.3} parent=5 // pred_check
      %p139 = pneg %p138
    $region22: #{basic_block_forward.3} parent=5 // pred_check_branch
      %141 = sbr.rel (%p139) target = $region24
    $region23: #{basic_block_forward.3} parent=5 // pred_region
      // Predicated region
      $region25: #{basic_block_forward.3} parent=23 // pred_check
        %p142 = pneg %p41
      $region26: #{basic_block_forward.3} parent=23 // pred_check_branch
        %144 = sbr.rel (%p142) target = $region28
      $region27: #{basic_block_forward.3} parent=23 // pred_region
        %s145 = smul.u32 4, %s16
        %p146 = scmp.lt.s32.totalorder %s145, 7
        %s147 = scalar_select %p146, %s145, 7
        %s148 = smul.addr %s147, 18
        %s149 = smul.addr %s148, 4
        %s150 = scalar_lea.vmem %s0, %s149
        %s151 = smul.u32 4, %s16
      $region28: #{basic_block_forward.3} parent=23 // pred_fallthru
        _
    $region24: #{basic_block_forward.3} parent=5 // pred_fallthru
      _
    %p152 = scmp.le.s32.totalorder 1, %s9
    %p153 = scmp.lt.s32.totalorder %s9, 3
    %p154 = pnand %p152, %p153
    %p155 = pneg %p154
    // Predicated region
    $region29: #{basic_block_forward.3} parent=5 // pred_check
      _
    $region30: #{basic_block_forward.3} parent=5 // pred_check_branch
      %157 = sbr.rel (%p154) target = $region32
    $region31: #{basic_block_forward.3} parent=5 // pred_region
      %s158 = ssub.s32 %s9, 1
      %s159 = smul.u32 4, %s18
      %p160 = scmp.lt.s32.totalorder %s159, 7
      %s161 = scalar_select %p160, %s159, 7
      %s162 = smul.addr %s161, 18
      %s163 = smul.addr %s162, 4
      %s164 = scalar_lea.vmem %s0, %s163
      %p165 = pneg %p47
      %p166 = pneg %p44
      %p167 = pneg %p68
      %p168 = pneg %p65
      %p169 = pneg %p89
      %p170 = pneg %p86
      %p171 = pneg %p117
      %p172 = pneg %p114
      %s173 = sadd.s32 %s18, %s19
      %s174 = smul.u32 8, %s173
      %p175 = scmp.lt.s32.totalorder %s174, 15
      %s176 = scalar_select %p175, %s174, 15
      %s177 = smul.addr %s176, 4
      %s178 = scalar_lea.vmem %s3, %s177
      %s179 = smul.u32 4, %s18
      %p180 = scmp.lt.s32.totalorder %s179, 7
      %s181 = scalar_select %p180, %s179, 7
      %s182 = smul.addr %s181, 18
      %s183 = smul.addr %s182, 4
      %s184 = scalar_lea.vmem %s0, %s183
      %s185 = smul.u32 4, %s18
      %s186 = sadd.s32 %s18, %s19
      %s187 = smul.u32 8, %s186
      %p188 = scmp.lt.s32.totalorder %s187, 15
      %s189 = scalar_select %p188, %s187, 15
      %s190 = smul.addr %s189, 4
      %s191 = scalar_lea.vmem %s3, %s190
      %s192 = sadd.s32 %s18, %s19
      %s193 = smul.u32 8, %s192
      %s195 = smul.u32 %s19, 8
      %v196 = vld [vmem:[%s2] sm:$0x1]
      %v198 = vlaneseq
      %v199 = vshrl.u32 %v198, 7
      %v200 = vsub.s32 0, %v199
      %v201 = vrot.slane %v196, %v200
      %s203 = smul.u32 %s195, 2
      %s204 = smul.addr %s203, 4
      %s205 = scalar_lea.vmem %s184, %s204
      %v206 = vld [vmem:[%s205] sm:$0xf]
      %v207 = vld [vmem:[%s205 + $0x8] sm:$0xf]
      %v208 = vld [vmem:[%s205 + $0x10] sm:$0xf]
      %v209 = vld [vmem:[%s205 + $0x18] sm:$0xf]
      %v210 = vld [vmem:[%s205 + $0x20] sm:$0xf]
      %v211 = vld [vmem:[%s205 + $0x28] sm:$0xf]
      %v212 = vld [vmem:[%s205 + $0x30] sm:$0xf]
      %v213 = vld [vmem:[%s205 + $0x38] sm:$0xf]
      %s214 = sadd.s32 %s203, 18
      %s215 = smul.addr %s214, 4
      %s216 = scalar_lea.vmem %s184, %s215
      %v217 = vld [vmem:[%s216] sm:$0xf]
      %v218 = vld [vmem:[%s216 + $0x8] sm:$0xf]
      %v219 = vld [vmem:[%s216 + $0x10] sm:$0xf]
      %v220 = vld [vmem:[%s216 + $0x18] sm:$0xf]
      %v221 = vld [vmem:[%s216 + $0x20] sm:$0xf]
      %v222 = vld [vmem:[%s216 + $0x28] sm:$0xf]
      %v223 = vld [vmem:[%s216 + $0x30] sm:$0xf]
      %v224 = vld [vmem:[%s216 + $0x38] sm:$0xf]
      %v225 = vld [vmem:[%s205 + $0x4] sm:$0x1]
      %v226 = vld [vmem:[%s205 + $0xc] sm:$0x1]
      %v227 = vld [vmem:[%s205 + $0x14] sm:$0x1]
      %v228 = vld [vmem:[%s205 + $0x1c] sm:$0x1]
      %v229 = vld [vmem:[%s205 + $0x24] sm:$0x1]
      %v230 = vld [vmem:[%s205 + $0x2c] sm:$0x1]
      %v231 = vld [vmem:[%s205 + $0x34] sm:$0x1]
      %v232 = vld [vmem:[%s205 + $0x3c] sm:$0x1]
      %vm233 = vsmask.f32 3328
      %vm234 = vsmask.f32 7440
      %vm235 = vmor %vm233, %vm234
      %v237 = vshrl.u32 %v206, 16
      %v239 = vrot.slane %v237, 4
      %v240 = vshll.u32 %v206, 16
      %v242 = vrot.slane %v240, 5
      %v243 = vor.u32 %v239, %v242
      %v244 = vrot.slane %v243, 4
      %v246 = vshll.u32 %v225, 16
      %v248 = vrot.slane %v246, 5
      %v249 = vsel %vm235, %v244, %v248
      %v251 = vshrl.u32 %v207, 16
      %v253 = vrot.slane %v251, 4
      %v254 = vshll.u32 %v207, 16
      %v256 = vrot.slane %v254, 5
      %v257 = vor.u32 %v253, %v256
      %v258 = vrot.slane %v257, 4
      %v260 = vshll.u32 %v226, 16
      %v262 = vrot.slane %v260, 5
      %v263 = vsel %vm235, %v258, %v262
      %v265 = vshrl.u32 %v208, 16
      %v267 = vrot.slane %v265, 4
      %v268 = vshll.u32 %v208, 16
      %v270 = vrot.slane %v268, 5
      %v271 = vor.u32 %v267, %v270
      %v272 = vrot.slane %v271, 4
      %v274 = vshll.u32 %v227, 16
      %v276 = vrot.slane %v274, 5
      %v277 = vsel %vm235, %v272, %v276
      %v279 = vshrl.u32 %v209, 16
      %v281 = vrot.slane %v279, 4
      %v282 = vshll.u32 %v209, 16
      %v284 = vrot.slane %v282, 5
      %v285 = vor.u32 %v281, %v284
      %v286 = vrot.slane %v285, 4
      %v288 = vshll.u32 %v228, 16
      %v290 = vrot.slane %v288, 5
      %v291 = vsel %vm235, %v286, %v290
      %v293 = vshrl.u32 %v210, 16
      %v295 = vrot.slane %v293, 4
      %v296 = vshll.u32 %v210, 16
      %v298 = vrot.slane %v296, 5
      %v299 = vor.u32 %v295, %v298
      %v300 = vrot.slane %v299, 4
      %v302 = vshll.u32 %v229, 16
      %v304 = vrot.slane %v302, 5
      %v305 = vsel %vm235, %v300, %v304
      %v307 = vshrl.u32 %v211, 16
      %v309 = vrot.slane %v307, 4
      %v310 = vshll.u32 %v211, 16
      %v312 = vrot.slane %v310, 5
      %v313 = vor.u32 %v309, %v312
      %v314 = vrot.slane %v313, 4
      %v316 = vshll.u32 %v230, 16
      %v318 = vrot.slane %v316, 5
      %v319 = vsel %vm235, %v314, %v318
      %v321 = vshrl.u32 %v212, 16
      %v323 = vrot.slane %v321, 4
      %v324 = vshll.u32 %v212, 16
      %v326 = vrot.slane %v324, 5
      %v327 = vor.u32 %v323, %v326
      %v328 = vrot.slane %v327, 4
      %v330 = vshll.u32 %v231, 16
      %v332 = vrot.slane %v330, 5
      %v333 = vsel %vm235, %v328, %v332
      %v335 = vshrl.u32 %v213, 16
      %v337 = vrot.slane %v335, 4
      %v338 = vshll.u32 %v213, 16
      %v340 = vrot.slane %v338, 5
      %v341 = vor.u32 %v337, %v340
      %v342 = vrot.slane %v341, 4
      %v344 = vshll.u32 %v232, 16
      %v346 = vrot.slane %v344, 5
      %v347 = vsel %vm235, %v342, %v346
      %v356 = vunpack.c.l.b16 %v206
      %v357 = vunpack.c.l.b16 %v207
      %v358 = vunpack.c.l.b16 %v208
      %v359 = vunpack.c.l.b16 %v209
      %v360 = vunpack.c.l.b16 %v210
      %v361 = vunpack.c.l.b16 %v211
      %v362 = vunpack.c.l.b16 %v212
      %v363 = vunpack.c.l.b16 %v213
      %v364 = vpack.c.b16 %v357, %v356
      %v365 = vpack.c.b16 %v359, %v358
      %v366 = vpack.c.b16 %v361, %v360
      %v367 = vpack.c.b16 %v363, %v362
      %v376 = vunpack.c.l.b16 %v217
      %v377 = vunpack.c.l.b16 %v218
      %v378 = vunpack.c.l.b16 %v219
      %v379 = vunpack.c.l.b16 %v220
      %v380 = vunpack.c.l.b16 %v221
      %v381 = vunpack.c.l.b16 %v222
      %v382 = vunpack.c.l.b16 %v223
      %v383 = vunpack.c.l.b16 %v224
      %v384 = vpack.c.b16 %v377, %v376
      %v385 = vpack.c.b16 %v379, %v378
      %v386 = vpack.c.b16 %v381, %v380
      %v387 = vpack.c.b16 %v383, %v382
      %388 = vrot.lane.b32.xlu0 %v384, 4
      %v389 = vpop.permute.xlu0 %388
      %390 = vrot.lane.b32.xlu0 %v385, 4
      %v391 = vpop.permute.xlu0 %390
      %392 = vrot.lane.b32.xlu0 %v386, 4
      %v393 = vpop.permute.xlu0 %392
      %394 = vrot.lane.b32.xlu0 %v387, 4
      %v395 = vpop.permute.xlu0 %394
      %v396 = vunpack.c.l.b16 %v249
      %v397 = vunpack.c.l.b16 %v263
      %v398 = vunpack.c.l.b16 %v277
      %v399 = vunpack.c.l.b16 %v291
      %v400 = vunpack.c.l.b16 %v305
      %v401 = vunpack.c.l.b16 %v319
      %v402 = vunpack.c.l.b16 %v333
      %v403 = vunpack.c.l.b16 %v347
      %v404 = vpack.c.b16 %v397, %v396
      %v405 = vpack.c.b16 %v399, %v398
      %v406 = vpack.c.b16 %v401, %v400
      %v407 = vpack.c.b16 %v403, %v402
      %408 = vrot.lane.b32.xlu0 %v404, 8
      %v409 = vpop.permute.xlu0 %408
      %410 = vrot.lane.b32.xlu0 %v405, 8
      %v411 = vpop.permute.xlu0 %410
      %412 = vrot.lane.b32.xlu0 %v406, 8
      %v413 = vpop.permute.xlu0 %412
      %414 = vrot.lane.b32.xlu0 %v407, 8
      %v415 = vpop.permute.xlu0 %414
      %vm416 = vcmask 31744
      %v419 = vsel %vm416, %v364, %v389
      %v422 = vsel %vm416, %v365, %v391
      %v425 = vsel %vm416, %v366, %v393
      %v428 = vsel %vm416, %v367, %v395
      %vm429 = vcmask 64512
      %v431 = vsel %vm429, %v419, %v409
      %v433 = vsel %vm429, %v422, %v411
      %v435 = vsel %vm429, %v425, %v413
      %v437 = vsel %vm429, %v428, %v415
      %v438 = vld [vmem:[%s1] sm:$0xf]
      %v439 = vld [vmem:[%s1 + $0x4] sm:$0x3]
      %v442 = vunpack.c.l.b16 %v438
      %v443 = vunpack.c.l.b16 %v439
      %v444 = vpack.c.b16 %v443, %v442
      %vm445 = vcmask 97280
      %v446 = vsel %vm445, %v431, 0
      %v448 = vsel %vm445, %v433, 0
      %v450 = vsel %vm445, %v435, 0
      %v452 = vsel %vm445, %v437, 0
      %vm454 = vcmask 1045504
      %v456 = vsel %vm454, %v444, 0
      %458 = vmatprep.subr.bf16.mxu0 0
      %459 = vmatpush1.bf16.msra.mxu0 %v456
      %460 = vmatprep.subr.bf16.mxu0 0
      %461 = vmatpush1.bf16.msra.mxu0 0
      %462 = vmatprep.subr.bf16.mxu0 0
      %463 = vmatpush1.bf16.msra.mxu0 0
      %464 = vmatprep.subr.bf16.mxu0 0
      %465 = vmatpush1.bf16.msra.mxu0 0
      %466 = vmatprep.subr.bf16.mxu0 0
      %467 = vmatpush1.bf16.msra.mxu0 0
      %468 = vmatprep.subr.bf16.mxu0 0
      %469 = vmatpush1.bf16.msra.mxu0 0
      %470 = vmatprep.subr.bf16.mxu0 0
      %471 = vmatpush1.bf16.msra.mxu0 0
      %472 = vmatprep.subr.bf16.mxu0 0
      %473 = vmatpush1.bf16.msra.mxu0 0
      %474 = vmatprep.subr.bf16.mxu0 0
      %475 = vmatpush1.bf16.msra.mxu0 0
      %476 = vmatprep.subr.bf16.mxu0 0
      %477 = vmatpush1.bf16.msra.mxu0 0
      %478 = vmatprep.subr.bf16.mxu0 0
      %479 = vmatpush1.bf16.msra.mxu0 0
      %480 = vmatprep.subr.bf16.mxu0 0
      %481 = vmatpush1.bf16.msra.mxu0 0
      %482 = vmatprep.subr.bf16.mxu0 0
      %483 = vmatpush1.bf16.msra.mxu0 0
      %484 = vmatprep.subr.bf16.mxu0 0
      %485 = vmatpush1.bf16.msra.mxu0 0
      %486 = vmatprep.subr.bf16.mxu0 0
      %487 = vmatpush1.bf16.msra.mxu0 0
      %488 = vmatprep.subr.bf16.mxu0 0
      %489 = vmatpush1.bf16.msra.mxu0 0
      %490 = vmatprep.mubr.bf16.mxu0 0
      %491 = vmatmul.mubr.bf16.gmra.mrb[0].mxu0 %v446
      %v492 = vpop.f32.mrb[0].mxu0
      %v493 = vadd.f32 0.0, %v492
      %v494 = vpop.f32.mrb[0].mxu0
      %v495 = vpop.f32.mrb[0].mxu0
      %v496 = vadd.f32 0.0, %v495
      %v497 = vpop.f32.mrb[0].mxu0
      %498 = vmatprep.mubr.bf16.mxu0 0
      %499 = vmatmul.mubr.bf16.gmra.mrb[0].mxu0 %v448
      %v500 = vpop.f32.mrb[0].mxu0
      %v501 = vadd.f32 0.0, %v500
      %v502 = vpop.f32.mrb[0].mxu0
      %v503 = vpop.f32.mrb[0].mxu0
      %v504 = vadd.f32 0.0, %v503
      %v505 = vpop.f32.mrb[0].mxu0
      %506 = vmatprep.mubr.bf16.mxu0 0
      %507 = vmatmul.mubr.bf16.gmra.mrb[0].mxu0 %v450
      %v508 = vpop.f32.mrb[0].mxu0
      %v509 = vadd.f32 0.0, %v508
      %v510 = vpop.f32.mrb[0].mxu0
      %v511 = vpop.f32.mrb[0].mxu0
      %v512 = vadd.f32 0.0, %v511
      %v513 = vpop.f32.mrb[0].mxu0
      %514 = vmatprep.mubr.bf16.mxu0 0
      %515 = vmatmul.mubr.bf16.gmra.mrb[0].mxu0 %v452
      %v516 = vpop.f32.mrb[0].mxu0
      %v517 = vadd.f32 0.0, %v516
      %v518 = vpop.f32.mrb[0].mxu0
      %v519 = vpop.f32.mrb[0].mxu0
      %v520 = vadd.f32 0.0, %v519
      %v521 = vpop.f32.mrb[0].mxu0
      %522 = vdwg.mxu0
      %v523 = vadd.f32 %v201, %v493
      %v524 = vadd.f32 %v201, %v496
      %v525 = vadd.f32 %v201, %v501
      %v526 = vadd.f32 %v201, %v504
      %v527 = vadd.f32 %v201, %v509
      %v528 = vadd.f32 %v201, %v512
      %v529 = vadd.f32 %v201, %v517
      %v530 = vadd.f32 %v201, %v520
      %s531 = sadd.s32 %s203, 36
      %s532 = smul.addr %s531, 4
      %s533 = scalar_lea.vmem %s184, %s532
      %v534 = vld [vmem:[%s533] sm:$0xf]
      %v535 = vld [vmem:[%s533 + $0x8] sm:$0xf]
      %v536 = vld [vmem:[%s533 + $0x10] sm:$0xf]
      %v537 = vld [vmem:[%s533 + $0x18] sm:$0xf]
      %v538 = vld [vmem:[%s533 + $0x20] sm:$0xf]
      %v539 = vld [vmem:[%s533 + $0x28] sm:$0xf]
      %v540 = vld [vmem:[%s533 + $0x30] sm:$0xf]
      %v541 = vld [vmem:[%s533 + $0x38] sm:$0xf]
      %s542 = sadd.s32 %s203, 54
      %s543 = smul.addr %s542, 4
      %s544 = scalar_lea.vmem %s184, %s543
      %v545 = vld [vmem:[%s544] sm:$0xf]
      %v546 = vld [vmem:[%s544 + $0x8] sm:$0xf]
      %v547 = vld [vmem:[%s544 + $0x10] sm:$0xf]
      %v548 = vld [vmem:[%s544 + $0x18] sm:$0xf]
      %v549 = vld [vmem:[%s544 + $0x20] sm:$0xf]
      %v550 = vld [vmem:[%s544 + $0x28] sm:$0xf]
      %v551 = vld [vmem:[%s544 + $0x30] sm:$0xf]
      %v552 = vld [vmem:[%s544 + $0x38] sm:$0xf]
      %v553 = vld [vmem:[%s533 + $0x4] sm:$0x1]
      %v554 = vld [vmem:[%s533 + $0xc] sm:$0x1]
      %v555 = vld [vmem:[%s533 + $0x14] sm:$0x1]
      %v556 = vld [vmem:[%s533 + $0x1c] sm:$0x1]
      %v557 = vld [vmem:[%s533 + $0x24] sm:$0x1]
      %v558 = vld [vmem:[%s533 + $0x2c] sm:$0x1]
      %v559 = vld [vmem:[%s533 + $0x34] sm:$0x1]
      %v560 = vld [vmem:[%s533 + $0x3c] sm:$0x1]
      %v562 = vshrl.u32 %v534, 16
      %v564 = vrot.slane %v562, 4
      %v565 = vshll.u32 %v534, 16
      %v567 = vrot.slane %v565, 5
      %v568 = vor.u32 %v564, %v567
      %v569 = vrot.slane %v568, 4
      %v571 = vshll.u32 %v553, 16
      %v573 = vrot.slane %v571, 5
      %v574 = vsel %vm235, %v569, %v573
      %v576 = vshrl.u32 %v535, 16
      %v578 = vrot.slane %v576, 4
      %v579 = vshll.u32 %v535, 16
      %v581 = vrot.slane %v579, 5
      %v582 = vor.u32 %v578, %v581
      %v583 = vrot.slane %v582, 4
      %v585 = vshll.u32 %v554, 16
      %v587 = vrot.slane %v585, 5
      %v588 = vsel %vm235, %v583, %v587
      %v590 = vshrl.u32 %v536, 16
      %v592 = vrot.slane %v590, 4
      %v593 = vshll.u32 %v536, 16
      %v595 = vrot.slane %v593, 5
      %v596 = vor.u32 %v592, %v595
      %v597 = vrot.slane %v596, 4
      %v599 = vshll.u32 %v555, 16
      %v601 = vrot.slane %v599, 5
      %v602 = vsel %vm235, %v597, %v601
      %v604 = vshrl.u32 %v537, 16
      %v606 = vrot.slane %v604, 4
      %v607 = vshll.u32 %v537, 16
      %v609 = vrot.slane %v607, 5
      %v610 = vor.u32 %v606, %v609
      %v611 = vrot.slane %v610, 4
      %v613 = vshll.u32 %v556, 16
      %v615 = vrot.slane %v613, 5
      %v616 = vsel %vm235, %v611, %v615
      %v618 = vshrl.u32 %v538, 16
      %v620 = vrot.slane %v618, 4
      %v621 = vshll.u32 %v538, 16
      %v623 = vrot.slane %v621, 5
      %v624 = vor.u32 %v620, %v623
      %v625 = vrot.slane %v624, 4
      %v627 = vshll.u32 %v557, 16
      %v629 = vrot.slane %v627, 5
      %v630 = vsel %vm235, %v625, %v629
      %v632 = vshrl.u32 %v539, 16
      %v634 = vrot.slane %v632, 4
      %v635 = vshll.u32 %v539, 16
      %v637 = vrot.slane %v635, 5
      %v638 = vor.u32 %v634, %v637
      %v639 = vrot.slane %v638, 4
      %v641 = vshll.u32 %v558, 16
      %v643 = vrot.slane %v641, 5
      %v644 = vsel %vm235, %v639, %v643
      %v646 = vshrl.u32 %v540, 16
      %v648 = vrot.slane %v646, 4
      %v649 = vshll.u32 %v540, 16
      %v651 = vrot.slane %v649, 5
      %v652 = vor.u32 %v648, %v651
      %v653 = vrot.slane %v652, 4
      %v655 = vshll.u32 %v559, 16
      %v657 = vrot.slane %v655, 5
      %v658 = vsel %vm235, %v653, %v657
      %v660 = vshrl.u32 %v541, 16
      %v662 = vrot.slane %v660, 4
      %v663 = vshll.u32 %v541, 16
      %v665 = vrot.slane %v663, 5
      %v666 = vor.u32 %v662, %v665
      %v667 = vrot.slane %v666, 4
      %v669 = vshll.u32 %v560, 16
      %v671 = vrot.slane %v669, 5
      %v672 = vsel %vm235, %v667, %v671
      %v681 = vunpack.c.l.b16 %v534
      %v682 = vunpack.c.l.b16 %v535
      %v683 = vunpack.c.l.b16 %v536
      %v684 = vunpack.c.l.b16 %v537
      %v685 = vunpack.c.l.b16 %v538
      %v686 = vunpack.c.l.b16 %v539
      %v687 = vunpack.c.l.b16 %v540
      %v688 = vunpack.c.l.b16 %v541
      %v689 = vpack.c.b16 %v682, %v681
      %v690 = vpack.c.b16 %v684, %v683
      %v691 = vpack.c.b16 %v686, %v685
      %v692 = vpack.c.b16 %v688, %v687
      %v701 = vunpack.c.l.b16 %v545
      %v702 = vunpack.c.l.b16 %v546
      %v703 = vunpack.c.l.b16 %v547
      %v704 = vunpack.c.l.b16 %v548
      %v705 = vunpack.c.l.b16 %v549
      %v706 = vunpack.c.l.b16 %v550
      %v707 = vunpack.c.l.b16 %v551
      %v708 = vunpack.c.l.b16 %v552
      %v709 = vpack.c.b16 %v702, %v701
      %v710 = vpack.c.b16 %v704, %v703
      %v711 = vpack.c.b16 %v706, %v705
      %v712 = vpack.c.b16 %v708, %v707
      %713 = vrot.lane.b32.xlu0 %v709, 4
      %v714 = vpop.permute.xlu0 %713
      %715 = vrot.lane.b32.xlu0 %v710, 4
      %v716 = vpop.permute.xlu0 %715
      %717 = vrot.lane.b32.xlu0 %v711, 4
      %v718 = vpop.permute.xlu0 %717
      %719 = vrot.lane.b32.xlu0 %v712, 4
      %v720 = vpop.permute.xlu0 %719
      %v721 = vunpack.c.l.b16 %v574
      %v722 = vunpack.c.l.b16 %v588
      %v723 = vunpack.c.l.b16 %v602
      %v724 = vunpack.c.l.b16 %v616
      %v725 = vunpack.c.l.b16 %v630
      %v726 = vunpack.c.l.b16 %v644
      %v727 = vunpack.c.l.b16 %v658
      %v728 = vunpack.c.l.b16 %v672
      %v729 = vpack.c.b16 %v722, %v721
      %v730 = vpack.c.b16 %v724, %v723
      %v731 = vpack.c.b16 %v726, %v725
      %v732 = vpack.c.b16 %v728, %v727
      %733 = vrot.lane.b32.xlu0 %v729, 8
      %v734 = vpop.permute.xlu0 %733
      %735 = vrot.lane.b32.xlu0 %v730, 8
      %v736 = vpop.permute.xlu0 %735
      %737 = vrot.lane.b32.xlu0 %v731, 8
      %v738 = vpop.permute.xlu0 %737
      %739 = vrot.lane.b32.xlu0 %v732, 8
      %v740 = vpop.permute.xlu0 %739
      %v743 = vsel %vm416, %v689, %v714
      %v746 = vsel %vm416, %v690, %v716
      %v749 = vsel %vm416, %v691, %v718
      %v752 = vsel %vm416, %v692, %v720
      %v754 = vsel %vm429, %v743, %v734
      %v756 = vsel %vm429, %v746, %v736
      %v758 = vsel %vm429, %v749, %v738
      %v760 = vsel %vm429, %v752, %v740
      %s761 = scalar_lea.vmem %s1, 8
      %v762 = vld [vmem:[%s761] sm:$0xf]
      %v763 = vld [vmem:[%s761 + $0x4] sm:$0x3]
      %v766 = vunpack.c.l.b16 %v762
      %v767 = vunpack.c.l.b16 %v763
      %v768 = vpack.c.b16 %v767, %v766
      %v769 = vsel %vm445, %v754, 0
      %v771 = vsel %vm445, %v756, 0
      %v773 = vsel %vm445, %v758, 0
      %v775 = vsel %vm445, %v760, 0
      %v778 = vsel %vm454, %v768, 0
      %780 = vmatprep.subr.bf16.mxu0 0
      %781 = vmatpush1.bf16.msra.mxu0 %v778
      %782 = vmatprep.subr.bf16.mxu0 0
      %783 = vmatpush1.bf16.msra.mxu0 0
      %784 = vmatprep.subr.bf16.mxu0 0
      %785 = vmatpush1.bf16.msra.mxu0 0
      %786 = vmatprep.subr.bf16.mxu0 0
      %787 = vmatpush1.bf16.msra.mxu0 0
      %788 = vmatprep.subr.bf16.mxu0 0
      %789 = vmatpush1.bf16.msra.mxu0 0
      %790 = vmatprep.subr.bf16.mxu0 0
      %791 = vmatpush1.bf16.msra.mxu0 0
      %792 = vmatprep.subr.bf16.mxu0 0
      %793 = vmatpush1.bf16.msra.mxu0 0
      %794 = vmatprep.subr.bf16.mxu0 0
      %795 = vmatpush1.bf16.msra.mxu0 0
      %796 = vmatprep.subr.bf16.mxu0 0
      %797 = vmatpush1.bf16.msra.mxu0 0
      %798 = vmatprep.subr.bf16.mxu0 0
      %799 = vmatpush1.bf16.msra.mxu0 0
      %800 = vmatprep.subr.bf16.mxu0 0
      %801 = vmatpush1.bf16.msra.mxu0 0
      %802 = vmatprep.subr.bf16.mxu0 0
      %803 = vmatpush1.bf16.msra.mxu0 0
      %804 = vmatprep.subr.bf16.mxu0 0
      %805 = vmatpush1.bf16.msra.mxu0 0
      %806 = vmatprep.subr.bf16.mxu0 0
      %807 = vmatpush1.bf16.msra.mxu0 0
      %808 = vmatprep.subr.bf16.mxu0 0
      %809 = vmatpush1.bf16.msra.mxu0 0
      %810 = vmatprep.subr.bf16.mxu0 0
      %811 = vmatpush1.bf16.msra.mxu0 0
      %812 = vmatprep.mubr.bf16.mxu0 0
      %813 = vmatmul.mubr.bf16.gmra.mrb[0].mxu0 %v769
      %v814 = vpop.f32.mrb[0].mxu0
      %v815 = vadd.f32 0.0, %v814
      %v816 = vpop.f32.mrb[0].mxu0
      %v817 = vpop.f32.mrb[0].mxu0
      %v818 = vadd.f32 0.0, %v817
      %v819 = vpop.f32.mrb[0].mxu0
      %820 = vmatprep.mubr.bf16.mxu0 0
      %821 = vmatmul.mubr.bf16.gmra.mrb[0].mxu0 %v771
      %v822 = vpop.f32.mrb[0].mxu0
      %v823 = vadd.f32 0.0, %v822
      %v824 = vpop.f32.mrb[0].mxu0
      %v825 = vpop.f32.mrb[0].mxu0
      %v826 = vadd.f32 0.0, %v825
      %v827 = vpop.f32.mrb[0].mxu0
      %828 = vmatprep.mubr.bf16.mxu0 0
      %829 = vmatmul.mubr.bf16.gmra.mrb[0].mxu0 %v773
      %v830 = vpop.f32.mrb[0].mxu0
      %v831 = vadd.f32 0.0, %v830
      %v832 = vpop.f32.mrb[0].mxu0
      %v833 = vpop.f32.mrb[0].mxu0
      %v834 = vadd.f32 0.0, %v833
      %v835 = vpop.f32.mrb[0].mxu0
      %836 = vmatprep.mubr.bf16.mxu0 0
      %837 = vmatmul.mubr.bf16.gmra.mrb[0].mxu0 %v775
      %v838 = vpop.f32.mrb[0].mxu0
      %v839 = vadd.f32 0.0, %v838
      %v840 = vpop.f32.mrb[0].mxu0
      %v841 = vpop.f32.mrb[0].mxu0
      %v842 = vadd.f32 0.0, %v841
      %v843 = vpop.f32.mrb[0].mxu0
      %844 = vdwg.mxu0
      %v845 = vadd.f32 %v523, %v815
      %v846 = vadd.f32 %v524, %v818
      %v847 = vadd.f32 %v525, %v823
      %v848 = vadd.f32 %v526, %v826
      %v849 = vadd.f32 %v527, %v831
      %v850 = vadd.f32 %v528, %v834
      %v851 = vadd.f32 %v529, %v839
      %v852 = vadd.f32 %v530, %v842
      %s853 = sadd.s32 %s195, 1
      %s854 = smul.u32 %s853, 2
      %s855 = smul.addr %s854, 4
      %s856 = scalar_lea.vmem %s184, %s855
      %v857 = vld [vmem:[%s856] sm:$0xf]
      %v858 = vld [vmem:[%s856 + $0x8] sm:$0xf]
      %v859 = vld [vmem:[%s856 + $0x10] sm:$0xf]
      %v860 = vld [vmem:[%s856 + $0x18] sm:$0xf]
      %v861 = vld [vmem:[%s856 + $0x20] sm:$0xf]
      %v862 = vld [vmem:[%s856 + $0x28] sm:$0xf]
      %v863 = vld [vmem:[%s856 + $0x30] sm:$0xf]
      %v864 = vld [vmem:[%s856 + $0x38] sm:$0xf]
      %s865 = sadd.s32 %s854, 18
      %s866 = smul.addr %s865, 4
      %s867 = scalar_lea.vmem %s184, %s866
      %v868 = vld [vmem:[%s867] sm:$0xf]
      %v869 = vld [vmem:[%s867 + $0x8] sm:$0xf]
      %v870 = vld [vmem:[%s867 + $0x10] sm:$0xf]
      %v871 = vld [vmem:[%s867 + $0x18] sm:$0xf]
      %v872 = vld [vmem:[%s867 + $0x20] sm:$0xf]
      %v873 = vld [vmem:[%s867 + $0x28] sm:$0xf]
      %v874 = vld [vmem:[%s867 + $0x30] sm:$0xf]
      %v875 = vld [vmem:[%s867 + $0x38] sm:$0xf]
      %v876 = vld [vmem:[%s856 + $0x4] sm:$0x1]
      %v877 = vld [vmem:[%s856 + $0xc] sm:$0x1]
      %v878 = vld [vmem:[%s856 + $0x14] sm:$0x1]
      %v879 = vld [vmem:[%s856 + $0x1c] sm:$0x1]
      %v880 = vld [vmem:[%s856 + $0x24] sm:$0x1]
      %v881 = vld [vmem:[%s856 + $0x2c] sm:$0x1]
      %v882 = vld [vmem:[%s856 + $0x34] sm:$0x1]
      %v883 = vld [vmem:[%s856 + $0x3c] sm:$0x1]
      %v885 = vshrl.u32 %v857, 16
      %v887 = vrot.slane %v885, 4
      %v888 = vshll.u32 %v857, 16
      %v890 = vrot.slane %v888, 5
      %v891 = vor.u32 %v887, %v890
      %v892 = vrot.slane %v891, 4
      %v894 = vshll.u32 %v876, 16
      %v896 = vrot.slane %v894, 5
      %v897 = vsel %vm235, %v892, %v896
      %v899 = vshrl.u32 %v858, 16
      %v901 = vrot.slane %v899, 4
      %v902 = vshll.u32 %v858, 16
      %v904 = vrot.slane %v902, 5
      %v905 = vor.u32 %v901, %v904
      %v906 = vrot.slane %v905, 4
      %v908 = vshll.u32 %v877, 16
      %v910 = vrot.slane %v908, 5
      %v911 = vsel %vm235, %v906, %v910
      %v913 = vshrl.u32 %v859, 16
      %v915 = vrot.slane %v913, 4
      %v916 = vshll.u32 %v859, 16
      %v918 = vrot.slane %v916, 5
      %v919 = vor.u32 %v915, %v918
      %v920 = vrot.slane %v919, 4
      %v922 = vshll.u32 %v878, 16
      %v924 = vrot.slane %v922, 5
      %v925 = vsel %vm235, %v920, %v924
      %v927 = vshrl.u32 %v860, 16
      %v929 = vrot.slane %v927, 4
      %v930 = vshll.u32 %v860, 16
      %v932 = vrot.slane %v930, 5
      %v933 = vor.u32 %v929, %v932
      %v934 = vrot.slane %v933, 4
      %v936 = vshll.u32 %v879, 16
      %v938 = vrot.slane %v936, 5
      %v939 = vsel %vm235, %v934, %v938
      %v941 = vshrl.u32 %v861, 16
      %v943 = vrot.slane %v941, 4
      %v944 = vshll.u32 %v861, 16
      %v946 = vrot.slane %v944, 5
      %v947 = vor.u32 %v943, %v946
      %v948 = vrot.slane %v947, 4
      %v950 = vshll.u32 %v880, 16
      %v952 = vrot.slane %v950, 5
      %v953 = vsel %vm235, %v948, %v952
      %v955 = vshrl.u32 %v862, 16
      %v957 = vrot.slane %v955, 4
      %v958 = vshll.u32 %v862, 16
      %v960 = vrot.slane %v958, 5
      %v961 = vor.u32 %v957, %v960
      %v962 = vrot.slane %v961, 4
      %v964 = vshll.u32 %v881, 16
      %v966 = vrot.slane %v964, 5
      %v967 = vsel %vm235, %v962, %v966
      %v969 = vshrl.u32 %v863, 16
      %v971 = vrot.slane %v969, 4
      %v972 = vshll.u32 %v863, 16
      %v974 = vrot.slane %v972, 5
      %v975 = vor.u32 %v971, %v974
      %v976 = vrot.slane %v975, 4
      %v978 = vshll.u32 %v882, 16
      %v980 = vrot.slane %v978, 5
      %v981 = vsel %vm235, %v976, %v980
      %v983 = vshrl.u32 %v864, 16
      %v985 = vrot.slane %v983, 4
      %v986 = vshll.u32 %v864, 16
      %v988 = vrot.slane %v986, 5
      %v989 = vor.u32 %v985, %v988
      %v990 = vrot.slane %v989, 4
      %v992 = vshll.u32 %v883, 16
      %v994 = vrot.slane %v992, 5
      %v995 = vsel %vm235, %v990, %v994
      %v1004 = vunpack.c.l.b16 %v857
      %v1005 = vunpack.c.l.b16 %v858
      %v1006 = vunpack.c.l.b16 %v859
      %v1007 = vunpack.c.l.b16 %v860
      %v1008 = vunpack.c.l.b16 %v861
      %v1009 = vunpack.c.l.b16 %v862
      %v1010 = vunpack.c.l.b16 %v863
      %v1011 = vunpack.c.l.b16 %v864
      %v1012 = vpack.c.b16 %v1005, %v1004
      %v1013 = vpack.c.b16 %v1007, %v1006
      %v1014 = vpack.c.b16 %v1009, %v1008
      %v1015 = vpack.c.b16 %v1011, %v1010
      %v1024 = vunpack.c.l.b16 %v868
      %v1025 = vunpack.c.l.b16 %v869
      %v1026 = vunpack.c.l.b16 %v870
      %v1027 = vunpack.c.l.b16 %v871
      %v1028 = vunpack.c.l.b16 %v872
      %v1029 = vunpack.c.l.b16 %v873
      %v1030 = vunpack.c.l.b16 %v874
      %v1031 = vunpack.c.l.b16 %v875
      %v1032 = vpack.c.b16 %v1025, %v1024
      %v1033 = vpack.c.b16 %v1027, %v1026
      %v1034 = vpack.c.b16 %v1029, %v1028
      %v1035 = vpack.c.b16 %v1031, %v1030
      %1036 = vrot.lane.b32.xlu0 %v1032, 4
      %v1037 = vpop.permute.xlu0 %1036
      %1038 = vrot.lane.b32.xlu0 %v1033, 4
      %v1039 = vpop.permute.xlu0 %1038
      %1040 = vrot.lane.b32.xlu0 %v1034, 4
      %v1041 = vpop.permute.xlu0 %1040
      %1042 = vrot.lane.b32.xlu0 %v1035, 4
      %v1043 = vpop.permute.xlu0 %1042
      %v1044 = vunpack.c.l.b16 %v897
      %v1045 = vunpack.c.l.b16 %v911
      %v1046 = vunpack.c.l.b16 %v925
      %v1047 = vunpack.c.l.b16 %v939
      %v1048 = vunpack.c.l.b16 %v953
      %v1049 = vunpack.c.l.b16 %v967
      %v1050 = vunpack.c.l.b16 %v981
      %v1051 = vunpack.c.l.b16 %v995
      %v1052 = vpack.c.b16 %v1045, %v1044
      %v1053 = vpack.c.b16 %v1047, %v1046
      %v1054 = vpack.c.b16 %v1049, %v1048
      %v1055 = vpack.c.b16 %v1051, %v1050
      %1056 = vrot.lane.b32.xlu0 %v1052, 8
      %v1057 = vpop.permute.xlu0 %1056
      %1058 = vrot.lane.b32.xlu0 %v1053, 8
      %v1059 = vpop.permute.xlu0 %1058
      %1060 = vrot.lane.b32.xlu0 %v1054, 8
      %v1061 = vpop.permute.xlu0 %1060
      %1062 = vrot.lane.b32.xlu0 %v1055, 8
      %v1063 = vpop.permute.xlu0 %1062
      %v1066 = vsel %vm416, %v1012, %v1037
      %v1069 = vsel %vm416, %v1013, %v1039
      %v1072 = vsel %vm416, %v1014, %v1041
      %v1075 = vsel %vm416, %v1015, %v1043
      %v1077 = vsel %vm429, %v1066, %v1057
      %v1079 = vsel %vm429, %v1069, %v1059
      %v1081 = vsel %vm429, %v1072, %v1061
      %v1083 = vsel %vm429, %v1075, %v1063
      %s1084 = scalar_lea.vmem %s1, 16
      %v1085 = vld [vmem:[%s1084] sm:$0xf]
      %v1086 = vld [vmem:[%s1084 + $0x4] sm:$0x3]
      %v1089 = vunpack.c.l.b16 %v1085
      %v1090 = vunpack.c.l.b16 %v1086
      %v1091 = vpack.c.b16 %v1090, %v1089
      %v1092 = vsel %vm445, %v1077, 0
      %v1094 = vsel %vm445, %v1079, 0
      %v1096 = vsel %vm445, %v1081, 0
      %v1098 = vsel %vm445, %v1083, 0
      %v1101 = vsel %vm454, %v1091, 0
      %1103 = vmatprep.subr.bf16.mxu0 0
      %1104 = vmatpush1.bf16.msra.mxu0 %v1101
      %1105 = vmatprep.subr.bf16.mxu0 0
      %1106 = vmatpush1.bf16.msra.mxu0 0
      %1107 = vmatprep.subr.bf16.mxu0 0
      %1108 = vmatpush1.bf16.msra.mxu0 0
      %1109 = vmatprep.subr.bf16.mxu0 0
      %1110 = vmatpush1.bf16.msra.mxu0 0
      %1111 = vmatprep.subr.bf16.mxu0 0
      %1112 = vmatpush1.bf16.msra.mxu0 0
      %1113 = vmatprep.subr.bf16.mxu0 0
      %1114 = vmatpush1.bf16.msra.mxu0 0
      %1115 = vmatprep.subr.bf16.mxu0 0
      %1116 = vmatpush1.bf16.msra.mxu0 0
      %1117 = vmatprep.subr.bf16.mxu0 0
      %1118 = vmatpush1.bf16.msra.mxu0 0
      %1119 = vmatprep.subr.bf16.mxu0 0
      %1120 = vmatpush1.bf16.msra.mxu0 0
      %1121 = vmatprep.subr.bf16.mxu0 0
      %1122 = vmatpush1.bf16.msra.mxu0 0
      %1123 = vmatprep.subr.bf16.mxu0 0
      %1124 = vmatpush1.bf16.msra.mxu0 0
      %1125 = vmatprep.subr.bf16.mxu0 0
      %1126 = vmatpush1.bf16.msra.mxu0 0
      %1127 = vmatprep.subr.bf16.mxu0 0
      %1128 = vmatpush1.bf16.msra.mxu0 0
      %1129 = vmatprep.subr.bf16.mxu0 0
      %1130 = vmatpush1.bf16.msra.mxu0 0
      %1131 = vmatprep.subr.bf16.mxu0 0
      %1132 = vmatpush1.bf16.msra.mxu0 0
      %1133 = vmatprep.subr.bf16.mxu0 0
      %1134 = vmatpush1.bf16.msra.mxu0 0
      %1135 = vmatprep.mubr.bf16.mxu0 0
      %1136 = vmatmul.mubr.bf16.gmra.mrb[0].mxu0 %v1092
      %v1137 = vpop.f32.mrb[0].mxu0
      %v1138 = vadd.f32 0.0, %v1137
      %v1139 = vpop.f32.mrb[0].mxu0
      %v1140 = vpop.f32.mrb[0].mxu0
      %v1141 = vadd.f32 0.0, %v1140
      %v1142 = vpop.f32.mrb[0].mxu0
      %1143 = vmatprep.mubr.bf16.mxu0 0
      %1144 = vmatmul.mubr.bf16.gmra.mrb[0].mxu0 %v1094
      %v1145 = vpop.f32.mrb[0].mxu0
      %v1146 = vadd.f32 0.0, %v1145
      %v1147 = vpop.f32.mrb[0].mxu0
      %v1148 = vpop.f32.mrb[0].mxu0
      %v1149 = vadd.f32 0.0, %v1148
      %v1150 = vpop.f32.mrb[0].mxu0
      %1151 = vmatprep.mubr.bf16.mxu0 0
      %1152 = vmatmul.mubr.bf16.gmra.mrb[0].mxu0 %v1096
      %v1153 = vpop.f32.mrb[0].mxu0
      %v1154 = vadd.f32 0.0, %v1153
      %v1155 = vpop.f32.mrb[0].mxu0
      %v1156 = vpop.f32.mrb[0].mxu0
      %v1157 = vadd.f32 0.0, %v1156
      %v1158 = vpop.f32.mrb[0].mxu0
      %1159 = vmatprep.mubr.bf16.mxu0 0
      %1160 = vmatmul.mubr.bf16.gmra.mrb[0].mxu0 %v1098
      %v1161 = vpop.f32.mrb[0].mxu0
      %v1162 = vadd.f32 0.0, %v1161
      %v1163 = vpop.f32.mrb[0].mxu0
      %v1164 = vpop.f32.mrb[0].mxu0
      %v1165 = vadd.f32 0.0, %v1164
      %v1166 = vpop.f32.mrb[0].mxu0
      %1167 = vdwg.mxu0
      %v1168 = vadd.f32 %v845, %v1138
      %v1169 = vadd.f32 %v846, %v1141
      %v1170 = vadd.f32 %v847, %v1146
      %v1171 = vadd.f32 %v848, %v1149
      %v1172 = vadd.f32 %v849, %v1154
      %v1173 = vadd.f32 %v850, %v1157
      %v1174 = vadd.f32 %v851, %v1162
      %v1175 = vadd.f32 %v852, %v1165
      %v1176 = vmax.f32 %v1168, 0.0
      %v1177 = vmax.f32 %v1169, 0.0
      %v1178 = vmax.f32 %v1170, 0.0
      %v1179 = vmax.f32 %v1171, 0.0
      %v1180 = vmax.f32 %v1172, 0.0
      %v1181 = vmax.f32 %v1173, 0.0
      %v1182 = vmax.f32 %v1174, 0.0
      %v1183 = vmax.f32 %v1175, 0.0
      %v1184 = vpack.c.bf16 %v1177, %v1176
      %v1185 = vpack.c.bf16 %v1179, %v1178
      %v1186 = vpack.c.bf16 %v1181, %v1180
      %v1187 = vpack.c.bf16 %v1183, %v1182
      %v1192 = vunpack.c.l.b16 %v1184
      %v1193 = vunpack.c.h.b16 %v1184
      %v1194 = vunpack.c.l.b16 %v1185
      %v1195 = vunpack.c.h.b16 %v1185
      %v1196 = vunpack.c.l.b16 %v1186
      %v1197 = vunpack.c.h.b16 %v1186
      %v1198 = vunpack.c.l.b16 %v1187
      %v1199 = vunpack.c.h.b16 %v1187
      %v1200 = vpack.c.b16 %v1192, %v1192
      %v1201 = vpack.c.b16 %v1193, %v1193
      %v1202 = vpack.c.b16 %v1194, %v1194
      %v1203 = vpack.c.b16 %v1195, %v1195
      %v1204 = vpack.c.b16 %v1196, %v1196
      %v1205 = vpack.c.b16 %v1197, %v1197
      %v1206 = vpack.c.b16 %v1198, %v1198
      %v1207 = vpack.c.b16 %v1199, %v1199
      %1216 = vst [vmem:[%s191] sm:$0xf] %v1200
      %1217 = vst [vmem:[%s191 + $0x4] sm:$0xf] %v1201
      %1218 = vst [vmem:[%s191 + $0x8] sm:$0xf] %v1202
      %1219 = vst [vmem:[%s191 + $0xc] sm:$0xf] %v1203
      %1220 = vst [vmem:[%s191 + $0x10] sm:$0xf] %v1204
      %1221 = vst [vmem:[%s191 + $0x14] sm:$0xf] %v1205
      %1222 = vst [vmem:[%s191 + $0x18] sm:$0xf] %v1206
      %1223 = vst [vmem:[%s191 + $0x1c] sm:$0xf] %v1207
      %s1224 = sadd.s32 %s18, %s19
      %s1225 = smul.u32 8, %s1224
      %p1226 = scmp.lt.s32.totalorder %s1225, 15
      %s1227 = scalar_select %p1226, %s1225, 15
      %s1228 = smul.addr %s1227, 4
      %s1229 = scalar_lea.vmem %s3, %s1228
      // Predicated region
      $region33: #{basic_block_forward.3} parent=31 // pred_check
        %p1230 = pneg %p114
      $region34: #{basic_block_forward.3} parent=31 // pred_check_branch
        %1232 = sbr.rel (%p1230) target = $region36
      $region35: #{basic_block_forward.3} parent=31 // pred_region
        %s1233 = sadd.s32 %s18, %s19
        %s1234 = smul.u32 8, %s1233
      $region36: #{basic_block_forward.3} parent=31 // pred_fallthru
        _
    $region32: #{basic_block_forward.3} parent=5 // pred_fallthru
      _
    %p1235 = scmp.le.s32.totalorder 2, %s9
    // Predicated region
    $region37: #{basic_block_forward.3} parent=5 // pred_check
      %p1236 = pneg %p1235
    $region38: #{basic_block_forward.3} parent=5 // pred_check_branch
      %1238 = sbr.rel (%p1236) target = $region40
    $region39: #{basic_block_forward.3} parent=5 // pred_region
      %s1239 = ssub.s32 %s9, 2
      // Predicated region
      $region41: #{basic_block_forward.3} parent=39 // pred_check
        %p1240 = pneg %p120
      $region42: #{basic_block_forward.3} parent=39 // pred_check_branch
        %1242 = sbr.rel (%p1240) target = $region44
      $region43: #{basic_block_forward.3} parent=39 // pred_region
        %s1243 = sadd.s32 %s20, %s21
        %s1244 = smul.u32 8, %s1243
        %p1245 = scmp.lt.s32.totalorder %s1244, 15
        %s1246 = scalar_select %p1245, %s1244, 15
        %s1247 = smul.addr %s1246, 4
        %s1248 = scalar_lea.vmem %s3, %s1247
      $region44: #{basic_block_forward.3} parent=39 // pred_fallthru
        _
    $region40: #{basic_block_forward.3} parent=5 // pred_fallthru
      _
  $region6: #{basic_block_forward.3} parent=0 // loop_footer
    %s13 = sadd.s32 1, %s9
  $region7: #{basic_block_forward.3} parent=0 // loop_footer_branch
    %8 = sbr.rel target = $region3
  $region8: #{basic_block_forward.3} parent=0 // loop_exit
    _

// kernel: basic_block_forward.5
$region0: #{basic_block_forward.5}
  #allocation0 [shape = 'u32[]', space=smem, size = 0x4, offset = 0x4, fixed_abs, tag = 'smem constant byte address 0x4 - core index']
  #allocation1 [shape = 'u32[144,128]{1,0:T(1,128)}', space=vmem, size = 0x12000, scoped, tag = 'internal scratch']
  %s0 = inlined_call_operand.vmem [shape: bf16[2,10,10,128], index: 0, kind: input, shape index: {}]
  %s1 = inlined_call_operand.vmem [shape: bf16[3,384,128], index: 1, kind: input, shape index: {}]
  %s2 = inlined_call_operand.vmem [shape: f32[1,128], index: 2, kind: input, shape index: {}]
  %s3 = inlined_call_operand.vmem [shape: bf16[128,128], index: 3, kind: input, shape index: {}]
  %s4 = inlined_call_operand.vmem [shape: f32[128,128], index: 4, kind: output, shape index: {}]
  %s5 = sld [smem:[#allocation0]]
  $region49: #{basic_block_forward.5} parent=0
    _
  %s7 = ssub.s32 1, %s5
  %s8 = scalar_select 0, %s7, %s5
  loop: start=0, step=1, limit=4
  $region2: #{basic_block_forward.5} parent=0 // loop_pre_header
    _
  $region3: #{basic_block_forward.5} parent=0 // loop_header
    %s10 = sphi 0, %s14
    %p11 = scmp.ge.s32.totalorder %s10, 4
    %s17 = sphi 0, %s29
    %s18 = sphi 0, %s25
    %s19 = sphi 0, %s17
    %s20 = sphi 0, %s18
    %s21 = sphi 0, %s19
    %s22 = sphi 0, %s20
    %s32 = sphi 0, %s34
    %s35 = sphi 0, %s32
    %s36 = sphi 0, %s35
    %s52 = sphi 0, %s36
    %s56 = sphi 0, %s56
    %s58 = sphi 0, %s56
    %s59 = sphi 0, %s58
    %s73 = sphi 0, %s59
    %s77 = sphi 0, %s77
    %s79 = sphi 0, %s77
    %s80 = sphi 0, %s79
    %s94 = sphi 0, %s80
    %s102 = sphi 0, %s104
    %s105 = sphi 0, %s102
    %s106 = sphi 0, %s105
    %s122 = sphi 0, %s106
    %s130 = sphi 0, %s132
    %s133 = sphi 0, %s130
    %s134 = sphi 0, %s133
    %s150 = sphi 0, %s134
  $region4: #{basic_block_forward.5} parent=0 // loop_header_branch
    %13 = sbr.rel (%p11) target = $region8
  $region5: #{basic_block_forward.5} parent=0 // loop_body
    %s15 = ssub.s32 %s10, 1
    %s16 = ssub.s32 %s10, 2
    %s23 = sadd.s32 1, %s18
    %p24 = scmp.ge.s32.totalorder %s23, 1
    %s25 = scalar_select %p24, 0, %s23
    %s26 = sadd.s32 1, %s17
    %s27 = scalar_select %p24, %s26, %s17
    %p28 = scmp.ge.s32.totalorder %s27, 2
    %s29 = scalar_select %p28, 0, %s27
    %s30 = ssub.s32 %s17, %s29
    %p31 = scmp.eq.s32.totalorder %s30, 0
    %s33 = sadd.s32 %s32, 1
    %s34 = scalar_select %p31, %s32, %s33
    %p37 = pneg %p31
    %p38 = scmp.eq.s32.totalorder %s10, 1
    %p39 = por %p37, %p38
    %p40 = scmp.ne.s32.totalorder %s32, %s35
    %p41 = scmp.eq.s32.totalorder %s10, 0
    %p42 = por %p40, %p41
    %p43 = scmp.ne.s32.totalorder %s32, %s35
    %p44 = scmp.eq.s32.totalorder %s15, 1
    %p45 = por %p43, %p44
    %p46 = scmp.ne.s32.totalorder %s35, %s36
    %p47 = scmp.eq.s32.totalorder %s15, 0
    %p48 = por %p46, %p47
    %p49 = scmp.ne.s32.totalorder %s35, %s36
    %p50 = scmp.eq.s32.totalorder %s16, 1
    %p51 = por %p49, %p50
    %p53 = scmp.ne.s32.totalorder %s36, %s52
    %p54 = scmp.eq.s32.totalorder %s16, 0
    %p55 = por %p53, %p54
    %s57 = sadd.s32 %s56, 1
    %p60 = scmp.eq.s32.totalorder %s10, 1
    %p61 = scmp.ne.s32.totalorder %s56, %s58
    %p62 = scmp.eq.s32.totalorder %s10, 0
    %p63 = por %p61, %p62
    %p64 = scmp.ne.s32.totalorder %s56, %s58
    %p65 = scmp.eq.s32.totalorder %s15, 1
    %p66 = por %p64, %p65
    %p67 = scmp.ne.s32.totalorder %s58, %s59
    %p68 = scmp.eq.s32.totalorder %s15, 0
    %p69 = por %p67, %p68
    %p70 = scmp.ne.s32.totalorder %s58, %s59
    %p71 = scmp.eq.s32.totalorder %s16, 1
    %p72 = por %p70, %p71
    %p74 = scmp.ne.s32.totalorder %s59, %s73
    %p75 = scmp.eq.s32.totalorder %s16, 0
    %p76 = por %p74, %p75
    %s78 = sadd.s32 %s77, 1
    %p81 = scmp.eq.s32.totalorder %s10, 1
    %p82 = scmp.ne.s32.totalorder %s77, %s79
    %p83 = scmp.eq.s32.totalorder %s10, 0
    %p84 = por %p82, %p83
    %p85 = scmp.ne.s32.totalorder %s77, %s79
    %p86 = scmp.eq.s32.totalorder %s15, 1
    %p87 = por %p85, %p86
    %p88 = scmp.ne.s32.totalorder %s79, %s80
    %p89 = scmp.eq.s32.totalorder %s15, 0
    %p90 = por %p88, %p89
    %p91 = scmp.ne.s32.totalorder %s79, %s80
    %p92 = scmp.eq.s32.totalorder %s16, 1
    %p93 = por %p91, %p92
    %p95 = scmp.ne.s32.totalorder %s80, %s94
    %p96 = scmp.eq.s32.totalorder %s16, 0
    %p97 = por %p95, %p96
    %s98 = sadd.s32 %s17, %s18
    %s99 = sadd.s32 %s29, %s25
    %s100 = ssub.s32 %s98, %s99
    %p101 = scmp.eq.s32.totalorder %s100, 0
    %s103 = sadd.s32 %s102, 1
    %s104 = scalar_select %p101, %s102, %s103
    %p107 = pneg %p101
    %p108 = scmp.eq.s32.totalorder %s10, 1
    %p109 = por %p107, %p108
    %p110 = scmp.ne.s32.totalorder %s102, %s105
    %p111 = scmp.eq.s32.totalorder %s10, 0
    %p112 = por %p110, %p111
    %p113 = scmp.ne.s32.totalorder %s102, %s105
    %p114 = scmp.eq.s32.totalorder %s15, 1
    %p115 = por %p113, %p114
    %p116 = scmp.ne.s32.totalorder %s105, %s106
    %p117 = scmp.eq.s32.totalorder %s15, 0
    %p118 = por %p116, %p117
    %p119 = scmp.ne.s32.totalorder %s105, %s106
    %p120 = scmp.eq.s32.totalorder %s16, 1
    %p121 = por %p119, %p120
    %p123 = scmp.ne.s32.totalorder %s106, %s122
    %p124 = scmp.eq.s32.totalorder %s16, 0
    %p125 = por %p123, %p124
    %s126 = sadd.s32 %s17, %s18
    %s127 = sadd.s32 %s29, %s25
    %s128 = ssub.s32 %s126, %s127
    %p129 = scmp.eq.s32.totalorder %s128, 0
    %s131 = sadd.s32 %s130, 1
    %s132 = scalar_select %p129, %s130, %s131
    %p135 = pneg %p129
    %p136 = scmp.eq.s32.totalorder %s10, 1
    %p137 = por %p135, %p136
    %p138 = scmp.ne.s32.totalorder %s130, %s133
    %p139 = scmp.eq.s32.totalorder %s10, 0
    %p140 = por %p138, %p139
    %p141 = scmp.ne.s32.totalorder %s130, %s133
    %p142 = scmp.eq.s32.totalorder %s15, 1
    %p143 = por %p141, %p142
    %p144 = scmp.ne.s32.totalorder %s133, %s134
    %p145 = scmp.eq.s32.totalorder %s15, 0
    %p146 = por %p144, %p145
    %p147 = scmp.ne.s32.totalorder %s133, %s134
    %p148 = scmp.eq.s32.totalorder %s16, 1
    %p149 = por %p147, %p148
    %p151 = scmp.ne.s32.totalorder %s134, %s150
    %p152 = scmp.eq.s32.totalorder %s16, 0
    %p153 = por %p151, %p152
    %p154 = scmp.le.s32.totalorder 1, %s10
    %p155 = scmp.lt.s32.totalorder %s10, 3
    %p156 = pnand %p154, %p155
    %p157 = pneg %p156
    // Predicated region
    $region9: #{basic_block_forward.5} parent=5 // pred_check
      _
    $region10: #{basic_block_forward.5} parent=5 // pred_check_branch
      %159 = sbr.rel (%p156) target = $region12
    $region11: #{basic_block_forward.5} parent=5 // pred_region
      %s160 = ssub.s32 %s10, 1
      // Predicated region
      $region13: #{basic_block_forward.5} parent=11 // pred_check
        %p161 = pneg %p69
      $region14: #{basic_block_forward.5} parent=11 // pred_check_branch
        %163 = sbr.rel (%p161) target = $region16
      $region15: #{basic_block_forward.5} parent=11 // pred_region
        _
      $region16: #{basic_block_forward.5} parent=11 // pred_fallthru
        _
      // Predicated region
      $region17: #{basic_block_forward.5} parent=11 // pred_check
        %p164 = pneg %p90
      $region18: #{basic_block_forward.5} parent=11 // pred_check_branch
        %166 = sbr.rel (%p164) target = $region20
      $region19: #{basic_block_forward.5} parent=11 // pred_region
        _
      $region20: #{basic_block_forward.5} parent=11 // pred_fallthru
        _
    $region12: #{basic_block_forward.5} parent=5 // pred_fallthru
      _
    %p167 = scmp.lt.s32.totalorder %s10, 2
    // Predicated region
    $region21: #{basic_block_forward.5} parent=5 // pred_check
      %p168 = pneg %p167
    $region22: #{basic_block_forward.5} parent=5 // pred_check_branch
      %170 = sbr.rel (%p168) target = $region24
    $region23: #{basic_block_forward.5} parent=5 // pred_region
      // Predicated region
      $region25: #{basic_block_forward.5} parent=23 // pred_check
        %p171 = pneg %p42
      $region26: #{basic_block_forward.5} parent=23 // pred_check_branch
        %173 = sbr.rel (%p171) target = $region28
      $region27: #{basic_block_forward.5} parent=23 // pred_region
        %p174 = scmp.lt.s32.totalorder %s17, 1
        %s175 = scalar_select %p174, %s17, 1
        %s176 = smul.addr %s175, 20
        %s177 = smul.addr %s176, 4
        %s178 = scalar_lea.vmem %s0, %s177
      $region28: #{basic_block_forward.5} parent=23 // pred_fallthru
        _
      // Predicated region
      $region29: #{basic_block_forward.5} parent=23 // pred_check
        %p179 = pneg %p112
      $region30: #{basic_block_forward.5} parent=23 // pred_check_branch
        %181 = sbr.rel (%p179) target = $region32
      $region31: #{basic_block_forward.5} parent=23 // pred_region
        %s182 = sadd.s32 %s17, %s18
        %s183 = smul.u32 8, %s182
        %p184 = scmp.lt.s32.totalorder %s183, 15
        %s185 = scalar_select %p184, %s183, 15
        %s186 = smul.addr %s185, 4
        %s187 = scalar_lea.vmem %s3, %s186
        %s188 = sadd.s32 %s17, %s18
        %s189 = smul.u32 8, %s188
      $region32: #{basic_block_forward.5} parent=23 // pred_fallthru
        _
    $region24: #{basic_block_forward.5} parent=5 // pred_fallthru
      _
    %p190 = scmp.le.s32.totalorder 1, %s10
    %p191 = scmp.lt.s32.totalorder %s10, 3
    %p192 = pnand %p190, %p191
    %p193 = pneg %p192
    // Predicated region
    $region33: #{basic_block_forward.5} parent=5 // pred_check
      _
    $region34: #{basic_block_forward.5} parent=5 // pred_check_branch
      %195 = sbr.rel (%p192) target = $region36
    $region35: #{basic_block_forward.5} parent=5 // pred_region
      %s196 = ssub.s32 %s10, 1
      %p197 = scmp.lt.s32.totalorder %s19, 1
      %s198 = scalar_select %p197, %s19, 1
      %s199 = smul.addr %s198, 20
      %s200 = smul.addr %s199, 4
      %s201 = scalar_lea.vmem %s0, %s200
      %p202 = pneg %p48
      %p203 = pneg %p45
      %p204 = pneg %p69
      %p205 = pneg %p66
      %p206 = pneg %p90
      %p207 = pneg %p87
      %s208 = sadd.s32 %s19, %s20
      %s209 = smul.u32 8, %s208
      %p210 = scmp.lt.s32.totalorder %s209, 15
      %s211 = scalar_select %p210, %s209, 15
      %s212 = smul.addr %s211, 4
      %s213 = scalar_lea.vmem %s3, %s212
      %p214 = pneg %p118
      %p215 = pneg %p115
      %p216 = pneg %p146
      %p217 = pneg %p143
      %s218 = sadd.s32 %s19, %s20
      %s219 = smul.u32 8, %s218
      %p220 = scmp.lt.s32.totalorder %s219, 15
      %s221 = scalar_select %p220, %s219, 15
      %s222 = smul.addr %s221, 8
      %s223 = scalar_lea.vmem %s4, %s222
      %p224 = scmp.lt.s32.totalorder %s19, 1
      %s225 = scalar_select %p224, %s19, 1
      %s226 = smul.addr %s225, 20
      %s227 = smul.addr %s226, 4
      %s228 = scalar_lea.vmem %s0, %s227
      %s229 = sadd.s32 %s19, %s20
      %s230 = smul.u32 8, %s229
      %p231 = scmp.lt.s32.totalorder %s230, 15
      %s232 = scalar_select %p231, %s230, 15
      %s233 = smul.addr %s232, 4
      %s234 = scalar_lea.vmem %s3, %s233
      %s235 = sadd.s32 %s19, %s20
      %s236 = smul.u32 8, %s235
      %s237 = sadd.s32 %s19, %s20
      %s238 = smul.u32 8, %s237
      %p239 = scmp.lt.s32.totalorder %s238, 15
      %s240 = scalar_select %p239, %s238, 15
      %s241 = smul.addr %s240, 8
      %s242 = scalar_lea.vmem %s4, %s241
      %s243 = sadd.s32 %s19, %s20
      %s244 = smul.u32 8, %s243
      %s246 = smul.u32 %s20, 8
      %v247 = vld [vmem:[%s2] sm:$0x1]
      %v249 = vlaneseq
      %v250 = vshrl.u32 %v249, 7
      %v251 = vsub.s32 0, %v250
      %v252 = vrot.slane %v247, %v251
      %s254 = smul.u32 %s246, 2
      %s255 = smul.addr %s254, 4
      %s256 = scalar_lea.vmem %s228, %s255
      %v257 = vld [vmem:[%s256] sm:$0xf]
      %v258 = vld [vmem:[%s256 + $0x8] sm:$0xf]
      %v259 = vld [vmem:[%s256 + $0x10] sm:$0xf]
      %v260 = vld [vmem:[%s256 + $0x18] sm:$0xf]
      %v261 = vld [vmem:[%s256 + $0x20] sm:$0xf]
      %v262 = vld [vmem:[%s256 + $0x28] sm:$0xf]
      %v263 = vld [vmem:[%s256 + $0x30] sm:$0xf]
      %v264 = vld [vmem:[%s256 + $0x38] sm:$0xf]
      %v265 = vld [vmem:[%s256 + $0x4] sm:$0x1]
      %v266 = vld [vmem:[%s256 + $0xc] sm:$0x1]
      %v267 = vld [vmem:[%s256 + $0x14] sm:$0x1]
      %v268 = vld [vmem:[%s256 + $0x1c] sm:$0x1]
      %v269 = vld [vmem:[%s256 + $0x24] sm:$0x1]
      %v270 = vld [vmem:[%s256 + $0x2c] sm:$0x1]
      %v271 = vld [vmem:[%s256 + $0x34] sm:$0x1]
      %v272 = vld [vmem:[%s256 + $0x3c] sm:$0x1]
      %vm273 = vsmask.f32 3328
      %vm274 = vsmask.f32 7440
      %vm275 = vmor %vm273, %vm274
      %v277 = vshrl.u32 %v257, 16
      %v279 = vrot.slane %v277, 4
      %v280 = vshll.u32 %v257, 16
      %v282 = vrot.slane %v280, 5
      %v283 = vor.u32 %v279, %v282
      %v284 = vrot.slane %v283, 4
      %v286 = vshll.u32 %v265, 16
      %v288 = vrot.slane %v286, 5
      %v289 = vsel %vm275, %v284, %v288
      %v291 = vshrl.u32 %v258, 16
      %v293 = vrot.slane %v291, 4
      %v294 = vshll.u32 %v258, 16
      %v296 = vrot.slane %v294, 5
      %v297 = vor.u32 %v293, %v296
      %v298 = vrot.slane %v297, 4
      %v300 = vshll.u32 %v266, 16
      %v302 = vrot.slane %v300, 5
      %v303 = vsel %vm275, %v298, %v302
      %v305 = vshrl.u32 %v259, 16
      %v307 = vrot.slane %v305, 4
      %v308 = vshll.u32 %v259, 16
      %v310 = vrot.slane %v308, 5
      %v311 = vor.u32 %v307, %v310
      %v312 = vrot.slane %v311, 4
      %v314 = vshll.u32 %v267, 16
      %v316 = vrot.slane %v314, 5
      %v317 = vsel %vm275, %v312, %v316
      %v319 = vshrl.u32 %v260, 16
      %v321 = vrot.slane %v319, 4
      %v322 = vshll.u32 %v260, 16
      %v324 = vrot.slane %v322, 5
      %v325 = vor.u32 %v321, %v324
      %v326 = vrot.slane %v325, 4
      %v328 = vshll.u32 %v268, 16
      %v330 = vrot.slane %v328, 5
      %v331 = vsel %vm275, %v326, %v330
      %v333 = vshrl.u32 %v261, 16
      %v335 = vrot.slane %v333, 4
      %v336 = vshll.u32 %v261, 16
      %v338 = vrot.slane %v336, 5
      %v339 = vor.u32 %v335, %v338
      %v340 = vrot.slane %v339, 4
      %v342 = vshll.u32 %v269, 16
      %v344 = vrot.slane %v342, 5
      %v345 = vsel %vm275, %v340, %v344
      %v347 = vshrl.u32 %v262, 16
      %v349 = vrot.slane %v347, 4
      %v350 = vshll.u32 %v262, 16
      %v352 = vrot.slane %v350, 5
      %v353 = vor.u32 %v349, %v352
      %v354 = vrot.slane %v353, 4
      %v356 = vshll.u32 %v270, 16
      %v358 = vrot.slane %v356, 5
      %v359 = vsel %vm275, %v354, %v358
      %v361 = vshrl.u32 %v263, 16
      %v363 = vrot.slane %v361, 4
      %v364 = vshll.u32 %v263, 16
      %v366 = vrot.slane %v364, 5
      %v367 = vor.u32 %v363, %v366
      %v368 = vrot.slane %v367, 4
      %v370 = vshll.u32 %v271, 16
      %v372 = vrot.slane %v370, 5
      %v373 = vsel %vm275, %v368, %v372
      %v375 = vshrl.u32 %v264, 16
      %v377 = vrot.slane %v375, 4
      %v378 = vshll.u32 %v264, 16
      %v380 = vrot.slane %v378, 5
      %v381 = vor.u32 %v377, %v380
      %v382 = vrot.slane %v381, 4
      %v384 = vshll.u32 %v272, 16
      %v386 = vrot.slane %v384, 5
      %v387 = vsel %vm275, %v382, %v386
      %v388 = vld [vmem:[%s256] sm:$0xe]
      %v389 = vld [vmem:[%s256 + $0x8] sm:$0xe]
      %v390 = vld [vmem:[%s256 + $0x10] sm:$0xe]
      %v391 = vld [vmem:[%s256 + $0x18] sm:$0xe]
      %v392 = vld [vmem:[%s256 + $0x20] sm:$0xe]
      %v393 = vld [vmem:[%s256 + $0x28] sm:$0xe]
      %v394 = vld [vmem:[%s256 + $0x30] sm:$0xe]
      %v395 = vld [vmem:[%s256 + $0x38] sm:$0xe]
      %vm412 = vcmask 1042432
      %vm413 = vcmask 1046532
      %vm414 = vmor %vm412, %vm413
      %v415 = vrot.slane %v388, 5
      %v416 = vrot.slane %v415, 4
      %v417 = vrot.slane %v265, 5
      %v418 = vsel %vm414, %v416, %v417
      %v419 = vrot.slane %v389, 5
      %v420 = vrot.slane %v419, 4
      %v421 = vrot.slane %v266, 5
      %v422 = vsel %vm414, %v420, %v421
      %v423 = vrot.slane %v390, 5
      %v424 = vrot.slane %v423, 4
      %v425 = vrot.slane %v267, 5
      %v426 = vsel %vm414, %v424, %v425
      %v427 = vrot.slane %v391, 5
      %v428 = vrot.slane %v427, 4
      %v429 = vrot.slane %v268, 5
      %v430 = vsel %vm414, %v428, %v429
      %v431 = vrot.slane %v392, 5
      %v432 = vrot.slane %v431, 4
      %v433 = vrot.slane %v269, 5
      %v434 = vsel %vm414, %v432, %v433
      %v435 = vrot.slane %v393, 5
      %v436 = vrot.slane %v435, 4
      %v437 = vrot.slane %v270, 5
      %v438 = vsel %vm414, %v436, %v437
      %v439 = vrot.slane %v394, 5
      %v440 = vrot.slane %v439, 4
      %v441 = vrot.slane %v271, 5
      %v442 = vsel %vm414, %v440, %v441
      %v443 = vrot.slane %v395, 5
      %v444 = vrot.slane %v443, 4
      %v445 = vrot.slane %v272, 5
      %v446 = vsel %vm414, %v444, %v445
      %v455 = vunpack.c.l.b16 %v257
      %v456 = vunpack.c.l.b16 %v258
      %v457 = vunpack.c.l.b16 %v259
      %v458 = vunpack.c.l.b16 %v260
      %v459 = vunpack.c.l.b16 %v261
      %v460 = vunpack.c.l.b16 %v262
      %v461 = vunpack.c.l.b16 %v263
      %v462 = vunpack.c.l.b16 %v264
      %v463 = vpack.c.b16 %v456, %v455
      %v464 = vpack.c.b16 %v458, %v457
      %v465 = vpack.c.b16 %v460, %v459
      %v466 = vpack.c.b16 %v462, %v461
      %v471 = vunpack.c.l.b16 %v289
      %v472 = vunpack.c.l.b16 %v303
      %v473 = vunpack.c.l.b16 %v317
      %v474 = vunpack.c.l.b16 %v331
      %v475 = vunpack.c.l.b16 %v345
      %v476 = vunpack.c.l.b16 %v359
      %v477 = vunpack.c.l.b16 %v373
      %v478 = vunpack.c.l.b16 %v387
      %v479 = vpack.c.b16 %v472, %v471
      %v480 = vpack.c.b16 %v474, %v473
      %v481 = vpack.c.b16 %v476, %v475
      %v482 = vpack.c.b16 %v478, %v477
      %v487 = vunpack.c.l.b16 %v418
      %v488 = vunpack.c.l.b16 %v422
      %v489 = vunpack.c.l.b16 %v426
      %v490 = vunpack.c.l.b16 %v430
      %v491 = vunpack.c.l.b16 %v434
      %v492 = vunpack.c.l.b16 %v438
      %v493 = vunpack.c.l.b16 %v442
      %v494 = vunpack.c.l.b16 %v446
      %v495 = vpack.c.b16 %v488, %v487
      %v496 = vpack.c.b16 %v490, %v489
      %v497 = vpack.c.b16 %v492, %v491
      %v498 = vpack.c.b16 %v494, %v493
      %v503 = vld [vmem:[%s1] sm:$0xf]
      %v504 = vld [vmem:[%s1 + $0x4] sm:$0xf]
      %v505 = vld [vmem:[%s1 + $0x8] sm:$0xf]
      %v506 = vld [vmem:[%s1 + $0xc] sm:$0xf]
      %v507 = vld [vmem:[%s1 + $0x10] sm:$0xf]
      %v508 = vld [vmem:[%s1 + $0x14] sm:$0xf]
      %v509 = vld [vmem:[%s1 + $0x18] sm:$0xf]
      %v510 = vld [vmem:[%s1 + $0x1c] sm:$0xf]
      %v511 = vld [vmem:[%s1 + $0x20] sm:$0xf]
      %v512 = vld [vmem:[%s1 + $0x24] sm:$0xf]
      %v513 = vld [vmem:[%s1 + $0x28] sm:$0xf]
      %v514 = vld [vmem:[%s1 + $0x2c] sm:$0xf]
      %v515 = vld [vmem:[%s1 + $0x30] sm:$0xf]
      %v516 = vld [vmem:[%s1 + $0x34] sm:$0xf]
      %v517 = vld [vmem:[%s1 + $0x38] sm:$0xf]
      %v518 = vld [vmem:[%s1 + $0x3c] sm:$0xf]
      %v519 = vld [vmem:[%s1 + $0x40] sm:$0xf]
      %v520 = vld [vmem:[%s1 + $0x44] sm:$0xf]
      %v521 = vld [vmem:[%s1 + $0x48] sm:$0xf]
      %v522 = vld [vmem:[%s1 + $0x4c] sm:$0xf]
      %v523 = vld [vmem:[%s1 + $0x50] sm:$0xf]
      %v524 = vld [vmem:[%s1 + $0x54] sm:$0xf]
      %v525 = vld [vmem:[%s1 + $0x58] sm:$0xf]
      %v526 = vld [vmem:[%s1 + $0x5c] sm:$0xf]
      %v527 = vld [vmem:[%s1 + $0x60] sm:$0xf]
      %v528 = vld [vmem:[%s1 + $0x64] sm:$0xf]
      %v529 = vld [vmem:[%s1 + $0x68] sm:$0xf]
      %v530 = vld [vmem:[%s1 + $0x6c] sm:$0xf]
      %v531 = vld [vmem:[%s1 + $0x70] sm:$0xf]
      %v532 = vld [vmem:[%s1 + $0x74] sm:$0xf]
      %v533 = vld [vmem:[%s1 + $0x78] sm:$0xf]
      %v534 = vld [vmem:[%s1 + $0x7c] sm:$0xf]
      %v535 = vld [vmem:[%s1 + $0x80] sm:$0xf]
      %v536 = vld [vmem:[%s1 + $0x84] sm:$0xf]
      %v537 = vld [vmem:[%s1 + $0x88] sm:$0xf]
      %v538 = vld [vmem:[%s1 + $0x8c] sm:$0xf]
      %v539 = vld [vmem:[%s1 + $0x90] sm:$0xf]
      %v540 = vld [vmem:[%s1 + $0x94] sm:$0xf]
      %v541 = vld [vmem:[%s1 + $0x98] sm:$0xf]
      %v542 = vld [vmem:[%s1 + $0x9c] sm:$0xf]
      %v543 = vld [vmem:[%s1 + $0xa0] sm:$0xf]
      %v544 = vld [vmem:[%s1 + $0xa4] sm:$0xf]
      %v545 = vld [vmem:[%s1 + $0xa8] sm:$0xf]
      %v546 = vld [vmem:[%s1 + $0xac] sm:$0xf]
      %v547 = vld [vmem:[%s1 + $0xb0] sm:$0xf]
      %v548 = vld [vmem:[%s1 + $0xb4] sm:$0xf]
      %v549 = vld [vmem:[%s1 + $0xb8] sm:$0xf]
      %v550 = vld [vmem:[%s1 + $0xbc] sm:$0xf]
      %v599 = vunpack.c.l.b16 %v503
      %v600 = vunpack.c.l.b16 %v504
      %v601 = vunpack.c.l.b16 %v505
      %v602 = vunpack.c.l.b16 %v506
      %v603 = vunpack.c.l.b16 %v507
      %v604 = vunpack.c.l.b16 %v508
      %v605 = vunpack.c.l.b16 %v509
      %v606 = vunpack.c.l.b16 %v510
      %v607 = vunpack.c.l.b16 %v511
      %v608 = vunpack.c.l.b16 %v512
      %v609 = vunpack.c.l.b16 %v513
      %v610 = vunpack.c.l.b16 %v514
      %v611 = vunpack.c.l.b16 %v515
      %v612 = vunpack.c.l.b16 %v516
      %v613 = vunpack.c.l.b16 %v517
      %v614 = vunpack.c.l.b16 %v518
      %v615 = vunpack.c.l.b16 %v519
      %v616 = vunpack.c.l.b16 %v520
      %v617 = vunpack.c.l.b16 %v521
      %v618 = vunpack.c.l.b16 %v522
      %v619 = vunpack.c.l.b16 %v523
      %v620 = vunpack.c.l.b16 %v524
      %v621 = vunpack.c.l.b16 %v525
      %v622 = vunpack.c.l.b16 %v526
      %v623 = vunpack.c.l.b16 %v527
      %v624 = vunpack.c.l.b16 %v528
      %v625 = vunpack.c.l.b16 %v529
      %v626 = vunpack.c.l.b16 %v530
      %v627 = vunpack.c.l.b16 %v531
      %v628 = vunpack.c.l.b16 %v532
      %v629 = vunpack.c.l.b16 %v533
      %v630 = vunpack.c.l.b16 %v534
      %v631 = vunpack.c.l.b16 %v535
      %v632 = vunpack.c.l.b16 %v536
      %v633 = vunpack.c.l.b16 %v537
      %v634 = vunpack.c.l.b16 %v538
      %v635 = vunpack.c.l.b16 %v539
      %v636 = vunpack.c.l.b16 %v540
      %v637 = vunpack.c.l.b16 %v541
      %v638 = vunpack.c.l.b16 %v542
      %v639 = vunpack.c.l.b16 %v543
      %v640 = vunpack.c.l.b16 %v544
      %v641 = vunpack.c.l.b16 %v545
      %v642 = vunpack.c.l.b16 %v546
      %v643 = vunpack.c.l.b16 %v547
      %v644 = vunpack.c.l.b16 %v548
      %v645 = vunpack.c.l.b16 %v549
      %v646 = vunpack.c.l.b16 %v550
      %v647 = vpack.c.b16 %v600, %v599
      %v648 = vpack.c.b16 %v602, %v601
      %v649 = vpack.c.b16 %v604, %v603
      %v650 = vpack.c.b16 %v606, %v605
      %v651 = vpack.c.b16 %v608, %v607
      %v652 = vpack.c.b16 %v610, %v609
      %v653 = vpack.c.b16 %v612, %v611
      %v654 = vpack.c.b16 %v614, %v613
      %v655 = vpack.c.b16 %v616, %v615
      %v656 = vpack.c.b16 %v618, %v617
      %v657 = vpack.c.b16 %v620, %v619
      %v658 = vpack.c.b16 %v622, %v621
      %v659 = vpack.c.b16 %v624, %v623
      %v660 = vpack.c.b16 %v626, %v625
      %v661 = vpack.c.b16 %v628, %v627
      %v662 = vpack.c.b16 %v630, %v629
      %v663 = vpack.c.b16 %v632, %v631
      %v664 = vpack.c.b16 %v634, %v633
      %v665 = vpack.c.b16 %v636, %v635
      %v666 = vpack.c.b16 %v638, %v637
      %v667 = vpack.c.b16 %v640, %v639
      %v668 = vpack.c.b16 %v642, %v641
      %v669 = vpack.c.b16 %v644, %v643
      %v670 = vpack.c.b16 %v646, %v645
      %695 = vmatprep.subr.bf16.mxu0 0
      %696 = vmatpush1.bf16.msra.mxu0 %v647
      %697 = vmatprep.subr.bf16.mxu0 0
      %698 = vmatpush1.bf16.msra.mxu0 %v648
      %699 = vmatprep.subr.bf16.mxu0 0
      %700 = vmatpush1.bf16.msra.mxu0 %v649
      %701 = vmatprep.subr.bf16.mxu0 0
      %702 = vmatpush1.bf16.msra.mxu0 %v650
      %703 = vmatprep.subr.bf16.mxu0 0
      %704 = vmatpush1.bf16.msra.mxu0 %v651
      %705 = vmatprep.subr.bf16.mxu0 0
      %706 = vmatpush1.bf16.msra.mxu0 %v652
      %707 = vmatprep.subr.bf16.mxu0 0
      %708 = vmatpush1.bf16.msra.mxu0 %v653
      %709 = vmatprep.subr.bf16.mxu0 0
      %710 = vmatpush1.bf16.msra.mxu0 %v654
      %711 = vmatprep.subr.bf16.mxu0 0
      %712 = vmatpush1.bf16.msra.mxu0 %v655
      %713 = vmatprep.subr.bf16.mxu0 0
      %714 = vmatpush1.bf16.msra.mxu0 %v656
      %715 = vmatprep.subr.bf16.mxu0 0
      %716 = vmatpush1.bf16.msra.mxu0 %v657
      %717 = vmatprep.subr.bf16.mxu0 0
      %718 = vmatpush1.bf16.msra.mxu0 %v658
      %719 = vmatprep.subr.bf16.mxu0 0
      %720 = vmatpush1.bf16.msra.mxu0 %v659
      %721 = vmatprep.subr.bf16.mxu0 0
      %722 = vmatpush1.bf16.msra.mxu0 %v660
      %723 = vmatprep.subr.bf16.mxu0 0
      %724 = vmatpush1.bf16.msra.mxu0 %v661
      %725 = vmatprep.subr.bf16.mxu0 0
      %726 = vmatpush1.bf16.msra.mxu0 %v662
      %727 = vmatprep.mubr.bf16.mxu0 %v479
      %728 = vmatmul.mubr.bf16.gmra.mrb[0].mxu0 %v463
      %v729 = vpop.f32.mrb[0].mxu0
      %v730 = vadd.f32 0.0, %v729
      %v731 = vpop.f32.mrb[0].mxu0
      %v732 = vpop.f32.mrb[0].mxu0
      %v733 = vadd.f32 0.0, %v732
      %v734 = vpop.f32.mrb[0].mxu0
      %735 = vmatprep.mubr.bf16.mxu0 %v480
      %736 = vmatmul.mubr.bf16.gmra.mrb[0].mxu0 %v464
      %v737 = vpop.f32.mrb[0].mxu0
      %v738 = vadd.f32 0.0, %v737
      %v739 = vpop.f32.mrb[0].mxu0
      %v740 = vpop.f32.mrb[0].mxu0
      %v741 = vadd.f32 0.0, %v740
      %v742 = vpop.f32.mrb[0].mxu0
      %743 = vmatprep.mubr.bf16.mxu0 %v481
      %744 = vmatmul.mubr.bf16.gmra.mrb[0].mxu0 %v465
      %v745 = vpop.f32.mrb[0].mxu0
      %v746 = vadd.f32 0.0, %v745
      %v747 = vpop.f32.mrb[0].mxu0
      %v748 = vpop.f32.mrb[0].mxu0
      %v749 = vadd.f32 0.0, %v748
      %v750 = vpop.f32.mrb[0].mxu0
      %751 = vmatprep.mubr.bf16.mxu0 %v482
      %752 = vmatmul.mubr.bf16.gmra.mrb[0].mxu0 %v466
      %v753 = vpop.f32.mrb[0].mxu0
      %v754 = vadd.f32 0.0, %v753
      %v755 = vpop.f32.mrb[0].mxu0
      %v756 = vpop.f32.mrb[0].mxu0
      %v757 = vadd.f32 0.0, %v756
      %v758 = vpop.f32.mrb[0].mxu0
      %759 = vdwg.mxu0
      %760 = vmatprep.subr.bf16.mxu0 0
      %761 = vmatpush1.bf16.msra.mxu0 %v663
      %762 = vmatprep.subr.bf16.mxu0 0
      %763 = vmatpush1.bf16.msra.mxu0 %v664
      %764 = vmatprep.subr.bf16.mxu0 0
      %765 = vmatpush1.bf16.msra.mxu0 %v665
      %766 = vmatprep.subr.bf16.mxu0 0
      %767 = vmatpush1.bf16.msra.mxu0 %v666
      %768 = vmatprep.subr.bf16.mxu0 0
      %769 = vmatpush1.bf16.msra.mxu0 %v667
      %770 = vmatprep.subr.bf16.mxu0 0
      %771 = vmatpush1.bf16.msra.mxu0 %v668
      %772 = vmatprep.subr.bf16.mxu0 0
      %773 = vmatpush1.bf16.msra.mxu0 %v669
      %774 = vmatprep.subr.bf16.mxu0 0
      %775 = vmatpush1.bf16.msra.mxu0 %v670
      %776 = vmatprep.subr.bf16.mxu0 0
      %777 = vmatpush1.bf16.msra.mxu0 0
      %778 = vmatprep.subr.bf16.mxu0 0
      %779 = vmatpush1.bf16.msra.mxu0 0
      %780 = vmatprep.subr.bf16.mxu0 0
      %781 = vmatpush1.bf16.msra.mxu0 0
      %782 = vmatprep.subr.bf16.mxu0 0
      %783 = vmatpush1.bf16.msra.mxu0 0
      %784 = vmatprep.subr.bf16.mxu0 0
      %785 = vmatpush1.bf16.msra.mxu0 0
      %786 = vmatprep.subr.bf16.mxu0 0
      %787 = vmatpush1.bf16.msra.mxu0 0
      %788 = vmatprep.subr.bf16.mxu0 0
      %789 = vmatpush1.bf16.msra.mxu0 0
      %790 = vmatprep.subr.bf16.mxu0 0
      %791 = vmatpush1.bf16.msra.mxu0 0
      %792 = vmatprep.mubr.bf16.mxu0 0
      %793 = vmatmul.mubr.bf16.gmra.mrb[0].mxu0 %v495
      %v794 = vpop.f32.mrb[0].mxu0
      %v795 = vadd.f32 %v730, %v794
      %v796 = vpop.f32.mrb[0].mxu0
      %v797 = vpop.f32.mrb[0].mxu0
      %v798 = vadd.f32 %v733, %v797
      %v799 = vpop.f32.mrb[0].mxu0
      %800 = vmatprep.mubr.bf16.mxu0 0
      %801 = vmatmul.mubr.bf16.gmra.mrb[0].mxu0 %v496
      %v802 = vpop.f32.mrb[0].mxu0
      %v803 = vadd.f32 %v738, %v802
      %v804 = vpop.f32.mrb[0].mxu0
      %v805 = vpop.f32.mrb[0].mxu0
      %v806 = vadd.f32 %v741, %v805
      %v807 = vpop.f32.mrb[0].mxu0
      %808 = vmatprep.mubr.bf16.mxu0 0
      %809 = vmatmul.mubr.bf16.gmra.mrb[0].mxu0 %v497
      %v810 = vpop.f32.mrb[0].mxu0
      %v811 = vadd.f32 %v746, %v810
      %v812 = vpop.f32.mrb[0].mxu0
      %v813 = vpop.f32.mrb[0].mxu0
      %v814 = vadd.f32 %v749, %v813
      %v815 = vpop.f32.mrb[0].mxu0
      %816 = vmatprep.mubr.bf16.mxu0 0
      %817 = vmatmul.mubr.bf16.gmra.mrb[0].mxu0 %v498
      %v818 = vpop.f32.mrb[0].mxu0
      %v819 = vadd.f32 %v754, %v818
      %v820 = vpop.f32.mrb[0].mxu0
      %v821 = vpop.f32.mrb[0].mxu0
      %v822 = vadd.f32 %v757, %v821
      %v823 = vpop.f32.mrb[0].mxu0
      %824 = vdwg.mxu0
      %v825 = vadd.f32 %v252, %v795
      %v826 = vadd.f32 %v252, %v798
      %v827 = vadd.f32 %v252, %v803
      %v828 = vadd.f32 %v252, %v806
      %v829 = vadd.f32 %v252, %v811
      %v830 = vadd.f32 %v252, %v814
      %v831 = vadd.f32 %v252, %v819
      %v832 = vadd.f32 %v252, %v822
      %s833 = sadd.s32 %s246, 1
      %s834 = smul.u32 %s833, 2
      %s835 = smul.addr %s834, 4
      %s836 = scalar_lea.vmem %s228, %s835
      %v837 = vld [vmem:[%s836] sm:$0xf]
      %v838 = vld [vmem:[%s836 + $0x8] sm:$0xf]
      %v839 = vld [vmem:[%s836 + $0x10] sm:$0xf]
      %v840 = vld [vmem:[%s836 + $0x18] sm:$0xf]
      %v841 = vld [vmem:[%s836 + $0x20] sm:$0xf]
      %v842 = vld [vmem:[%s836 + $0x28] sm:$0xf]
      %v843 = vld [vmem:[%s836 + $0x30] sm:$0xf]
      %v844 = vld [vmem:[%s836 + $0x38] sm:$0xf]
      %v845 = vld [vmem:[%s836 + $0x4] sm:$0x1]
      %v846 = vld [vmem:[%s836 + $0xc] sm:$0x1]
      %v847 = vld [vmem:[%s836 + $0x14] sm:$0x1]
      %v848 = vld [vmem:[%s836 + $0x1c] sm:$0x1]
      %v849 = vld [vmem:[%s836 + $0x24] sm:$0x1]
      %v850 = vld [vmem:[%s836 + $0x2c] sm:$0x1]
      %v851 = vld [vmem:[%s836 + $0x34] sm:$0x1]
      %v852 = vld [vmem:[%s836 + $0x3c] sm:$0x1]
      %v854 = vshrl.u32 %v837, 16
      %v856 = vrot.slane %v854, 4
      %v857 = vshll.u32 %v837, 16
      %v859 = vrot.slane %v857, 5
      %v860 = vor.u32 %v856, %v859
      %v861 = vrot.slane %v860, 4
      %v863 = vshll.u32 %v845, 16
      %v865 = vrot.slane %v863, 5
      %v866 = vsel %vm275, %v861, %v865
      %v868 = vshrl.u32 %v838, 16
      %v870 = vrot.slane %v868, 4
      %v871 = vshll.u32 %v838, 16
      %v873 = vrot.slane %v871, 5
      %v874 = vor.u32 %v870, %v873
      %v875 = vrot.slane %v874, 4
      %v877 = vshll.u32 %v846, 16
      %v879 = vrot.slane %v877, 5
      %v880 = vsel %vm275, %v875, %v879
      %v882 = vshrl.u32 %v839, 16
      %v884 = vrot.slane %v882, 4
      %v885 = vshll.u32 %v839, 16
      %v887 = vrot.slane %v885, 5
      %v888 = vor.u32 %v884, %v887
      %v889 = vrot.slane %v888, 4
      %v891 = vshll.u32 %v847, 16
      %v893 = vrot.slane %v891, 5
      %v894 = vsel %vm275, %v889, %v893
      %v896 = vshrl.u32 %v840, 16
      %v898 = vrot.slane %v896, 4
      %v899 = vshll.u32 %v840, 16
      %v901 = vrot.slane %v899, 5
      %v902 = vor.u32 %v898, %v901
      %v903 = vrot.slane %v902, 4
      %v905 = vshll.u32 %v848, 16
      %v907 = vrot.slane %v905, 5
      %v908 = vsel %vm275, %v903, %v907
      %v910 = vshrl.u32 %v841, 16
      %v912 = vrot.slane %v910, 4
      %v913 = vshll.u32 %v841, 16
      %v915 = vrot.slane %v913, 5
      %v916 = vor.u32 %v912, %v915
      %v917 = vrot.slane %v916, 4
      %v919 = vshll.u32 %v849, 16
      %v921 = vrot.slane %v919, 5
      %v922 = vsel %vm275, %v917, %v921
      %v924 = vshrl.u32 %v842, 16
      %v926 = vrot.slane %v924, 4
      %v927 = vshll.u32 %v842, 16
      %v929 = vrot.slane %v927, 5
      %v930 = vor.u32 %v926, %v929
      %v931 = vrot.slane %v930, 4
      %v933 = vshll.u32 %v850, 16
      %v935 = vrot.slane %v933, 5
      %v936 = vsel %vm275, %v931, %v935
      %v938 = vshrl.u32 %v843, 16
      %v940 = vrot.slane %v938, 4
      %v941 = vshll.u32 %v843, 16
      %v943 = vrot.slane %v941, 5
      %v944 = vor.u32 %v940, %v943
      %v945 = vrot.slane %v944, 4
      %v947 = vshll.u32 %v851, 16
      %v949 = vrot.slane %v947, 5
      %v950 = vsel %vm275, %v945, %v949
      %v952 = vshrl.u32 %v844, 16
      %v954 = vrot.slane %v952, 4
      %v955 = vshll.u32 %v844, 16
      %v957 = vrot.slane %v955, 5
      %v958 = vor.u32 %v954, %v957
      %v959 = vrot.slane %v958, 4
      %v961 = vshll.u32 %v852, 16
      %v963 = vrot.slane %v961, 5
      %v964 = vsel %vm275, %v959, %v963
      %v965 = vld [vmem:[%s836] sm:$0xe]
      %v966 = vld [vmem:[%s836 + $0x8] sm:$0xe]
      %v967 = vld [vmem:[%s836 + $0x10] sm:$0xe]
      %v968 = vld [vmem:[%s836 + $0x18] sm:$0xe]
      %v969 = vld [vmem:[%s836 + $0x20] sm:$0xe]
      %v970 = vld [vmem:[%s836 + $0x28] sm:$0xe]
      %v971 = vld [vmem:[%s836 + $0x30] sm:$0xe]
      %v972 = vld [vmem:[%s836 + $0x38] sm:$0xe]
      %v989 = vrot.slane %v965, 5
      %v990 = vrot.slane %v989, 4
      %v991 = vrot.slane %v845, 5
      %v992 = vsel %vm414, %v990, %v991
      %v993 = vrot.slane %v966, 5
      %v994 = vrot.slane %v993, 4
      %v995 = vrot.slane %v846, 5
      %v996 = vsel %vm414, %v994, %v995
      %v997 = vrot.slane %v967, 5
      %v998 = vrot.slane %v997, 4
      %v999 = vrot.slane %v847, 5
      %v1000 = vsel %vm414, %v998, %v999
      %v1001 = vrot.slane %v968, 5
      %v1002 = vrot.slane %v1001, 4
      %v1003 = vrot.slane %v848, 5
      %v1004 = vsel %vm414, %v1002, %v1003
      %v1005 = vrot.slane %v969, 5
      %v1006 = vrot.slane %v1005, 4
      %v1007 = vrot.slane %v849, 5
      %v1008 = vsel %vm414, %v1006, %v1007
      %v1009 = vrot.slane %v970, 5
      %v1010 = vrot.slane %v1009, 4
      %v1011 = vrot.slane %v850, 5
      %v1012 = vsel %vm414, %v1010, %v1011
      %v1013 = vrot.slane %v971, 5
      %v1014 = vrot.slane %v1013, 4
      %v1015 = vrot.slane %v851, 5
      %v1016 = vsel %vm414, %v1014, %v1015
      %v1017 = vrot.slane %v972, 5
      %v1018 = vrot.slane %v1017, 4
      %v1019 = vrot.slane %v852, 5
      %v1020 = vsel %vm414, %v1018, %v1019
      %v1029 = vunpack.c.l.b16 %v837
      %v1030 = vunpack.c.l.b16 %v838
      %v1031 = vunpack.c.l.b16 %v839
      %v1032 = vunpack.c.l.b16 %v840
      %v1033 = vunpack.c.l.b16 %v841
      %v1034 = vunpack.c.l.b16 %v842
      %v1035 = vunpack.c.l.b16 %v843
      %v1036 = vunpack.c.l.b16 %v844
      %v1037 = vpack.c.b16 %v1030, %v1029
      %v1038 = vpack.c.b16 %v1032, %v1031
      %v1039 = vpack.c.b16 %v1034, %v1033
      %v1040 = vpack.c.b16 %v1036, %v1035
      %v1045 = vunpack.c.l.b16 %v866
      %v1046 = vunpack.c.l.b16 %v880
      %v1047 = vunpack.c.l.b16 %v894
      %v1048 = vunpack.c.l.b16 %v908
      %v1049 = vunpack.c.l.b16 %v922
      %v1050 = vunpack.c.l.b16 %v936
      %v1051 = vunpack.c.l.b16 %v950
      %v1052 = vunpack.c.l.b16 %v964
      %v1053 = vpack.c.b16 %v1046, %v1045
      %v1054 = vpack.c.b16 %v1048, %v1047
      %v1055 = vpack.c.b16 %v1050, %v1049
      %v1056 = vpack.c.b16 %v1052, %v1051
      %v1061 = vunpack.c.l.b16 %v992
      %v1062 = vunpack.c.l.b16 %v996
      %v1063 = vunpack.c.l.b16 %v1000
      %v1064 = vunpack.c.l.b16 %v1004
      %v1065 = vunpack.c.l.b16 %v1008
      %v1066 = vunpack.c.l.b16 %v1012
      %v1067 = vunpack.c.l.b16 %v1016
      %v1068 = vunpack.c.l.b16 %v1020
      %v1069 = vpack.c.b16 %v1062, %v1061
      %v1070 = vpack.c.b16 %v1064, %v1063
      %v1071 = vpack.c.b16 %v1066, %v1065
      %v1072 = vpack.c.b16 %v1068, %v1067
      %s1077 = scalar_lea.vmem %s1, 192
      %v1078 = vld [vmem:[%s1077] sm:$0xf]
      %v1079 = vld [vmem:[%s1077 + $0x4] sm:$0xf]
      %v1080 = vld [vmem:[%s1077 + $0x8] sm:$0xf]
      %v1081 = vld [vmem:[%s1077 + $0xc] sm:$0xf]
      %v1082 = vld [vmem:[%s1077 + $0x10] sm:$0xf]
      %v1083 = vld [vmem:[%s1077 + $0x14] sm:$0xf]
      %v1084 = vld [vmem:[%s1077 + $0x18] sm:$0xf]
      %v1085 = vld [vmem:[%s1077 + $0x1c] sm:$0xf]
      %v1086 = vld [vmem:[%s1077 + $0x20] sm:$0xf]
      %v1087 = vld [vmem:[%s1077 + $0x24] sm:$0xf]
      %v1088 = vld [vmem:[%s1077 + $0x28] sm:$0xf]
      %v1089 = vld [vmem:[%s1077 + $0x2c] sm:$0xf]
      %v1090 = vld [vmem:[%s1077 + $0x30] sm:$0xf]
      %v1091 = vld [vmem:[%s1077 + $0x34] sm:$0xf]
      %v1092 = vld [vmem:[%s1077 + $0x38] sm:$0xf]
      %v1093 = vld [vmem:[%s1077 + $0x3c] sm:$0xf]
      %v1094 = vld [vmem:[%s1077 + $0x40] sm:$0xf]
      %v1095 = vld [vmem:[%s1077 + $0x44] sm:$0xf]
      %v1096 = vld [vmem:[%s1077 + $0x48] sm:$0xf]
      %v1097 = vld [vmem:[%s1077 + $0x4c] sm:$0xf]
      %v1098 = vld [vmem:[%s1077 + $0x50] sm:$0xf]
      %v1099 = vld [vmem:[%s1077 + $0x54] sm:$0xf]
      %v1100 = vld [vmem:[%s1077 + $0x58] sm:$0xf]
      %v1101 = vld [vmem:[%s1077 + $0x5c] sm:$0xf]
      %v1102 = vld [vmem:[%s1077 + $0x60] sm:$0xf]
      %v1103 = vld [vmem:[%s1077 + $0x64] sm:$0xf]
      %v1104 = vld [vmem:[%s1077 + $0x68] sm:$0xf]
      %v1105 = vld [vmem:[%s1077 + $0x6c] sm:$0xf]
      %v1106 = vld [vmem:[%s1077 + $0x70] sm:$0xf]
      %v1107 = vld [vmem:[%s1077 + $0x74] sm:$0xf]
      %v1108 = vld [vmem:[%s1077 + $0x78] sm:$0xf]
      %v1109 = vld [vmem:[%s1077 + $0x7c] sm:$0xf]
      %v1110 = vld [vmem:[%s1077 + $0x80] sm:$0xf]
      %v1111 = vld [vmem:[%s1077 + $0x84] sm:$0xf]
      %v1112 = vld [vmem:[%s1077 + $0x88] sm:$0xf]
      %v1113 = vld [vmem:[%s1077 + $0x8c] sm:$0xf]
      %v1114 = vld [vmem:[%s1077 + $0x90] sm:$0xf]
      %v1115 = vld [vmem:[%s1077 + $0x94] sm:$0xf]
      %v1116 = vld [vmem:[%s1077 + $0x98] sm:$0xf]
      %v1117 = vld [vmem:[%s1077 + $0x9c] sm:$0xf]
      %v1118 = vld [vmem:[%s1077 + $0xa0] sm:$0xf]
      %v1119 = vld [vmem:[%s1077 + $0xa4] sm:$0xf]
      %v1120 = vld [vmem:[%s1077 + $0xa8] sm:$0xf]
      %v1121 = vld [vmem:[%s1077 + $0xac] sm:$0xf]
      %v1122 = vld [vmem:[%s1077 + $0xb0] sm:$0xf]
      %v1123 = vld [vmem:[%s1077 + $0xb4] sm:$0xf]
      %v1124 = vld [vmem:[%s1077 + $0xb8] sm:$0xf]
      %v1125 = vld [vmem:[%s1077 + $0xbc] sm:$0xf]
      %v1174 = vunpack.c.l.b16 %v1078
      %v1175 = vunpack.c.l.b16 %v1079
      %v1176 = vunpack.c.l.b16 %v1080
      %v1177 = vunpack.c.l.b16 %v1081
      %v1178 = vunpack.c.l.b16 %v1082
      %v1179 = vunpack.c.l.b16 %v1083
      %v1180 = vunpack.c.l.b16 %v1084
      %v1181 = vunpack.c.l.b16 %v1085
      %v1182 = vunpack.c.l.b16 %v1086
      %v1183 = vunpack.c.l.b16 %v1087
      %v1184 = vunpack.c.l.b16 %v1088
      %v1185 = vunpack.c.l.b16 %v1089
      %v1186 = vunpack.c.l.b16 %v1090
      %v1187 = vunpack.c.l.b16 %v1091
      %v1188 = vunpack.c.l.b16 %v1092
      %v1189 = vunpack.c.l.b16 %v1093
      %v1190 = vunpack.c.l.b16 %v1094
      %v1191 = vunpack.c.l.b16 %v1095
      %v1192 = vunpack.c.l.b16 %v1096
      %v1193 = vunpack.c.l.b16 %v1097
      %v1194 = vunpack.c.l.b16 %v1098
      %v1195 = vunpack.c.l.b16 %v1099
      %v1196 = vunpack.c.l.b16 %v1100
      %v1197 = vunpack.c.l.b16 %v1101
      %v1198 = vunpack.c.l.b16 %v1102
      %v1199 = vunpack.c.l.b16 %v1103
      %v1200 = vunpack.c.l.b16 %v1104
      %v1201 = vunpack.c.l.b16 %v1105
      %v1202 = vunpack.c.l.b16 %v1106
      %v1203 = vunpack.c.l.b16 %v1107
      %v1204 = vunpack.c.l.b16 %v1108
      %v1205 = vunpack.c.l.b16 %v1109
      %v1206 = vunpack.c.l.b16 %v1110
      %v1207 = vunpack.c.l.b16 %v1111
      %v1208 = vunpack.c.l.b16 %v1112
      %v1209 = vunpack.c.l.b16 %v1113
      %v1210 = vunpack.c.l.b16 %v1114
      %v1211 = vunpack.c.l.b16 %v1115
      %v1212 = vunpack.c.l.b16 %v1116
      %v1213 = vunpack.c.l.b16 %v1117
      %v1214 = vunpack.c.l.b16 %v1118
      %v1215 = vunpack.c.l.b16 %v1119
      %v1216 = vunpack.c.l.b16 %v1120
      %v1217 = vunpack.c.l.b16 %v1121
      %v1218 = vunpack.c.l.b16 %v1122
      %v1219 = vunpack.c.l.b16 %v1123
      %v1220 = vunpack.c.l.b16 %v1124
      %v1221 = vunpack.c.l.b16 %v1125
      %v1222 = vpack.c.b16 %v1175, %v1174
      %v1223 = vpack.c.b16 %v1177, %v1176
      %v1224 = vpack.c.b16 %v1179, %v1178
      %v1225 = vpack.c.b16 %v1181, %v1180
      %v1226 = vpack.c.b16 %v1183, %v1182
      %v1227 = vpack.c.b16 %v1185, %v1184
      %v1228 = vpack.c.b16 %v1187, %v1186
      %v1229 = vpack.c.b16 %v1189, %v1188
      %v1230 = vpack.c.b16 %v1191, %v1190
      %v1231 = vpack.c.b16 %v1193, %v1192
      %v1232 = vpack.c.b16 %v1195, %v1194
      %v1233 = vpack.c.b16 %v1197, %v1196
      %v1234 = vpack.c.b16 %v1199, %v1198
      %v1235 = vpack.c.b16 %v1201, %v1200
      %v1236 = vpack.c.b16 %v1203, %v1202
      %v1237 = vpack.c.b16 %v1205, %v1204
      %v1238 = vpack.c.b16 %v1207, %v1206
      %v1239 = vpack.c.b16 %v1209, %v1208
      %v1240 = vpack.c.b16 %v1211, %v1210
      %v1241 = vpack.c.b16 %v1213, %v1212
      %v1242 = vpack.c.b16 %v1215, %v1214
      %v1243 = vpack.c.b16 %v1217, %v1216
      %v1244 = vpack.c.b16 %v1219, %v1218
      %v1245 = vpack.c.b16 %v1221, %v1220
      %1270 = vmatprep.subr.bf16.mxu0 0
      %1271 = vmatpush1.bf16.msra.mxu0 %v1222
      %1272 = vmatprep.subr.bf16.mxu0 0
      %1273 = vmatpush1.bf16.msra.mxu0 %v1223
      %1274 = vmatprep.subr.bf16.mxu0 0
      %1275 = vmatpush1.bf16.msra.mxu0 %v1224
      %1276 = vmatprep.subr.bf16.mxu0 0
      %1277 = vmatpush1.bf16.msra.mxu0 %v1225
      %1278 = vmatprep.subr.bf16.mxu0 0
      %1279 = vmatpush1.bf16.msra.mxu0 %v1226
      %1280 = vmatprep.subr.bf16.mxu0 0
      %1281 = vmatpush1.bf16.msra.mxu0 %v1227
      %1282 = vmatprep.subr.bf16.mxu0 0
      %1283 = vmatpush1.bf16.msra.mxu0 %v1228
      %1284 = vmatprep.subr.bf16.mxu0 0
      %1285 = vmatpush1.bf16.msra.mxu0 %v1229
      %1286 = vmatprep.subr.bf16.mxu0 0
      %1287 = vmatpush1.bf16.msra.mxu0 %v1230
      %1288 = vmatprep.subr.bf16.mxu0 0
      %1289 = vmatpush1.bf16.msra.mxu0 %v1231
      %1290 = vmatprep.subr.bf16.mxu0 0
      %1291 = vmatpush1.bf16.msra.mxu0 %v1232
      %1292 = vmatprep.subr.bf16.mxu0 0
      %1293 = vmatpush1.bf16.msra.mxu0 %v1233
      %1294 = vmatprep.subr.bf16.mxu0 0
      %1295 = vmatpush1.bf16.msra.mxu0 %v1234
      %1296 = vmatprep.subr.bf16.mxu0 0
      %1297 = vmatpush1.bf16.msra.mxu0 %v1235
      %1298 = vmatprep.subr.bf16.mxu0 0
      %1299 = vmatpush1.bf16.msra.mxu0 %v1236
      %1300 = vmatprep.subr.bf16.mxu0 0
      %1301 = vmatpush1.bf16.msra.mxu0 %v1237
      %1302 = vmatprep.mubr.bf16.mxu0 %v1053
      %1303 = vmatmul.mubr.bf16.gmra.mrb[0].mxu0 %v1037
      %v1304 = vpop.f32.mrb[0].mxu0
      %v1305 = vadd.f32 0.0, %v1304
      %v1306 = vpop.f32.mrb[0].mxu0
      %v1307 = vpop.f32.mrb[0].mxu0
      %v1308 = vadd.f32 0.0, %v1307
      %v1309 = vpop.f32.mrb[0].mxu0
      %1310 = vmatprep.mubr.bf16.mxu0 %v1054
      %1311 = vmatmul.mubr.bf16.gmra.mrb[0].mxu0 %v1038
      %v1312 = vpop.f32.mrb[0].mxu0
      %v1313 = vadd.f32 0.0, %v1312
      %v1314 = vpop.f32.mrb[0].mxu0
      %v1315 = vpop.f32.mrb[0].mxu0
      %v1316 = vadd.f32 0.0, %v1315
      %v1317 = vpop.f32.mrb[0].mxu0
      %1318 = vmatprep.mubr.bf16.mxu0 %v1055
      %1319 = vmatmul.mubr.bf16.gmra.mrb[0].mxu0 %v1039
      %v1320 = vpop.f32.mrb[0].mxu0
      %v1321 = vadd.f32 0.0, %v1320
      %v1322 = vpop.f32.mrb[0].mxu0
      %v1323 = vpop.f32.mrb[0].mxu0
      %v1324 = vadd.f32 0.0, %v1323
      %v1325 = vpop.f32.mrb[0].mxu0
      %1326 = vmatprep.mubr.bf16.mxu0 %v1056
      %1327 = vmatmul.mubr.bf16.gmra.mrb[0].mxu0 %v1040
      %v1328 = vpop.f32.mrb[0].mxu0
      %v1329 = vadd.f32 0.0, %v1328
      %v1330 = vpop.f32.mrb[0].mxu0
      %v1331 = vpop.f32.mrb[0].mxu0
      %v1332 = vadd.f32 0.0, %v1331
      %v1333 = vpop.f32.mrb[0].mxu0
      %1334 = vdwg.mxu0
      %1335 = vmatprep.subr.bf16.mxu0 0
      %1336 = vmatpush1.bf16.msra.mxu0 %v1238
      %1337 = vmatprep.subr.bf16.mxu0 0
      %1338 = vmatpush1.bf16.msra.mxu0 %v1239
      %1339 = vmatprep.subr.bf16.mxu0 0
      %1340 = vmatpush1.bf16.msra.mxu0 %v1240
      %1341 = vmatprep.subr.bf16.mxu0 0
      %1342 = vmatpush1.bf16.msra.mxu0 %v1241
      %1343 = vmatprep.subr.bf16.mxu0 0
      %1344 = vmatpush1.bf16.msra.mxu0 %v1242
      %1345 = vmatprep.subr.bf16.mxu0 0
      %1346 = vmatpush1.bf16.msra.mxu0 %v1243
      %1347 = vmatprep.subr.bf16.mxu0 0
      %1348 = vmatpush1.bf16.msra.mxu0 %v1244
      %1349 = vmatprep.subr.bf16.mxu0 0
      %1350 = vmatpush1.bf16.msra.mxu0 %v1245
      %1351 = vmatprep.subr.bf16.mxu0 0
      %1352 = vmatpush1.bf16.msra.mxu0 0
      %1353 = vmatprep.subr.bf16.mxu0 0
      %1354 = vmatpush1.bf16.msra.mxu0 0
      %1355 = vmatprep.subr.bf16.mxu0 0
      %1356 = vmatpush1.bf16.msra.mxu0 0
      %1357 = vmatprep.subr.bf16.mxu0 0
      %1358 = vmatpush1.bf16.msra.mxu0 0
      %1359 = vmatprep.subr.bf16.mxu0 0
      %1360 = vmatpush1.bf16.msra.mxu0 0
      %1361 = vmatprep.subr.bf16.mxu0 0
      %1362 = vmatpush1.bf16.msra.mxu0 0
      %1363 = vmatprep.subr.bf16.mxu0 0
      %1364 = vmatpush1.bf16.msra.mxu0 0
      %1365 = vmatprep.subr.bf16.mxu0 0
      %1366 = vmatpush1.bf16.msra.mxu0 0
      %1367 = vmatprep.mubr.bf16.mxu0 0
      %1368 = vmatmul.mubr.bf16.gmra.mrb[0].mxu0 %v1069
      %v1369 = vpop.f32.mrb[0].mxu0
      %v1370 = vadd.f32 %v1305, %v1369
      %v1371 = vpop.f32.mrb[0].mxu0
      %v1372 = vpop.f32.mrb[0].mxu0
      %v1373 = vadd.f32 %v1308, %v1372
      %v1374 = vpop.f32.mrb[0].mxu0
      %1375 = vmatprep.mubr.bf16.mxu0 0
      %1376 = vmatmul.mubr.bf16.gmra.mrb[0].mxu0 %v1070
      %v1377 = vpop.f32.mrb[0].mxu0
      %v1378 = vadd.f32 %v1313, %v1377
      %v1379 = vpop.f32.mrb[0].mxu0
      %v1380 = vpop.f32.mrb[0].mxu0
      %v1381 = vadd.f32 %v1316, %v1380
      %v1382 = vpop.f32.mrb[0].mxu0
      %1383 = vmatprep.mubr.bf16.mxu0 0
      %1384 = vmatmul.mubr.bf16.gmra.mrb[0].mxu0 %v1071
      %v1385 = vpop.f32.mrb[0].mxu0
      %v1386 = vadd.f32 %v1321, %v1385
      %v1387 = vpop.f32.mrb[0].mxu0
      %v1388 = vpop.f32.mrb[0].mxu0
      %v1389 = vadd.f32 %v1324, %v1388
      %v1390 = vpop.f32.mrb[0].mxu0
      %1391 = vmatprep.mubr.bf16.mxu0 0
      %1392 = vmatmul.mubr.bf16.gmra.mrb[0].mxu0 %v1072
      %v1393 = vpop.f32.mrb[0].mxu0
      %v1394 = vadd.f32 %v1329, %v1393
      %v1395 = vpop.f32.mrb[0].mxu0
      %v1396 = vpop.f32.mrb[0].mxu0
      %v1397 = vadd.f32 %v1332, %v1396
      %v1398 = vpop.f32.mrb[0].mxu0
      %1399 = vdwg.mxu0
      %v1400 = vadd.f32 %v825, %v1370
      %v1401 = vadd.f32 %v826, %v1373
      %v1402 = vadd.f32 %v827, %v1378
      %v1403 = vadd.f32 %v828, %v1381
      %v1404 = vadd.f32 %v829, %v1386
      %v1405 = vadd.f32 %v830, %v1389
      %v1406 = vadd.f32 %v831, %v1394
      %v1407 = vadd.f32 %v832, %v1397
      %s1408 = sadd.s32 %s246, 2
      %s1409 = smul.u32 %s1408, 2
      %s1410 = smul.addr %s1409, 4
      %s1411 = scalar_lea.vmem %s228, %s1410
      %v1412 = vld [vmem:[%s1411] sm:$0xf]
      %v1413 = vld [vmem:[%s1411 + $0x8] sm:$0xf]
      %v1414 = vld [vmem:[%s1411 + $0x10] sm:$0xf]
      %v1415 = vld [vmem:[%s1411 + $0x18] sm:$0xf]
      %v1416 = vld [vmem:[%s1411 + $0x20] sm:$0xf]
      %v1417 = vld [vmem:[%s1411 + $0x28] sm:$0xf]
      %v1418 = vld [vmem:[%s1411 + $0x30] sm:$0xf]
      %v1419 = vld [vmem:[%s1411 + $0x38] sm:$0xf]
      %v1420 = vld [vmem:[%s1411 + $0x4] sm:$0x1]
      %v1421 = vld [vmem:[%s1411 + $0xc] sm:$0x1]
      %v1422 = vld [vmem:[%s1411 + $0x14] sm:$0x1]
      %v1423 = vld [vmem:[%s1411 + $0x1c] sm:$0x1]
      %v1424 = vld [vmem:[%s1411 + $0x24] sm:$0x1]
      %v1425 = vld [vmem:[%s1411 + $0x2c] sm:$0x1]
      %v1426 = vld [vmem:[%s1411 + $0x34] sm:$0x1]
      %v1427 = vld [vmem:[%s1411 + $0x3c] sm:$0x1]
      %v1429 = vshrl.u32 %v1412, 16
      %v1431 = vrot.slane %v1429, 4
      %v1432 = vshll.u32 %v1412, 16
      %v1434 = vrot.slane %v1432, 5
      %v1435 = vor.u32 %v1431, %v1434
      %v1436 = vrot.slane %v1435, 4
      %v1438 = vshll.u32 %v1420, 16
      %v1440 = vrot.slane %v1438, 5
      %v1441 = vsel %vm275, %v1436, %v1440
      %v1443 = vshrl.u32 %v1413, 16
      %v1445 = vrot.slane %v1443, 4
      %v1446 = vshll.u32 %v1413, 16
      %v1448 = vrot.slane %v1446, 5
      %v1449 = vor.u32 %v1445, %v1448
      %v1450 = vrot.slane %v1449, 4
      %v1452 = vshll.u32 %v1421, 16
      %v1454 = vrot.slane %v1452, 5
      %v1455 = vsel %vm275, %v1450, %v1454
      %v1457 = vshrl.u32 %v1414, 16
      %v1459 = vrot.slane %v1457, 4
      %v1460 = vshll.u32 %v1414, 16
      %v1462 = vrot.slane %v1460, 5
      %v1463 = vor.u32 %v1459, %v1462
      %v1464 = vrot.slane %v1463, 4
      %v1466 = vshll.u32 %v1422, 16
      %v1468 = vrot.slane %v1466, 5
      %v1469 = vsel %vm275, %v1464, %v1468
      %v1471 = vshrl.u32 %v1415, 16
      %v1473 = vrot.slane %v1471, 4
      %v1474 = vshll.u32 %v1415, 16
      %v1476 = vrot.slane %v1474, 5
      %v1477 = vor.u32 %v1473, %v1476
      %v1478 = vrot.slane %v1477, 4
      %v1480 = vshll.u32 %v1423, 16
      %v1482 = vrot.slane %v1480, 5
      %v1483 = vsel %vm275, %v1478, %v1482
      %v1485 = vshrl.u32 %v1416, 16
      %v1487 = vrot.slane %v1485, 4
      %v1488 = vshll.u32 %v1416, 16
      %v1490 = vrot.slane %v1488, 5
      %v1491 = vor.u32 %v1487, %v1490
      %v1492 = vrot.slane %v1491, 4
      %v1494 = vshll.u32 %v1424, 16
      %v1496 = vrot.slane %v1494, 5
      %v1497 = vsel %vm275, %v1492, %v1496
      %v1499 = vshrl.u32 %v1417, 16
      %v1501 = vrot.slane %v1499, 4
      %v1502 = vshll.u32 %v1417, 16
      %v1504 = vrot.slane %v1502, 5
      %v1505 = vor.u32 %v1501, %v1504
      %v1506 = vrot.slane %v1505, 4
      %v1508 = vshll.u32 %v1425, 16
      %v1510 = vrot.slane %v1508, 5
      %v1511 = vsel %vm275, %v1506, %v1510
      %v1513 = vshrl.u32 %v1418, 16
      %v1515 = vrot.slane %v1513, 4
      %v1516 = vshll.u32 %v1418, 16
      %v1518 = vrot.slane %v1516, 5
      %v1519 = vor.u32 %v1515, %v1518
      %v1520 = vrot.slane %v1519, 4
      %v1522 = vshll.u32 %v1426, 16
      %v1524 = vrot.slane %v1522, 5
      %v1525 = vsel %vm275, %v1520, %v1524
      %v1527 = vshrl.u32 %v1419, 16
      %v1529 = vrot.slane %v1527, 4
      %v1530 = vshll.u32 %v1419, 16
      %v1532 = vrot.slane %v1530, 5
      %v1533 = vor.u32 %v1529, %v1532
      %v1534 = vrot.slane %v1533, 4
      %v1536 = vshll.u32 %v1427, 16
      %v1538 = vrot.slane %v1536, 5
      %v1539 = vsel %vm275, %v1534, %v1538
      %v1540 = vld [vmem:[%s1411] sm:$0xe]
      %v1541 = vld [vmem:[%s1411 + $0x8] sm:$0xe]
      %v1542 = vld [vmem:[%s1411 + $0x10] sm:$0xe]
      %v1543 = vld [vmem:[%s1411 + $0x18] sm:$0xe]
      %v1544 = vld [vmem:[%s1411 + $0x20] sm:$0xe]
      %v1545 = vld [vmem:[%s1411 + $0x28] sm:$0xe]
      %v1546 = vld [vmem:[%s1411 + $0x30] sm:$0xe]
      %v1547 = vld [vmem:[%s1411 + $0x38] sm:$0xe]
      %v1564 = vrot.slane %v1540, 5
      %v1565 = vrot.slane %v1564, 4
      %v1566 = vrot.slane %v1420, 5
      %v1567 = vsel %vm414, %v1565, %v1566
      %v1568 = vrot.slane %v1541, 5
      %v1569 = vrot.slane %v1568, 4
      %v1570 = vrot.slane %v1421, 5
      %v1571 = vsel %vm414, %v1569, %v1570
      %v1572 = vrot.slane %v1542, 5
      %v1573 = vrot.slane %v1572, 4
      %v1574 = vrot.slane %v1422, 5
      %v1575 = vsel %vm414, %v1573, %v1574
      %v1576 = vrot.slane %v1543, 5
      %v1577 = vrot.slane %v1576, 4
      %v1578 = vrot.slane %v1423, 5
      %v1579 = vsel %vm414, %v1577, %v1578
      %v1580 = vrot.slane %v1544, 5
      %v1581 = vrot.slane %v1580, 4
      %v1582 = vrot.slane %v1424, 5
      %v1583 = vsel %vm414, %v1581, %v1582
      %v1584 = vrot.slane %v1545, 5
      %v1585 = vrot.slane %v1584, 4
      %v1586 = vrot.slane %v1425, 5
      %v1587 = vsel %vm414, %v1585, %v1586
      %v1588 = vrot.slane %v1546, 5
      %v1589 = vrot.slane %v1588, 4
      %v1590 = vrot.slane %v1426, 5
      %v1591 = vsel %vm414, %v1589, %v1590
      %v1592 = vrot.slane %v1547, 5
      %v1593 = vrot.slane %v1592, 4
      %v1594 = vrot.slane %v1427, 5
      %v1595 = vsel %vm414, %v1593, %v1594
      %v1604 = vunpack.c.l.b16 %v1412
      %v1605 = vunpack.c.l.b16 %v1413
      %v1606 = vunpack.c.l.b16 %v1414
      %v1607 = vunpack.c.l.b16 %v1415
      %v1608 = vunpack.c.l.b16 %v1416
      %v1609 = vunpack.c.l.b16 %v1417
      %v1610 = vunpack.c.l.b16 %v1418
      %v1611 = vunpack.c.l.b16 %v1419
      %v1612 = vpack.c.b16 %v1605, %v1604
      %v1613 = vpack.c.b16 %v1607, %v1606
      %v1614 = vpack.c.b16 %v1609, %v1608
      %v1615 = vpack.c.b16 %v1611, %v1610
      %v1620 = vunpack.c.l.b16 %v1441
      %v1621 = vunpack.c.l.b16 %v1455
      %v1622 = vunpack.c.l.b16 %v1469
      %v1623 = vunpack.c.l.b16 %v1483
      %v1624 = vunpack.c.l.b16 %v1497
      %v1625 = vunpack.c.l.b16 %v1511
      %v1626 = vunpack.c.l.b16 %v1525
      %v1627 = vunpack.c.l.b16 %v1539
      %v1628 = vpack.c.b16 %v1621, %v1620
      %v1629 = vpack.c.b16 %v1623, %v1622
      %v1630 = vpack.c.b16 %v1625, %v1624
      %v1631 = vpack.c.b16 %v1627, %v1626
      %v1636 = vunpack.c.l.b16 %v1567
      %v1637 = vunpack.c.l.b16 %v1571
      %v1638 = vunpack.c.l.b16 %v1575
      %v1639 = vunpack.c.l.b16 %v1579
      %v1640 = vunpack.c.l.b16 %v1583
      %v1641 = vunpack.c.l.b16 %v1587
      %v1642 = vunpack.c.l.b16 %v1591
      %v1643 = vunpack.c.l.b16 %v1595
      %v1644 = vpack.c.b16 %v1637, %v1636
      %v1645 = vpack.c.b16 %v1639, %v1638
      %v1646 = vpack.c.b16 %v1641, %v1640
      %v1647 = vpack.c.b16 %v1643, %v1642
      %s1652 = scalar_lea.vmem %s1, 384
      %v1653 = vld [vmem:[%s1652] sm:$0xf]
      %v1654 = vld [vmem:[%s1652 + $0x4] sm:$0xf]
      %v1655 = vld [vmem:[%s1652 + $0x8] sm:$0xf]
      %v1656 = vld [vmem:[%s1652 + $0xc] sm:$0xf]
      %v1657 = vld [vmem:[%s1652 + $0x10] sm:$0xf]
      %v1658 = vld [vmem:[%s1652 + $0x14] sm:$0xf]
      %v1659 = vld [vmem:[%s1652 + $0x18] sm:$0xf]
      %v1660 = vld [vmem:[%s1652 + $0x1c] sm:$0xf]
      %v1661 = vld [vmem:[%s1652 + $0x20] sm:$0xf]
      %v1662 = vld [vmem:[%s1652 + $0x24] sm:$0xf]
      %v1663 = vld [vmem:[%s1652 + $0x28] sm:$0xf]
      %v1664 = vld [vmem:[%s1652 + $0x2c] sm:$0xf]
      %v1665 = vld [vmem:[%s1652 + $0x30] sm:$0xf]
      %v1666 = vld [vmem:[%s1652 + $0x34] sm:$0xf]
      %v1667 = vld [vmem:[%s1652 + $0x38] sm:$0xf]
      %v1668 = vld [vmem:[%s1652 + $0x3c] sm:$0xf]
      %v1669 = vld [vmem:[%s1652 + $0x40] sm:$0xf]
      %v1670 = vld [vmem:[%s1652 + $0x44] sm:$0xf]
      %v1671 = vld [vmem:[%s1652 + $0x48] sm:$0xf]
      %v1672 = vld [vmem:[%s1652 + $0x4c] sm:$0xf]
      %v1673 = vld [vmem:[%s1652 + $0x50] sm:$0xf]
      %v1674 = vld [vmem:[%s1652 + $0x54] sm:$0xf]
      %v1675 = vld [vmem:[%s1652 + $0x58] sm:$0xf]
      %v1676 = vld [vmem:[%s1652 + $0x5c] sm:$0xf]
      %v1677 = vld [vmem:[%s1652 + $0x60] sm:$0xf]
      %v1678 = vld [vmem:[%s1652 + $0x64] sm:$0xf]
      %v1679 = vld [vmem:[%s1652 + $0x68] sm:$0xf]
      %v1680 = vld [vmem:[%s1652 + $0x6c] sm:$0xf]
      %v1681 = vld [vmem:[%s1652 + $0x70] sm:$0xf]
      %v1682 = vld [vmem:[%s1652 + $0x74] sm:$0xf]
      %v1683 = vld [vmem:[%s1652 + $0x78] sm:$0xf]
      %v1684 = vld [vmem:[%s1652 + $0x7c] sm:$0xf]
      %v1685 = vld [vmem:[%s1652 + $0x80] sm:$0xf]
      %v1686 = vld [vmem:[%s1652 + $0x84] sm:$0xf]
      %v1687 = vld [vmem:[%s1652 + $0x88] sm:$0xf]
      %v1688 = vld [vmem:[%s1652 + $0x8c] sm:$0xf]
      %v1689 = vld [vmem:[%s1652 + $0x90] sm:$0xf]
      %v1690 = vld [vmem:[%s1652 + $0x94] sm:$0xf]
      %v1691 = vld [vmem:[%s1652 + $0x98] sm:$0xf]
      %v1692 = vld [vmem:[%s1652 + $0x9c] sm:$0xf]
      %v1693 = vld [vmem:[%s1652 + $0xa0] sm:$0xf]
      %v1694 = vld [vmem:[%s1652 + $0xa4] sm:$0xf]
      %v1695 = vld [vmem:[%s1652 + $0xa8] sm:$0xf]
      %v1696 = vld [vmem:[%s1652 + $0xac] sm:$0xf]
      %v1697 = vld [vmem:[%s1652 + $0xb0] sm:$0xf]
      %v1698 = vld [vmem:[%s1652 + $0xb4] sm:$0xf]
      %v1699 = vld [vmem:[%s1652 + $0xb8] sm:$0xf]
      %v1700 = vld [vmem:[%s1652 + $0xbc] sm:$0xf]
      %v1749 = vunpack.c.l.b16 %v1653
      %v1750 = vunpack.c.l.b16 %v1654
      %v1751 = vunpack.c.l.b16 %v1655
      %v1752 = vunpack.c.l.b16 %v1656
      %v1753 = vunpack.c.l.b16 %v1657
      %v1754 = vunpack.c.l.b16 %v1658
      %v1755 = vunpack.c.l.b16 %v1659
      %v1756 = vunpack.c.l.b16 %v1660
      %v1757 = vunpack.c.l.b16 %v1661
      %v1758 = vunpack.c.l.b16 %v1662
      %v1759 = vunpack.c.l.b16 %v1663
      %v1760 = vunpack.c.l.b16 %v1664
      %v1761 = vunpack.c.l.b16 %v1665
      %v1762 = vunpack.c.l.b16 %v1666
      %v1763 = vunpack.c.l.b16 %v1667
      %v1764 = vunpack.c.l.b16 %v1668
      %v1765 = vunpack.c.l.b16 %v1669
      %v1766 = vunpack.c.l.b16 %v1670
      %v1767 = vunpack.c.l.b16 %v1671
      %v1768 = vunpack.c.l.b16 %v1672
      %v1769 = vunpack.c.l.b16 %v1673
      %v1770 = vunpack.c.l.b16 %v1674
      %v1771 = vunpack.c.l.b16 %v1675
      %v1772 = vunpack.c.l.b16 %v1676
      %v1773 = vunpack.c.l.b16 %v1677
      %v1774 = vunpack.c.l.b16 %v1678
      %v1775 = vunpack.c.l.b16 %v1679
      %v1776 = vunpack.c.l.b16 %v1680
      %v1777 = vunpack.c.l.b16 %v1681
      %v1778 = vunpack.c.l.b16 %v1682
      %v1779 = vunpack.c.l.b16 %v1683
      %v1780 = vunpack.c.l.b16 %v1684
      %v1781 = vunpack.c.l.b16 %v1685
      %v1782 = vunpack.c.l.b16 %v1686
      %v1783 = vunpack.c.l.b16 %v1687
      %v1784 = vunpack.c.l.b16 %v1688
      %v1785 = vunpack.c.l.b16 %v1689
      %v1786 = vunpack.c.l.b16 %v1690
      %v1787 = vunpack.c.l.b16 %v1691
      %v1788 = vunpack.c.l.b16 %v1692
      %v1789 = vunpack.c.l.b16 %v1693
      %v1790 = vunpack.c.l.b16 %v1694
      %v1791 = vunpack.c.l.b16 %v1695
      %v1792 = vunpack.c.l.b16 %v1696
      %v1793 = vunpack.c.l.b16 %v1697
      %v1794 = vunpack.c.l.b16 %v1698
      %v1795 = vunpack.c.l.b16 %v1699
      %v1796 = vunpack.c.l.b16 %v1700
      %v1797 = vpack.c.b16 %v1750, %v1749
      %v1798 = vpack.c.b16 %v1752, %v1751
      %v1799 = vpack.c.b16 %v1754, %v1753
      %v1800 = vpack.c.b16 %v1756, %v1755
      %v1801 = vpack.c.b16 %v1758, %v1757
      %v1802 = vpack.c.b16 %v1760, %v1759
      %v1803 = vpack.c.b16 %v1762, %v1761
      %v1804 = vpack.c.b16 %v1764, %v1763
      %v1805 = vpack.c.b16 %v1766, %v1765
      %v1806 = vpack.c.b16 %v1768, %v1767
      %v1807 = vpack.c.b16 %v1770, %v1769
      %v1808 = vpack.c.b16 %v1772, %v1771
      %v1809 = vpack.c.b16 %v1774, %v1773
      %v1810 = vpack.c.b16 %v1776, %v1775
      %v1811 = vpack.c.b16 %v1778, %v1777
      %v1812 = vpack.c.b16 %v1780, %v1779
      %v1813 = vpack.c.b16 %v1782, %v1781
      %v1814 = vpack.c.b16 %v1784, %v1783
      %v1815 = vpack.c.b16 %v1786, %v1785
      %v1816 = vpack.c.b16 %v1788, %v1787
      %v1817 = vpack.c.b16 %v1790, %v1789
      %v1818 = vpack.c.b16 %v1792, %v1791
      %v1819 = vpack.c.b16 %v1794, %v1793
      %v1820 = vpack.c.b16 %v1796, %v1795
      %1845 = vmatprep.subr.bf16.mxu0 0
      %1846 = vmatpush1.bf16.msra.mxu0 %v1797
      %1847 = vmatprep.subr.bf16.mxu0 0
      %1848 = vmatpush1.bf16.msra.mxu0 %v1798
      %1849 = vmatprep.subr.bf16.mxu0 0
      %1850 = vmatpush1.bf16.msra.mxu0 %v1799
      %1851 = vmatprep.subr.bf16.mxu0 0
      %1852 = vmatpush1.bf16.msra.mxu0 %v1800
      %1853 = vmatprep.subr.bf16.mxu0 0
      %1854 = vmatpush1.bf16.msra.mxu0 %v1801
      %1855 = vmatprep.subr.bf16.mxu0 0
      %1856 = vmatpush1.bf16.msra.mxu0 %v1802
      %1857 = vmatprep.subr.bf16.mxu0 0
      %1858 = vmatpush1.bf16.msra.mxu0 %v1803
      %1859 = vmatprep.subr.bf16.mxu0 0
      %1860 = vmatpush1.bf16.msra.mxu0 %v1804
      %1861 = vmatprep.subr.bf16.mxu0 0
      %1862 = vmatpush1.bf16.msra.mxu0 %v1805
      %1863 = vmatprep.subr.bf16.mxu0 0
      %1864 = vmatpush1.bf16.msra.mxu0 %v1806
      %1865 = vmatprep.subr.bf16.mxu0 0
      %1866 = vmatpush1.bf16.msra.mxu0 %v1807
      %1867 = vmatprep.subr.bf16.mxu0 0
      %1868 = vmatpush1.bf16.msra.mxu0 %v1808
      %1869 = vmatprep.subr.bf16.mxu0 0
      %1870 = vmatpush1.bf16.msra.mxu0 %v1809
      %1871 = vmatprep.subr.bf16.mxu0 0
      %1872 = vmatpush1.bf16.msra.mxu0 %v1810
      %1873 = vmatprep.subr.bf16.mxu0 0
      %1874 = vmatpush1.bf16.msra.mxu0 %v1811
      %1875 = vmatprep.subr.bf16.mxu0 0
      %1876 = vmatpush1.bf16.msra.mxu0 %v1812
      %1877 = vmatprep.mubr.bf16.mxu0 %v1628
      %1878 = vmatmul.mubr.bf16.gmra.mrb[0].mxu0 %v1612
      %v1879 = vpop.f32.mrb[0].mxu0
      %v1880 = vadd.f32 0.0, %v1879
      %v1881 = vpop.f32.mrb[0].mxu0
      %v1882 = vpop.f32.mrb[0].mxu0
      %v1883 = vadd.f32 0.0, %v1882
      %v1884 = vpop.f32.mrb[0].mxu0
      %1885 = vmatprep.mubr.bf16.mxu0 %v1629
      %1886 = vmatmul.mubr.bf16.gmra.mrb[0].mxu0 %v1613
      %v1887 = vpop.f32.mrb[0].mxu0
      %v1888 = vadd.f32 0.0, %v1887
      %v1889 = vpop.f32.mrb[0].mxu0
      %v1890 = vpop.f32.mrb[0].mxu0
      %v1891 = vadd.f32 0.0, %v1890
      %v1892 = vpop.f32.mrb[0].mxu0
      %1893 = vmatprep.mubr.bf16.mxu0 %v1630
      %1894 = vmatmul.mubr.bf16.gmra.mrb[0].mxu0 %v1614
      %v1895 = vpop.f32.mrb[0].mxu0
      %v1896 = vadd.f32 0.0, %v1895
      %v1897 = vpop.f32.mrb[0].mxu0
      %v1898 = vpop.f32.mrb[0].mxu0
      %v1899 = vadd.f32 0.0, %v1898
      %v1900 = vpop.f32.mrb[0].mxu0
      %1901 = vmatprep.mubr.bf16.mxu0 %v1631
      %1902 = vmatmul.mubr.bf16.gmra.mrb[0].mxu0 %v1615
      %v1903 = vpop.f32.mrb[0].mxu0
      %v1904 = vadd.f32 0.0, %v1903
      %v1905 = vpop.f32.mrb[0].mxu0
      %v1906 = vpop.f32.mrb[0].mxu0
      %v1907 = vadd.f32 0.0, %v1906
      %v1908 = vpop.f32.mrb[0].mxu0
      %1909 = vdwg.mxu0
      %1910 = vmatprep.subr.bf16.mxu0 0
      %1911 = vmatpush1.bf16.msra.mxu0 %v1813
      %1912 = vmatprep.subr.bf16.mxu0 0
      %1913 = vmatpush1.bf16.msra.mxu0 %v1814
      %1914 = vmatprep.subr.bf16.mxu0 0
      %1915 = vmatpush1.bf16.msra.mxu0 %v1815
      %1916 = vmatprep.subr.bf16.mxu0 0
      %1917 = vmatpush1.bf16.msra.mxu0 %v1816
      %1918 = vmatprep.subr.bf16.mxu0 0
      %1919 = vmatpush1.bf16.msra.mxu0 %v1817
      %1920 = vmatprep.subr.bf16.mxu0 0
      %1921 = vmatpush1.bf16.msra.mxu0 %v1818
      %1922 = vmatprep.subr.bf16.mxu0 0
      %1923 = vmatpush1.bf16.msra.mxu0 %v1819
      %1924 = vmatprep.subr.bf16.mxu0 0
      %1925 = vmatpush1.bf16.msra.mxu0 %v1820
      %1926 = vmatprep.subr.bf16.mxu0 0
      %1927 = vmatpush1.bf16.msra.mxu0 0
      %1928 = vmatprep.subr.bf16.mxu0 0
      %1929 = vmatpush1.bf16.msra.mxu0 0
      %1930 = vmatprep.subr.bf16.mxu0 0
      %1931 = vmatpush1.bf16.msra.mxu0 0
      %1932 = vmatprep.subr.bf16.mxu0 0
      %1933 = vmatpush1.bf16.msra.mxu0 0
      %1934 = vmatprep.subr.bf16.mxu0 0
      %1935 = vmatpush1.bf16.msra.mxu0 0
      %1936 = vmatprep.subr.bf16.mxu0 0
      %1937 = vmatpush1.bf16.msra.mxu0 0
      %1938 = vmatprep.subr.bf16.mxu0 0
      %1939 = vmatpush1.bf16.msra.mxu0 0
      %1940 = vmatprep.subr.bf16.mxu0 0
      %1941 = vmatpush1.bf16.msra.mxu0 0
      %1942 = vmatprep.mubr.bf16.mxu0 0
      %1943 = vmatmul.mubr.bf16.gmra.mrb[0].mxu0 %v1644
      %v1944 = vpop.f32.mrb[0].mxu0
      %v1945 = vadd.f32 %v1880, %v1944
      %v1946 = vpop.f32.mrb[0].mxu0
      %v1947 = vpop.f32.mrb[0].mxu0
      %v1948 = vadd.f32 %v1883, %v1947
      %v1949 = vpop.f32.mrb[0].mxu0
      %1950 = vmatprep.mubr.bf16.mxu0 0
      %1951 = vmatmul.mubr.bf16.gmra.mrb[0].mxu0 %v1645
      %v1952 = vpop.f32.mrb[0].mxu0
      %v1953 = vadd.f32 %v1888, %v1952
      %v1954 = vpop.f32.mrb[0].mxu0
      %v1955 = vpop.f32.mrb[0].mxu0
      %v1956 = vadd.f32 %v1891, %v1955
      %v1957 = vpop.f32.mrb[0].mxu0
      %1958 = vmatprep.mubr.bf16.mxu0 0
      %1959 = vmatmul.mubr.bf16.gmra.mrb[0].mxu0 %v1646
      %v1960 = vpop.f32.mrb[0].mxu0
      %v1961 = vadd.f32 %v1896, %v1960
      %v1962 = vpop.f32.mrb[0].mxu0
      %v1963 = vpop.f32.mrb[0].mxu0
      %v1964 = vadd.f32 %v1899, %v1963
      %v1965 = vpop.f32.mrb[0].mxu0
      %1966 = vmatprep.mubr.bf16.mxu0 0
      %1967 = vmatmul.mubr.bf16.gmra.mrb[0].mxu0 %v1647
      %v1968 = vpop.f32.mrb[0].mxu0
      %v1969 = vadd.f32 %v1904, %v1968
      %v1970 = vpop.f32.mrb[0].mxu0
      %v1971 = vpop.f32.mrb[0].mxu0
      %v1972 = vadd.f32 %v1907, %v1971
      %v1973 = vpop.f32.mrb[0].mxu0
      %1974 = vdwg.mxu0
      %v1975 = vadd.f32 %v1400, %v1945
      %v1976 = vadd.f32 %v1401, %v1948
      %v1977 = vadd.f32 %v1402, %v1953
      %v1978 = vadd.f32 %v1403, %v1956
      %v1979 = vadd.f32 %v1404, %v1961
      %v1980 = vadd.f32 %v1405, %v1964
      %v1981 = vadd.f32 %v1406, %v1969
      %v1982 = vadd.f32 %v1407, %v1972
      %v1983 = vld [vmem:[%s234] sm:$0xf]
      %v1984 = vld [vmem:[%s234 + $0x4] sm:$0xf]
      %v1985 = vld [vmem:[%s234 + $0x8] sm:$0xf]
      %v1986 = vld [vmem:[%s234 + $0xc] sm:$0xf]
      %v1987 = vld [vmem:[%s234 + $0x10] sm:$0xf]
      %v1988 = vld [vmem:[%s234 + $0x14] sm:$0xf]
      %v1989 = vld [vmem:[%s234 + $0x18] sm:$0xf]
      %v1990 = vld [vmem:[%s234 + $0x1c] sm:$0xf]
      %v1991 = vunpack.c.l.bf16 %v1983
      %v1992 = vunpack.c.l.bf16 %v1984
      %v1993 = vunpack.c.l.bf16 %v1985
      %v1994 = vunpack.c.l.bf16 %v1986
      %v1995 = vunpack.c.l.bf16 %v1987
      %v1996 = vunpack.c.l.bf16 %v1988
      %v1997 = vunpack.c.l.bf16 %v1989
      %v1998 = vunpack.c.l.bf16 %v1990
      %v1999 = vadd.f32 %v1975, %v1991
      %v2000 = vadd.f32 %v1976, %v1992
      %v2001 = vadd.f32 %v1977, %v1993
      %v2002 = vadd.f32 %v1978, %v1994
      %v2003 = vadd.f32 %v1979, %v1995
      %v2004 = vadd.f32 %v1980, %v1996
      %v2005 = vadd.f32 %v1981, %v1997
      %v2006 = vadd.f32 %v1982, %v1998
      %v2007 = vmax.f32 %v1999, 0.0
      %v2008 = vmax.f32 %v2000, 0.0
      %v2009 = vmax.f32 %v2001, 0.0
      %v2010 = vmax.f32 %v2002, 0.0
      %v2011 = vmax.f32 %v2003, 0.0
      %v2012 = vmax.f32 %v2004, 0.0
      %v2013 = vmax.f32 %v2005, 0.0
      %v2014 = vmax.f32 %v2006, 0.0
      %2015 = vst [vmem:[%s242] sm:$0xff] %v2007
      %2016 = vst [vmem:[%s242 + $0x8] sm:$0xff] %v2008
      %2017 = vst [vmem:[%s242 + $0x10] sm:$0xff] %v2009
      %2018 = vst [vmem:[%s242 + $0x18] sm:$0xff] %v2010
      %2019 = vst [vmem:[%s242 + $0x20] sm:$0xff] %v2011
      %2020 = vst [vmem:[%s242 + $0x28] sm:$0xff] %v2012
      %2021 = vst [vmem:[%s242 + $0x30] sm:$0xff] %v2013
      %2022 = vst [vmem:[%s242 + $0x38] sm:$0xff] %v2014
      %s2023 = sadd.s32 %s19, %s20
      %s2024 = smul.u32 8, %s2023
      %p2025 = scmp.lt.s32.totalorder %s2024, 15
      %s2026 = scalar_select %p2025, %s2024, 15
      %s2027 = smul.addr %s2026, 8
      %s2028 = scalar_lea.vmem %s4, %s2027
      // Predicated region
      $region37: #{basic_block_forward.5} parent=35 // pred_check
        %p2029 = pneg %p143
      $region38: #{basic_block_forward.5} parent=35 // pred_check_branch
        %2031 = sbr.rel (%p2029) target = $region40
      $region39: #{basic_block_forward.5} parent=35 // pred_region
        %s2032 = sadd.s32 %s19, %s20
        %s2033 = smul.u32 8, %s2032
      $region40: #{basic_block_forward.5} parent=35 // pred_fallthru
        _
    $region36: #{basic_block_forward.5} parent=5 // pred_fallthru
      _
    %p2034 = scmp.le.s32.totalorder 2, %s10
    // Predicated region
    $region41: #{basic_block_forward.5} parent=5 // pred_check
      %p2035 = pneg %p2034
    $region42: #{basic_block_forward.5} parent=5 // pred_check_branch
      %2037 = sbr.rel (%p2035) target = $region44
    $region43: #{basic_block_forward.5} parent=5 // pred_region
      %s2038 = ssub.s32 %s10, 2
      // Predicated region
      $region45: #{basic_block_forward.5} parent=43 // pred_check
        %p2039 = pneg %p149
      $region46: #{basic_block_forward.5} parent=43 // pred_check_branch
        %2041 = sbr.rel (%p2039) target = $region48
      $region47: #{basic_block_forward.5} parent=43 // pred_region
        %s2042 = sadd.s32 %s21, %s22
        %s2043 = smul.u32 8, %s2042
        %p2044 = scmp.lt.s32.totalorder %s2043, 15
        %s2045 = scalar_select %p2044, %s2043, 15
        %s2046 = smul.addr %s2045, 8
        %s2047 = scalar_lea.vmem %s4, %s2046
      $region48: #{basic_block_forward.5} parent=43 // pred_fallthru
        _
    $region44: #{basic_block_forward.5} parent=5 // pred_fallthru
      _
  $region6: #{basic_block_forward.5} parent=0 // loop_footer
    %s14 = sadd.s32 1, %s10
  $region7: #{basic_block_forward.5} parent=0 // loop_footer_branch
    %9 = sbr.rel target = $region3
  $region8: #{basic_block_forward.5} parent=0 // loop_exit
    _

</llo_original>
